<compile_context>
chip_gen: v7x
topology: tpu7x:2x2x1
jax: 0.10.0
libtpu: 0.0.40
codegen_flags: <defaults>
</compile_context>

<pallas_src>
import functools
import math

import jax
import jax.numpy as jnp
from jax.experimental import pallas as pl
from jax.experimental.pallas import tpu as pltpu


def _layernorm(v, w, b, eps=1e-5):
    mu = jnp.mean(v, axis=-1, keepdims=True)
    var = jnp.mean((v - mu) ** 2, axis=-1, keepdims=True)
    return (v - mu) * jax.lax.rsqrt(var + eps) * w + b


def _gelu_tanh(x):
    c = math.sqrt(2.0 / math.pi)
    return 0.5 * x * (1.0 + jnp.tanh(c * (x + 0.044715 * x * x * x)))


def block_kernel(x_ref, bias_ref,
                 ln1w_ref, ln1b_ref,
                 wqkv_ref, bqkv_ref, wproj_ref, bproj_ref,
                 ln2w_ref, ln2b_ref,
                 wfc_ref, bfc_ref, wmp_ref, bmp_ref,
                 o_ref, *, n_head, head_einsum):
    f32 = jnp.float32
    bf16 = jnp.bfloat16
    x = x_ref[0].astype(f32)                    # (T, C)
    T, C = x.shape
    H = n_head
    hd = C // H

    # ---- ln_1 + QKV projection (1/sqrt(hd) pre-folded into q weights) ----
    ln1 = _layernorm(x, ln1w_ref[...], ln1b_ref[...]).astype(bf16)

    if head_einsum:
        # wqkv_ref: (H, C, 3*hd) bf16 -> head-major q/k/v straight off the
        # MXU; no per-head lane slicing, no stack relayout.
        qkv_h = jnp.einsum('tc,hcf->htf', ln1, wqkv_ref[...],
                           preferred_element_type=f32) + bqkv_ref[...]
        qh = qkv_h[:, :, 0 * hd:1 * hd].astype(bf16)        # (H, T, hd)
        kh = qkv_h[:, :, 1 * hd:2 * hd].astype(bf16)
        vh = qkv_h[:, :, 2 * hd:3 * hd].astype(bf16)
    else:
        # Fallback: full-width (T, 3C) matmul + per-head slices (proven path).
        qkv = jnp.dot(ln1, wqkv_ref[...],
                      preferred_element_type=f32) + bqkv_ref[...]
        q = qkv[:, 0 * C:1 * C]
        k = qkv[:, 1 * C:2 * C]
        v = qkv[:, 2 * C:3 * C]
        qh = jnp.stack([q[:, h * hd:(h + 1) * hd] for h in range(H)],
                       axis=0).astype(bf16)
        kh = jnp.stack([k[:, h * hd:(h + 1) * hd] for h in range(H)],
                       axis=0).astype(bf16)
        vh = jnp.stack([v[:, h * hd:(h + 1) * hd] for h in range(H)],
                       axis=0).astype(bf16)

    # ---- causal attention: precomputed additive mask, normalize after PV ----
    s = jnp.einsum('htd,hsd->hts', qh, kh,
                   preferred_element_type=f32)              # (H, T, T) f32
    s = s + bias_ref[...][None]                             # 0 / -1e30 additive bias
    m = jnp.max(s, axis=-1, keepdims=True)
    # NOTE: exp stays f32 (v5e EUP has no bf16); on v6e/v7x this could be bf16
    # if profiling shows the softmax phase EUP-bound.
    e = jnp.exp(s - m)                                      # unnormalized probs
    denom = jnp.sum(e, axis=-1, keepdims=True)              # (H, T, 1) f32
    o_h = jnp.einsum('hts,hsd->htd', e.astype(bf16), vh,
                     preferred_element_type=f32)            # (H, T, hd) f32
    o_h = o_h * pl.reciprocal(denom, approx=True)           # post-PV normalization

    # ---- output projection (no (H, T, C) f32 intermediate) ----
    o_b = o_h.astype(bf16)
    if head_einsum:
        # Single contraction over (h, d): full-depth MXU accumulation.
        y = jnp.einsum('htd,hdc->tc', o_b, wproj_ref[...],
                       preferred_element_type=f32) + bproj_ref[...]
    else:
        # Unrolled per-head f32 accumulator (hd-depth passes, but no big temp).
        acc = jnp.zeros((T, C), f32)
        for h in range(H):
            acc = acc + jnp.dot(o_b[h], wproj_ref[h],
                                preferred_element_type=f32)
        y = acc + bproj_ref[...]
    x1 = x + y                                              # first residual (f32)

    # ---- ln_2 + MLP (full C / 4C contraction depth) ----
    ln2 = _layernorm(x1, ln2w_ref[...], ln2b_ref[...]).astype(bf16)
    h_fc = jnp.dot(ln2, wfc_ref[...], preferred_element_type=f32) + bfc_ref[...]
    h_act = _gelu_tanh(h_fc)                                # f32 on VPU/EUP
    mlp = jnp.dot(h_act.astype(bf16), wmp_ref[...],
                  preferred_element_type=f32) + bmp_ref[...]
    o_ref[0] = (x1 + mlp).astype(o_ref.dtype)               # second residual


def _physical_vmem_bytes():
    try:
        info = pltpu.get_tpu_info()
        v = getattr(info, "vmem_capacity_bytes", None)
        if v:
            return int(v)
    except Exception:
        pass
    return 128 << 20   # v5e/v6e physical VMEM


def _vmem_limit_bytes(T, C, n_head):
    """Shape-derived VMEM budget, capped at ~85% of *physical* VMEM
    (~54 MiB on v7x's 64 MiB per-TC, ~108 MiB on v5e/v6e's 128 MiB)."""
    f32, bf16 = 4, 2
    weights = bf16 * (12 * C * C) + f32 * (16 * C + T * T)
    acts = (f32 * (3 * T * C                 # x, x1, y
                   + 3 * T * C               # qkv accumulator
                   + 2 * n_head * T * T      # scores + exp
                   + T * C                   # o_h
                   + 2 * T * 4 * C)          # fc + gelu
            + bf16 * (5 * T * C + n_head * T * T + T * 4 * C))
    io = 2 * 2 * f32 * T * C                 # double-buffered x / out blocks
    budget = weights + acts + io + (4 << 20)  # compiler-temp margin
    cap = int(_physical_vmem_bytes() * 0.85)
    return int(min(max(budget, 16 << 20), cap))


def _kernel_params(params, n_head, head_einsum):
    """PyTorch-layout Block params -> kernel-side layout.

    Linear weights go to (in, out) bf16 (MXU rhs operands); the 1/sqrt(hd)
    attention scale is folded into the q columns of c_attn; c_proj is split
    per head (H, hd, C); biases / LayerNorm params stay f32."""
    (ln1w, ln1b, wqkv, bqkv, wproj, bproj,
     ln2w, ln2b, wfc, bfc, wmp, bmp) = params
    C = ln1w.shape[0]
    H = n_head
    hd = C // H
    scale = 1.0 / math.sqrt(hd)
    f32, bf16 = jnp.float32, jnp.bfloat16

    wqkv_t = wqkv.T.astype(f32)                        # (C, 3C), cols = [q|k|v]
    wqkv_t = wqkv_t.at[:, :C].multiply(scale)          # fold 1/sqrt(hd) into q
    bqkv_s = bqkv.astype(f32).at[:C].multiply(scale)

    if head_einsum:
        wq = wqkv_t[:, 0 * C:1 * C].reshape(C, H, hd)
        wk = wqkv_t[:, 1 * C:2 * C].reshape(C, H, hd)
        wv = wqkv_t[:, 2 * C:3 * C].reshape(C, H, hd)
        wqkv_k = jnp.transpose(jnp.concatenate([wq, wk, wv], axis=-1),
                               (1, 0, 2)).astype(bf16)          # (H, C, 3hd)
        bq = bqkv_s[0 * C:1 * C].reshape(H, hd)
        bk = bqkv_s[1 * C:2 * C].reshape(H, hd)
        bv = bqkv_s[2 * C:3 * C].reshape(H, hd)
        bqkv_k = jnp.concatenate([bq, bk, bv],
                                 axis=-1).reshape(H, 1, 3 * hd).astype(f32)
    else:
        wqkv_k = wqkv_t.astype(bf16)                            # (C, 3C)
        bqkv_k = bqkv_s.reshape(1, 3 * C).astype(f32)

    return (
        ln1w.reshape(1, C).astype(f32),
        ln1b.reshape(1, C).astype(f32),
        wqkv_k,
        bqkv_k,
        wproj.T.reshape(H, hd, C).astype(bf16),                 # (H, hd, C)
        bproj.reshape(1, C).astype(f32),
        ln2w.reshape(1, C).astype(f32),
        ln2b.reshape(1, C).astype(f32),
        wfc.T.astype(bf16),                                     # (C, 4C)
        bfc.reshape(1, 4 * C).astype(f32),
        wmp.T.astype(bf16),                                     # (4C, C)
        bmp.reshape(1, C).astype(f32),
    )


def gpt2_block(x, params, n_head, *, head_einsum=True, single_buffer_weights=True):
    """x: (B, T, C) f32.  params: PyTorch-layout Block parameters."""
    B, T, C = x.shape
    kparams = _kernel_params(params, n_head, head_einsum)

    # Precomputed additive causal mask (0 on/below diag, -1e30 above).
    causal_bias = jnp.where(jnp.tril(jnp.ones((T, T), dtype=bool)),
                            0.0, -1e30).astype(jnp.float32)

    const_inputs = (causal_bias,) + kparams
    in_specs = [pl.BlockSpec((1, T, C), lambda b: (b, 0, 0))]
    for p in const_inputs:
        idx_map = (lambda b, nd=p.ndim: (0,) * nd)
        if single_buffer_weights:
            # Constant index_map -> double buffering buys nothing; a single
            # buffer halves the constant blocks' VMEM footprint.
            in_specs.append(pl.BlockSpec(p.shape, idx_map,
                                         pipeline_mode=pl.Buffered(1)))
        else:
            in_specs.append(pl.BlockSpec(p.shape, idx_map))

    kern = functools.partial(block_kernel, n_head=n_head, head_einsum=head_einsum)
    return pl.pallas_call(
        kern,
        out_shape=jax.ShapeDtypeStruct((B, T, C), jnp.float32),
        grid=(B,),
        in_specs=in_specs,
        out_specs=pl.BlockSpec((1, T, C), lambda b: (b, 0, 0)),
        compiler_params=pltpu.CompilerParams(
            dimension_semantics=("parallel",),
            vmem_limit_bytes=_vmem_limit_bytes(T, C, n_head)),
    )(x, *const_inputs)


def gpt2_block_ref(x, params, n_head):
    """Pure-JAX f32 reference mirroring the PyTorch Block.forward semantics."""
    (ln1w, ln1b, wqkv, bqkv, wproj, bproj,
     ln2w, ln2b, wfc, bfc, wmp, bmp) = params
    B, T, C = x.shape
    hd = C // n_head

    ln1 = _layernorm(x, ln1w, ln1b)
    qkv = ln1 @ wqkv.T + bqkv
    q, k, v = jnp.split(qkv, 3, axis=-1)
    q = q.reshape(B, T, n_head, hd).transpose(0, 2, 1, 3)
    k = k.reshape(B, T, n_head, hd).transpose(0, 2, 1, 3)
    v = v.reshape(B, T, n_head, hd).transpose(0, 2, 1, 3)
    att = jnp.einsum('bhtd,bhsd->bhts', q, k) / math.sqrt(hd)
    mask = jnp.tril(jnp.ones((T, T), dtype=bool))
    att = jnp.where(mask, att, -jnp.inf)
    att = jax.nn.softmax(att, axis=-1)
    y = jnp.einsum('bhts,bhsd->bhtd', att, v)
    y = y.transpose(0, 2, 1, 3).reshape(B, T, C)
    y = y @ wproj.T + bproj
    x1 = x + y

    ln2 = _layernorm(x1, ln2w, ln2b)
    m = _gelu_tanh(ln2 @ wfc.T + bfc) @ wmp.T + bmp
    return x1 + m


if __name__ == "__main__":
    # Small config: batch=2, seq=8, n_embd=32, n_head=4 (block_size >= T).
    B, T, C, n_head = 2, 8, 32, 4

    key = jax.random.PRNGKey(0)
    keys = jax.random.split(key, 10)

    def w(k, shape, scale=0.02):
        return (scale * jax.random.normal(k, shape)).astype(jnp.float32)

    # Parameters in PyTorch nn.Module layout: Linear weights are (out, in).
    params = (
        jnp.ones((C,), jnp.float32),            # ln_1.weight
        jnp.zeros((C,), jnp.float32),           # ln_1.bias
        w(keys[0], (3 * C, C)),                 # attn.c_attn.weight
        w(keys[1], (3 * C,), 0.01),             # attn.c_attn.bias
        w(keys[2], (C, C)),                     # attn.c_proj.weight
        w(keys[3], (C,), 0.01),                 # attn.c_proj.bias
        jnp.ones((C,), jnp.float32),            # ln_2.weight
        jnp.zeros((C,), jnp.float32),           # ln_2.bias
        w(keys[4], (4 * C, C)),                 # mlp.c_fc.weight
        w(keys[5], (4 * C,), 0.01),             # mlp.c_fc.bias
        w(keys[6], (C, 4 * C)),                 # mlp.c_proj.weight
        w(keys[7], (C,), 0.01),                 # mlp.c_proj.bias
    )
    x = jax.random.normal(keys[8], (B, T, C), dtype=jnp.float32)

    ref = gpt2_block_ref(x, params, n_head)

    # Try the most optimized layout first; fall back to proven-safe variants
    # if this JAX build's Mosaic lowering rejects the head-batched einsums or
    # pl.Buffered(1) single-buffering.  Tolerance accounts for bf16 MXU
    # operands (f32 accumulation) and the approximate EUP reciprocal.
    out, last_err = None, None
    for head_einsum, single_buf in [(True, True), (True, False),
                                    (False, True), (False, False)]:
        try:
            cand = jax.block_until_ready(
                gpt2_block(x, params, n_head,
                           head_einsum=head_einsum,
                           single_buffer_weights=single_buf))
            err = float(jnp.max(jnp.abs(cand - ref)))
            if err < 1e-2:
                out = cand
                break
            last_err = AssertionError(
                f"variant head_einsum={head_einsum}, single_buf={single_buf}: "
                f"max abs err {err}")
        except Exception as exc:   # lowering / compile failure -> next variant
            last_err = exc
    if out is None:
        raise last_err

    assert out.shape == (B, T, C)
    print("KERNEL_OK")
</pallas_src>

<mosaic_0001>
module attributes {stable_mosaic.version = 11 : i64} {
  func.func @block_kernel(%arg0: i32, %arg1: memref<1x8x32xf32, #tpu.memory_space<vmem>>, %arg2: memref<8x8xf32, #tpu.memory_space<vmem>>, %arg3: memref<1x32xf32, #tpu.memory_space<vmem>>, %arg4: memref<1x32xf32, #tpu.memory_space<vmem>>, %arg5: memref<32x96xbf16, #tpu.memory_space<vmem>>, %arg6: memref<1x96xf32, #tpu.memory_space<vmem>>, %arg7: memref<4x8x32xbf16, #tpu.memory_space<vmem>>, %arg8: memref<1x32xf32, #tpu.memory_space<vmem>>, %arg9: memref<1x32xf32, #tpu.memory_space<vmem>>, %arg10: memref<1x32xf32, #tpu.memory_space<vmem>>, %arg11: memref<32x128xbf16, #tpu.memory_space<vmem>>, %arg12: memref<1x128xf32, #tpu.memory_space<vmem>>, %arg13: memref<128x32xbf16, #tpu.memory_space<vmem>>, %arg14: memref<1x32xf32, #tpu.memory_space<vmem>>, %arg15: memref<1x8x32xf32, #tpu.memory_space<vmem>>) attributes {dimension_semantics = [#tpu.dimension_semantics<parallel>], iteration_bounds = array<i64: 2>, scalar_prefetch = 0 : i64, scratch_operands = 0 : i64, tpu.core_type = #tpu.core_type<tc>, window_params = [{transform_indices = @transform_0, window_bounds = array<i64: 1, 8, 32>}, {pipeline_mode = #tpu.pipeline_mode<synchronous>, transform_indices = @transform_1, window_bounds = array<i64: 8, 8>}, {pipeline_mode = #tpu.pipeline_mode<synchronous>, transform_indices = @transform_2, window_bounds = array<i64: 1, 32>}, {pipeline_mode = #tpu.pipeline_mode<synchronous>, transform_indices = @transform_3, window_bounds = array<i64: 1, 32>}, {pipeline_mode = #tpu.pipeline_mode<synchronous>, transform_indices = @transform_4, window_bounds = array<i64: 32, 96>}, {pipeline_mode = #tpu.pipeline_mode<synchronous>, transform_indices = @transform_5, window_bounds = array<i64: 1, 96>}, {pipeline_mode = #tpu.pipeline_mode<synchronous>, transform_indices = @transform_6, window_bounds = array<i64: 4, 8, 32>}, {pipeline_mode = #tpu.pipeline_mode<synchronous>, transform_indices = @transform_7, window_bounds = array<i64: 1, 32>}, {pipeline_mode = #tpu.pipeline_mode<synchronous>, transform_indices = @transform_8, window_bounds = array<i64: 1, 32>}, {pipeline_mode = #tpu.pipeline_mode<synchronous>, transform_indices = @transform_9, window_bounds = array<i64: 1, 32>}, {pipeline_mode = #tpu.pipeline_mode<synchronous>, transform_indices = @transform_10, window_bounds = array<i64: 32, 128>}, {pipeline_mode = #tpu.pipeline_mode<synchronous>, transform_indices = @transform_11, window_bounds = array<i64: 1, 128>}, {pipeline_mode = #tpu.pipeline_mode<synchronous>, transform_indices = @transform_12, window_bounds = array<i64: 128, 32>}, {pipeline_mode = #tpu.pipeline_mode<synchronous>, transform_indices = @transform_13, window_bounds = array<i64: 1, 32>}, {transform_indices = @transform_14, window_bounds = array<i64: 1, 8, 32>}]} {
    %c0 = arith.constant 0 : index
    %c0_0 = arith.constant 0 : index
    %c0_1 = arith.constant 0 : index
    %0 = vector.load %arg1[%c0, %c0_0, %c0_1] : memref<1x8x32xf32, #tpu.memory_space<vmem>>, vector<1x8x32xf32>
    %1 = vector.shape_cast %0 : vector<1x8x32xf32> to vector<8x32xf32>
    %c0_2 = arith.constant 0 : index
    %c0_3 = arith.constant 0 : index
    %2 = vector.load %arg3[%c0_2, %c0_3] : memref<1x32xf32, #tpu.memory_space<vmem>>, vector<1x32xf32>
    %c0_4 = arith.constant 0 : index
    %c0_5 = arith.constant 0 : index
    %3 = vector.load %arg4[%c0_4, %c0_5] : memref<1x32xf32, #tpu.memory_space<vmem>>, vector<1x32xf32>
    %cst = arith.constant dense<0.000000e+00> : vector<8xf32>
    %4 = vector.multi_reduction <add>, %1, %cst [1] : vector<8x32xf32> to vector<8xf32>
    %5 = vector.shape_cast %4 : vector<8xf32> to vector<8x1xf32>
    %cst_6 = arith.constant 3.200000e+01 : f32
    %6 = vector.broadcast %cst_6 : f32 to vector<8x1xf32>
    %7 = arith.divf %5, %6 : vector<8x1xf32>
    %8 = vector.broadcast %7 : vector<8x1xf32> to vector<8x32xf32>
    %9 = arith.subf %1, %8 : vector<8x32xf32>
    %10 = arith.mulf %9, %9 : vector<8x32xf32>
    %cst_7 = arith.constant dense<0.000000e+00> : vector<8xf32>
    %11 = vector.multi_reduction <add>, %10, %cst_7 [1] : vector<8x32xf32> to vector<8xf32>
    %12 = vector.shape_cast %11 : vector<8xf32> to vector<8x1xf32>
    %cst_8 = arith.constant 3.200000e+01 : f32
    %13 = vector.broadcast %cst_8 : f32 to vector<8x1xf32>
    %14 = arith.divf %12, %13 : vector<8x1xf32>
    %15 = vector.broadcast %7 : vector<8x1xf32> to vector<8x32xf32>
    %16 = arith.subf %1, %15 : vector<8x32xf32>
    %cst_9 = arith.constant 9.99999974E-6 : f32
    %17 = vector.broadcast %cst_9 : f32 to vector<8x1xf32>
    %18 = arith.addf %14, %17 : vector<8x1xf32>
    %19 = math.rsqrt %18 : vector<8x1xf32>
    %20 = vector.broadcast %19 : vector<8x1xf32> to vector<8x32xf32>
    %21 = arith.mulf %16, %20 : vector<8x32xf32>
    %22 = vector.broadcast %2 : vector<1x32xf32> to vector<8x32xf32>
    %23 = arith.mulf %21, %22 : vector<8x32xf32>
    %24 = vector.broadcast %3 : vector<1x32xf32> to vector<8x32xf32>
    %25 = arith.addf %23, %24 : vector<8x32xf32>
    %26 = arith.truncf %25 : vector<8x32xf32> to vector<8x32xbf16>
    %c0_10 = arith.constant 0 : index
    %c0_11 = arith.constant 0 : index
    %27 = vector.load %arg5[%c0_10, %c0_11] : memref<32x96xbf16, #tpu.memory_space<vmem>>, vector<32x96xbf16>
    %cst_12 = arith.constant dense<0.000000e+00> : vector<8x96xf32>
    %28 = tpu.matmul %26, %27, %cst_12 {dimension_numbers = #tpu.dot_dimension_numbers<[1], [0], [0], [1], [0, 0, 1, 1], [], []>} : vector<8x32xbf16>, vector<32x96xbf16>, vector<8x96xf32> -> vector<8x96xf32>
    %c0_13 = arith.constant 0 : index
    %c0_14 = arith.constant 0 : index
    %29 = vector.load %arg6[%c0_13, %c0_14] : memref<1x96xf32, #tpu.memory_space<vmem>>, vector<1x96xf32>
    %30 = vector.broadcast %29 : vector<1x96xf32> to vector<8x96xf32>
    %31 = arith.addf %28, %30 : vector<8x96xf32>
    %32 = vector.extract_strided_slice %31 {offsets = [0, 0], sizes = [8, 32], strides = [1, 1]} : vector<8x96xf32> to vector<8x32xf32>
    %33 = vector.extract_strided_slice %31 {offsets = [0, 32], sizes = [8, 32], strides = [1, 1]} : vector<8x96xf32> to vector<8x32xf32>
    %34 = vector.extract_strided_slice %31 {offsets = [0, 64], sizes = [8, 32], strides = [1, 1]} : vector<8x96xf32> to vector<8x32xf32>
    %35 = vector.extract_strided_slice %32 {offsets = [0, 0], sizes = [8, 8], strides = [1, 1]} : vector<8x32xf32> to vector<8x8xf32>
    %36 = vector.extract_strided_slice %32 {offsets = [0, 8], sizes = [8, 8], strides = [1, 1]} : vector<8x32xf32> to vector<8x8xf32>
    %37 = vector.extract_strided_slice %32 {offsets = [0, 16], sizes = [8, 8], strides = [1, 1]} : vector<8x32xf32> to vector<8x8xf32>
    %38 = vector.extract_strided_slice %32 {offsets = [0, 24], sizes = [8, 8], strides = [1, 1]} : vector<8x32xf32> to vector<8x8xf32>
    %39 = vector.shape_cast %35 : vector<8x8xf32> to vector<1x8x8xf32>
    %40 = vector.shape_cast %36 : vector<8x8xf32> to vector<1x8x8xf32>
    %41 = vector.shape_cast %37 : vector<8x8xf32> to vector<1x8x8xf32>
    %42 = vector.shape_cast %38 : vector<8x8xf32> to vector<1x8x8xf32>
    %43 = tpu.concatenate %39, %40, %41, %42 in 0 : vector<1x8x8xf32>, vector<1x8x8xf32>, vector<1x8x8xf32>, vector<1x8x8xf32> -> vector<4x8x8xf32>
    %44 = arith.truncf %43 : vector<4x8x8xf32> to vector<4x8x8xbf16>
    %45 = vector.extract_strided_slice %33 {offsets = [0, 0], sizes = [8, 8], strides = [1, 1]} : vector<8x32xf32> to vector<8x8xf32>
    %46 = vector.extract_strided_slice %33 {offsets = [0, 8], sizes = [8, 8], strides = [1, 1]} : vector<8x32xf32> to vector<8x8xf32>
    %47 = vector.extract_strided_slice %33 {offsets = [0, 16], sizes = [8, 8], strides = [1, 1]} : vector<8x32xf32> to vector<8x8xf32>
    %48 = vector.extract_strided_slice %33 {offsets = [0, 24], sizes = [8, 8], strides = [1, 1]} : vector<8x32xf32> to vector<8x8xf32>
    %49 = vector.shape_cast %45 : vector<8x8xf32> to vector<1x8x8xf32>
    %50 = vector.shape_cast %46 : vector<8x8xf32> to vector<1x8x8xf32>
    %51 = vector.shape_cast %47 : vector<8x8xf32> to vector<1x8x8xf32>
    %52 = vector.shape_cast %48 : vector<8x8xf32> to vector<1x8x8xf32>
    %53 = tpu.concatenate %49, %50, %51, %52 in 0 : vector<1x8x8xf32>, vector<1x8x8xf32>, vector<1x8x8xf32>, vector<1x8x8xf32> -> vector<4x8x8xf32>
    %54 = arith.truncf %53 : vector<4x8x8xf32> to vector<4x8x8xbf16>
    %55 = vector.extract_strided_slice %34 {offsets = [0, 0], sizes = [8, 8], strides = [1, 1]} : vector<8x32xf32> to vector<8x8xf32>
    %56 = vector.extract_strided_slice %34 {offsets = [0, 8], sizes = [8, 8], strides = [1, 1]} : vector<8x32xf32> to vector<8x8xf32>
    %57 = vector.extract_strided_slice %34 {offsets = [0, 16], sizes = [8, 8], strides = [1, 1]} : vector<8x32xf32> to vector<8x8xf32>
    %58 = vector.extract_strided_slice %34 {offsets = [0, 24], sizes = [8, 8], strides = [1, 1]} : vector<8x32xf32> to vector<8x8xf32>
    %59 = vector.shape_cast %55 : vector<8x8xf32> to vector<1x8x8xf32>
    %60 = vector.shape_cast %56 : vector<8x8xf32> to vector<1x8x8xf32>
    %61 = vector.shape_cast %57 : vector<8x8xf32> to vector<1x8x8xf32>
    %62 = vector.shape_cast %58 : vector<8x8xf32> to vector<1x8x8xf32>
    %63 = tpu.concatenate %59, %60, %61, %62 in 0 : vector<1x8x8xf32>, vector<1x8x8xf32>, vector<1x8x8xf32>, vector<1x8x8xf32> -> vector<4x8x8xf32>
    %64 = arith.truncf %63 : vector<4x8x8xf32> to vector<4x8x8xbf16>
    "tpu.trace_start"() <{level = 10 : i32, message = "htd,hsd->hts"}> : () -> ()
    %cst_15 = arith.constant dense<0.000000e+00> : vector<4x8x8xf32>
    %65 = tpu.matmul %44, %54, %cst_15 {dimension_numbers = #tpu.dot_dimension_numbers<[2], [2], [1], [1], [0, 0, 0, 1, 1, 1], [0], [0]>} : vector<4x8x8xbf16>, vector<4x8x8xbf16>, vector<4x8x8xf32> -> vector<4x8x8xf32>
    "tpu.trace_stop"() : () -> ()
    %c0_16 = arith.constant 0 : index
    %c0_17 = arith.constant 0 : index
    %66 = vector.load %arg2[%c0_16, %c0_17] : memref<8x8xf32, #tpu.memory_space<vmem>>, vector<8x8xf32>
    %67 = vector.shape_cast %66 : vector<8x8xf32> to vector<1x8x8xf32>
    %68 = vector.broadcast %67 : vector<1x8x8xf32> to vector<4x8x8xf32>
    %69 = arith.addf %65, %68 : vector<4x8x8xf32>
    %cst_18 = arith.constant dense<0xFF800000> : vector<4x8xf32>
    %70 = vector.multi_reduction <maximumf>, %69, %cst_18 [2] : vector<4x8x8xf32> to vector<4x8xf32>
    %71 = vector.shape_cast %70 : vector<4x8xf32> to vector<4x8x1xf32>
    %72 = vector.broadcast %71 : vector<4x8x1xf32> to vector<4x8x8xf32>
    %73 = arith.subf %69, %72 : vector<4x8x8xf32>
    %74 = math.exp %73 : vector<4x8x8xf32>
    %cst_19 = arith.constant dense<0.000000e+00> : vector<4x8xf32>
    %75 = vector.multi_reduction <add>, %74, %cst_19 [2] : vector<4x8x8xf32> to vector<4x8xf32>
    %76 = vector.shape_cast %75 : vector<4x8xf32> to vector<4x8x1xf32>
    %77 = arith.truncf %74 : vector<4x8x8xf32> to vector<4x8x8xbf16>
    "tpu.trace_start"() <{level = 10 : i32, message = "hts,hsd->htd"}> : () -> ()
    %cst_20 = arith.constant dense<0.000000e+00> : vector<4x8x8xf32>
    %78 = tpu.matmul %77, %64, %cst_20 {dimension_numbers = #tpu.dot_dimension_numbers<[2], [1], [1], [2], [0, 0, 0, 1, 1, 2], [0], [0]>} : vector<4x8x8xbf16>, vector<4x8x8xbf16>, vector<4x8x8xf32> -> vector<4x8x8xf32>
    "tpu.trace_stop"() : () -> ()
    %79 = tpu.reciprocal %76 {approx = true} : vector<4x8x1xf32> -> vector<4x8x1xf32>
    %80 = vector.broadcast %79 : vector<4x8x1xf32> to vector<4x8x8xf32>
    %81 = arith.mulf %78, %80 : vector<4x8x8xf32>
    %82 = arith.truncf %81 : vector<4x8x8xf32> to vector<4x8x8xbf16>
    %cst_21 = arith.constant 0.000000e+00 : f32
    %83 = vector.broadcast %cst_21 : f32 to vector<8x32xf32>
    %84 = vector.extract_strided_slice %82 {offsets = [0, 0, 0], sizes = [1, 8, 8], strides = [1, 1, 1]} : vector<4x8x8xbf16> to vector<1x8x8xbf16>
    %85 = vector.shape_cast %84 : vector<1x8x8xbf16> to vector<8x8xbf16>
    %c0_22 = arith.constant 0 : index
    %c0_23 = arith.constant 0 : index
    %c0_24 = arith.constant 0 : index
    %86 = vector.load %arg7[%c0_22, %c0_23, %c0_24] : memref<4x8x32xbf16, #tpu.memory_space<vmem>>, vector<1x8x32xbf16>
    %87 = vector.shape_cast %86 : vector<1x8x32xbf16> to vector<8x32xbf16>
    %cst_25 = arith.constant dense<0.000000e+00> : vector<8x32xf32>
    %88 = tpu.matmul %85, %87, %cst_25 {dimension_numbers = #tpu.dot_dimension_numbers<[1], [0], [0], [1], [0, 0, 1, 1], [], []>} : vector<8x8xbf16>, vector<8x32xbf16>, vector<8x32xf32> -> vector<8x32xf32>
    %89 = arith.addf %83, %88 : vector<8x32xf32>
    %90 = vector.extract_strided_slice %82 {offsets = [1, 0, 0], sizes = [1, 8, 8], strides = [1, 1, 1]} : vector<4x8x8xbf16> to vector<1x8x8xbf16>
    %91 = vector.shape_cast %90 : vector<1x8x8xbf16> to vector<8x8xbf16>
    %c1 = arith.constant 1 : index
    %c0_26 = arith.constant 0 : index
    %c0_27 = arith.constant 0 : index
    %92 = vector.load %arg7[%c1, %c0_26, %c0_27] : memref<4x8x32xbf16, #tpu.memory_space<vmem>>, vector<1x8x32xbf16>
    %93 = vector.shape_cast %92 : vector<1x8x32xbf16> to vector<8x32xbf16>
    %cst_28 = arith.constant dense<0.000000e+00> : vector<8x32xf32>
    %94 = tpu.matmul %91, %93, %cst_28 {dimension_numbers = #tpu.dot_dimension_numbers<[1], [0], [0], [1], [0, 0, 1, 1], [], []>} : vector<8x8xbf16>, vector<8x32xbf16>, vector<8x32xf32> -> vector<8x32xf32>
    %95 = arith.addf %89, %94 : vector<8x32xf32>
    %96 = vector.extract_strided_slice %82 {offsets = [2, 0, 0], sizes = [1, 8, 8], strides = [1, 1, 1]} : vector<4x8x8xbf16> to vector<1x8x8xbf16>
    %97 = vector.shape_cast %96 : vector<1x8x8xbf16> to vector<8x8xbf16>
    %c2 = arith.constant 2 : index
    %c0_29 = arith.constant 0 : index
    %c0_30 = arith.constant 0 : index
    %98 = vector.load %arg7[%c2, %c0_29, %c0_30] : memref<4x8x32xbf16, #tpu.memory_space<vmem>>, vector<1x8x32xbf16>
    %99 = vector.shape_cast %98 : vector<1x8x32xbf16> to vector<8x32xbf16>
    %cst_31 = arith.constant dense<0.000000e+00> : vector<8x32xf32>
    %100 = tpu.matmul %97, %99, %cst_31 {dimension_numbers = #tpu.dot_dimension_numbers<[1], [0], [0], [1], [0, 0, 1, 1], [], []>} : vector<8x8xbf16>, vector<8x32xbf16>, vector<8x32xf32> -> vector<8x32xf32>
    %101 = arith.addf %95, %100 : vector<8x32xf32>
    %102 = vector.extract_strided_slice %82 {offsets = [3, 0, 0], sizes = [1, 8, 8], strides = [1, 1, 1]} : vector<4x8x8xbf16> to vector<1x8x8xbf16>
    %103 = vector.shape_cast %102 : vector<1x8x8xbf16> to vector<8x8xbf16>
    %c3 = arith.constant 3 : index
    %c0_32 = arith.constant 0 : index
    %c0_33 = arith.constant 0 : index
    %104 = vector.load %arg7[%c3, %c0_32, %c0_33] : memref<4x8x32xbf16, #tpu.memory_space<vmem>>, vector<1x8x32xbf16>
    %105 = vector.shape_cast %104 : vector<1x8x32xbf16> to vector<8x32xbf16>
    %cst_34 = arith.constant dense<0.000000e+00> : vector<8x32xf32>
    %106 = tpu.matmul %103, %105, %cst_34 {dimension_numbers = #tpu.dot_dimension_numbers<[1], [0], [0], [1], [0, 0, 1, 1], [], []>} : vector<8x8xbf16>, vector<8x32xbf16>, vector<8x32xf32> -> vector<8x32xf32>
    %107 = arith.addf %101, %106 : vector<8x32xf32>
    %c0_35 = arith.constant 0 : index
    %c0_36 = arith.constant 0 : index
    %108 = vector.load %arg8[%c0_35, %c0_36] : memref<1x32xf32, #tpu.memory_space<vmem>>, vector<1x32xf32>
    %109 = vector.broadcast %108 : vector<1x32xf32> to vector<8x32xf32>
    %110 = arith.addf %107, %109 : vector<8x32xf32>
    %111 = arith.addf %1, %110 : vector<8x32xf32>
    %c0_37 = arith.constant 0 : index
    %c0_38 = arith.constant 0 : index
    %112 = vector.load %arg9[%c0_37, %c0_38] : memref<1x32xf32, #tpu.memory_space<vmem>>, vector<1x32xf32>
    %c0_39 = arith.constant 0 : index
    %c0_40 = arith.constant 0 : index
    %113 = vector.load %arg10[%c0_39, %c0_40] : memref<1x32xf32, #tpu.memory_space<vmem>>, vector<1x32xf32>
    %cst_41 = arith.constant dense<0.000000e+00> : vector<8xf32>
    %114 = vector.multi_reduction <add>, %111, %cst_41 [1] : vector<8x32xf32> to vector<8xf32>
    %115 = vector.shape_cast %114 : vector<8xf32> to vector<8x1xf32>
    %cst_42 = arith.constant 3.200000e+01 : f32
    %116 = vector.broadcast %cst_42 : f32 to vector<8x1xf32>
    %117 = arith.divf %115, %116 : vector<8x1xf32>
    %118 = vector.broadcast %117 : vector<8x1xf32> to vector<8x32xf32>
    %119 = arith.subf %111, %118 : vector<8x32xf32>
    %120 = arith.mulf %119, %119 : vector<8x32xf32>
    %cst_43 = arith.constant dense<0.000000e+00> : vector<8xf32>
    %121 = vector.multi_reduction <add>, %120, %cst_43 [1] : vector<8x32xf32> to vector<8xf32>
    %122 = vector.shape_cast %121 : vector<8xf32> to vector<8x1xf32>
    %cst_44 = arith.constant 3.200000e+01 : f32
    %123 = vector.broadcast %cst_44 : f32 to vector<8x1xf32>
    %124 = arith.divf %122, %123 : vector<8x1xf32>
    %125 = vector.broadcast %117 : vector<8x1xf32> to vector<8x32xf32>
    %126 = arith.subf %111, %125 : vector<8x32xf32>
    %cst_45 = arith.constant 9.99999974E-6 : f32
    %127 = vector.broadcast %cst_45 : f32 to vector<8x1xf32>
    %128 = arith.addf %124, %127 : vector<8x1xf32>
    %129 = math.rsqrt %128 : vector<8x1xf32>
    %130 = vector.broadcast %129 : vector<8x1xf32> to vector<8x32xf32>
    %131 = arith.mulf %126, %130 : vector<8x32xf32>
    %132 = vector.broadcast %112 : vector<1x32xf32> to vector<8x32xf32>
    %133 = arith.mulf %131, %132 : vector<8x32xf32>
    %134 = vector.broadcast %113 : vector<1x32xf32> to vector<8x32xf32>
    %135 = arith.addf %133, %134 : vector<8x32xf32>
    %136 = arith.truncf %135 : vector<8x32xf32> to vector<8x32xbf16>
    %c0_46 = arith.constant 0 : index
    %c0_47 = arith.constant 0 : index
    %137 = vector.load %arg11[%c0_46, %c0_47] : memref<32x128xbf16, #tpu.memory_space<vmem>>, vector<32x128xbf16>
    %cst_48 = arith.constant dense<0.000000e+00> : vector<8x128xf32>
    %138 = tpu.matmul %136, %137, %cst_48 {dimension_numbers = #tpu.dot_dimension_numbers<[1], [0], [0], [1], [0, 0, 1, 1], [], []>} : vector<8x32xbf16>, vector<32x128xbf16>, vector<8x128xf32> -> vector<8x128xf32>
    %c0_49 = arith.constant 0 : index
    %c0_50 = arith.constant 0 : index
    %139 = vector.load %arg12[%c0_49, %c0_50] : memref<1x128xf32, #tpu.memory_space<vmem>>, vector<1x128xf32>
    %140 = vector.broadcast %139 : vector<1x128xf32> to vector<8x128xf32>
    %141 = arith.addf %138, %140 : vector<8x128xf32>
    %cst_51 = arith.constant 5.000000e-01 : f32
    %142 = vector.broadcast %cst_51 : f32 to vector<8x128xf32>
    %143 = arith.mulf %142, %141 : vector<8x128xf32>
    %cst_52 = arith.constant 4.471500e-02 : f32
    %144 = vector.broadcast %cst_52 : f32 to vector<8x128xf32>
    %145 = arith.mulf %144, %141 : vector<8x128xf32>
    %146 = arith.mulf %145, %141 : vector<8x128xf32>
    %147 = arith.mulf %146, %141 : vector<8x128xf32>
    %148 = arith.addf %141, %147 : vector<8x128xf32>
    %cst_53 = arith.constant 0.797884583 : f32
    %149 = vector.broadcast %cst_53 : f32 to vector<8x128xf32>
    %150 = arith.mulf %149, %148 : vector<8x128xf32>
    %151 = math.tanh %150 : vector<8x128xf32>
    %cst_54 = arith.constant 1.000000e+00 : f32
    %152 = vector.broadcast %cst_54 : f32 to vector<8x128xf32>
    %153 = arith.addf %152, %151 : vector<8x128xf32>
    %154 = arith.mulf %143, %153 : vector<8x128xf32>
    %155 = arith.truncf %154 : vector<8x128xf32> to vector<8x128xbf16>
    %c0_55 = arith.constant 0 : index
    %c0_56 = arith.constant 0 : index
    %156 = vector.load %arg13[%c0_55, %c0_56] : memref<128x32xbf16, #tpu.memory_space<vmem>>, vector<128x32xbf16>
    %cst_57 = arith.constant dense<0.000000e+00> : vector<8x32xf32>
    %157 = tpu.matmul %155, %156, %cst_57 {dimension_numbers = #tpu.dot_dimension_numbers<[1], [0], [0], [1], [0, 0, 1, 1], [], []>} : vector<8x128xbf16>, vector<128x32xbf16>, vector<8x32xf32> -> vector<8x32xf32>
    %c0_58 = arith.constant 0 : index
    %c0_59 = arith.constant 0 : index
    %158 = vector.load %arg14[%c0_58, %c0_59] : memref<1x32xf32, #tpu.memory_space<vmem>>, vector<1x32xf32>
    %159 = vector.broadcast %158 : vector<1x32xf32> to vector<8x32xf32>
    %160 = arith.addf %157, %159 : vector<8x32xf32>
    %161 = arith.addf %111, %160 : vector<8x32xf32>
    %c0_60 = arith.constant 0 : index
    %c0_61 = arith.constant 0 : index
    %c0_62 = arith.constant 0 : index
    %162 = vector.load %arg15[%c0_60, %c0_61, %c0_62] : memref<1x8x32xf32, #tpu.memory_space<vmem>>, vector<1x8x32xf32>
    %163 = vector.shape_cast %162 : vector<1x8x32xf32> to vector<8x32xf32>
    %164 = vector.shape_cast %161 : vector<8x32xf32> to vector<1x8x32xf32>
    tpu.vector_store %arg15[%c0_60, %c0_61, %c0_62], %164 {strides = array<i32>} : memref<1x8x32xf32, #tpu.memory_space<vmem>>, vector<1x8x32xf32>,
    return
  }
  func.func @transform_0(%arg0: i32) -> (i32, i32, i32) {
    %c0_i32 = arith.constant 0 : i32
    %c0_i32_0 = arith.constant 0 : i32
    %c0_i32_1 = arith.constant 0 : i32
    return %arg0, %c0_i32, %c0_i32_0 : i32, i32, i32
  }
  func.func @transform_1(%arg0: i32) -> (i32, i32) {
    %c0_i32 = arith.constant 0 : i32
    %c0_i32_0 = arith.constant 0 : i32
    %c0_i32_1 = arith.constant 0 : i32
    return %c0_i32, %c0_i32_0 : i32, i32
  }
  func.func @transform_2(%arg0: i32) -> (i32, i32) {
    %c0_i32 = arith.constant 0 : i32
    %c0_i32_0 = arith.constant 0 : i32
    %c0_i32_1 = arith.constant 0 : i32
    return %c0_i32, %c0_i32_0 : i32, i32
  }
  func.func @transform_3(%arg0: i32) -> (i32, i32) {
    %c0_i32 = arith.constant 0 : i32
    %c0_i32_0 = arith.constant 0 : i32
    %c0_i32_1 = arith.constant 0 : i32
    return %c0_i32, %c0_i32_0 : i32, i32
  }
  func.func @transform_4(%arg0: i32) -> (i32, i32) {
    %c0_i32 = arith.constant 0 : i32
    %c0_i32_0 = arith.constant 0 : i32
    %c0_i32_1 = arith.constant 0 : i32
    return %c0_i32, %c0_i32_0 : i32, i32
  }
  func.func @transform_5(%arg0: i32) -> (i32, i32) {
    %c0_i32 = arith.constant 0 : i32
    %c0_i32_0 = arith.constant 0 : i32
    %c0_i32_1 = arith.constant 0 : i32
    return %c0_i32, %c0_i32_0 : i32, i32
  }
  func.func @transform_6(%arg0: i32) -> (i32, i32, i32) {
    %c0_i32 = arith.constant 0 : i32
    %c0_i32_0 = arith.constant 0 : i32
    %c0_i32_1 = arith.constant 0 : i32
    %c0_i32_2 = arith.constant 0 : i32
    return %c0_i32, %c0_i32_0, %c0_i32_1 : i32, i32, i32
  }
  func.func @transform_7(%arg0: i32) -> (i32, i32) {
    %c0_i32 = arith.constant 0 : i32
    %c0_i32_0 = arith.constant 0 : i32
    %c0_i32_1 = arith.constant 0 : i32
    return %c0_i32, %c0_i32_0 : i32, i32
  }
  func.func @transform_8(%arg0: i32) -> (i32, i32) {
    %c0_i32 = arith.constant 0 : i32
    %c0_i32_0 = arith.constant 0 : i32
    %c0_i32_1 = arith.constant 0 : i32
    return %c0_i32, %c0_i32_0 : i32, i32
  }
  func.func @transform_9(%arg0: i32) -> (i32, i32) {
    %c0_i32 = arith.constant 0 : i32
    %c0_i32_0 = arith.constant 0 : i32
    %c0_i32_1 = arith.constant 0 : i32
    return %c0_i32, %c0_i32_0 : i32, i32
  }
  func.func @transform_10(%arg0: i32) -> (i32, i32) {
    %c0_i32 = arith.constant 0 : i32
    %c0_i32_0 = arith.constant 0 : i32
    %c0_i32_1 = arith.constant 0 : i32
    return %c0_i32, %c0_i32_0 : i32, i32
  }
  func.func @transform_11(%arg0: i32) -> (i32, i32) {
    %c0_i32 = arith.constant 0 : i32
    %c0_i32_0 = arith.constant 0 : i32
    %c0_i32_1 = arith.constant 0 : i32
    return %c0_i32, %c0_i32_0 : i32, i32
  }
  func.func @transform_12(%arg0: i32) -> (i32, i32) {
    %c0_i32 = arith.constant 0 : i32
    %c0_i32_0 = arith.constant 0 : i32
    %c0_i32_1 = arith.constant 0 : i32
    return %c0_i32, %c0_i32_0 : i32, i32
  }
  func.func @transform_13(%arg0: i32) -> (i32, i32) {
    %c0_i32 = arith.constant 0 : i32
    %c0_i32_0 = arith.constant 0 : i32
    %c0_i32_1 = arith.constant 0 : i32
    return %c0_i32, %c0_i32_0 : i32, i32
  }
  func.func @transform_14(%arg0: i32) -> (i32, i32, i32) {
    %c0_i32 = arith.constant 0 : i32
    %c0_i32_0 = arith.constant 0 : i32
    %c0_i32_1 = arith.constant 0 : i32
    return %arg0, %c0_i32, %c0_i32_0 : i32, i32, i32
  }
}

module attributes {stable_mosaic.version = 11 : i64} {
  func.func @block_kernel(%arg0: i32, %arg1: memref<1x8x32xf32, #tpu.memory_space<vmem>>, %arg2: memref<8x8xf32, #tpu.memory_space<vmem>>, %arg3: memref<1x32xf32, #tpu.memory_space<vmem>>, %arg4: memref<1x32xf32, #tpu.memory_space<vmem>>, %arg5: memref<32x96xbf16, #tpu.memory_space<vmem>>, %arg6: memref<1x96xf32, #tpu.memory_space<vmem>>, %arg7: memref<4x8x32xbf16, #tpu.memory_space<vmem>>, %arg8: memref<1x32xf32, #tpu.memory_space<vmem>>, %arg9: memref<1x32xf32, #tpu.memory_space<vmem>>, %arg10: memref<1x32xf32, #tpu.memory_space<vmem>>, %arg11: memref<32x128xbf16, #tpu.memory_space<vmem>>, %arg12: memref<1x128xf32, #tpu.memory_space<vmem>>, %arg13: memref<128x32xbf16, #tpu.memory_space<vmem>>, %arg14: memref<1x32xf32, #tpu.memory_space<vmem>>, %arg15: memref<1x8x32xf32, #tpu.memory_space<vmem>>) attributes {dimension_semantics = [#tpu.dimension_semantics<parallel>], iteration_bounds = array<i64: 2>, scalar_prefetch = 0 : i64, scratch_operands = 0 : i64, tpu.core_type = #tpu.core_type<tc>, window_params = [{transform_indices = @transform_0, window_bounds = array<i64: 1, 8, 32>}, {pipeline_mode = #tpu.pipeline_mode<synchronous>, transform_indices = @transform_1, window_bounds = array<i64: 8, 8>}, {pipeline_mode = #tpu.pipeline_mode<synchronous>, transform_indices = @transform_2, window_bounds = array<i64: 1, 32>}, {pipeline_mode = #tpu.pipeline_mode<synchronous>, transform_indices = @transform_3, window_bounds = array<i64: 1, 32>}, {pipeline_mode = #tpu.pipeline_mode<synchronous>, transform_indices = @transform_4, window_bounds = array<i64: 32, 96>}, {pipeline_mode = #tpu.pipeline_mode<synchronous>, transform_indices = @transform_5, window_bounds = array<i64: 1, 96>}, {pipeline_mode = #tpu.pipeline_mode<synchronous>, transform_indices = @transform_6, window_bounds = array<i64: 4, 8, 32>}, {pipeline_mode = #tpu.pipeline_mode<synchronous>, transform_indices = @transform_7, window_bounds = array<i64: 1, 32>}, {pipeline_mode = #tpu.pipeline_mode<synchronous>, transform_indices = @transform_8, window_bounds = array<i64: 1, 32>}, {pipeline_mode = #tpu.pipeline_mode<synchronous>, transform_indices = @transform_9, window_bounds = array<i64: 1, 32>}, {pipeline_mode = #tpu.pipeline_mode<synchronous>, transform_indices = @transform_10, window_bounds = array<i64: 32, 128>}, {pipeline_mode = #tpu.pipeline_mode<synchronous>, transform_indices = @transform_11, window_bounds = array<i64: 1, 128>}, {pipeline_mode = #tpu.pipeline_mode<synchronous>, transform_indices = @transform_12, window_bounds = array<i64: 128, 32>}, {pipeline_mode = #tpu.pipeline_mode<synchronous>, transform_indices = @transform_13, window_bounds = array<i64: 1, 32>}, {transform_indices = @transform_14, window_bounds = array<i64: 1, 8, 32>}]} {
    %c0 = arith.constant 0 : index
    %c0_0 = arith.constant 0 : index
    %c0_1 = arith.constant 0 : index
    %0 = vector.load %arg1[%c0, %c0_0, %c0_1] : memref<1x8x32xf32, #tpu.memory_space<vmem>>, vector<1x8x32xf32>
    %1 = vector.shape_cast %0 : vector<1x8x32xf32> to vector<8x32xf32>
    %c0_2 = arith.constant 0 : index
    %c0_3 = arith.constant 0 : index
    %2 = vector.load %arg3[%c0_2, %c0_3] : memref<1x32xf32, #tpu.memory_space<vmem>>, vector<1x32xf32>
    %c0_4 = arith.constant 0 : index
    %c0_5 = arith.constant 0 : index
    %3 = vector.load %arg4[%c0_4, %c0_5] : memref<1x32xf32, #tpu.memory_space<vmem>>, vector<1x32xf32>
    %cst = arith.constant dense<0.000000e+00> : vector<8xf32>
    %4 = vector.multi_reduction <add>, %1, %cst [1] : vector<8x32xf32> to vector<8xf32>
    %5 = vector.shape_cast %4 : vector<8xf32> to vector<8x1xf32>
    %cst_6 = arith.constant 3.200000e+01 : f32
    %6 = vector.broadcast %cst_6 : f32 to vector<8x1xf32>
    %7 = arith.divf %5, %6 : vector<8x1xf32>
    %8 = vector.broadcast %7 : vector<8x1xf32> to vector<8x32xf32>
    %9 = arith.subf %1, %8 : vector<8x32xf32>
    %10 = arith.mulf %9, %9 : vector<8x32xf32>
    %cst_7 = arith.constant dense<0.000000e+00> : vector<8xf32>
    %11 = vector.multi_reduction <add>, %10, %cst_7 [1] : vector<8x32xf32> to vector<8xf32>
    %12 = vector.shape_cast %11 : vector<8xf32> to vector<8x1xf32>
    %cst_8 = arith.constant 3.200000e+01 : f32
    %13 = vector.broadcast %cst_8 : f32 to vector<8x1xf32>
    %14 = arith.divf %12, %13 : vector<8x1xf32>
    %15 = vector.broadcast %7 : vector<8x1xf32> to vector<8x32xf32>
    %16 = arith.subf %1, %15 : vector<8x32xf32>
    %cst_9 = arith.constant 9.99999974E-6 : f32
    %17 = vector.broadcast %cst_9 : f32 to vector<8x1xf32>
    %18 = arith.addf %14, %17 : vector<8x1xf32>
    %19 = math.rsqrt %18 : vector<8x1xf32>
    %20 = vector.broadcast %19 : vector<8x1xf32> to vector<8x32xf32>
    %21 = arith.mulf %16, %20 : vector<8x32xf32>
    %22 = vector.broadcast %2 : vector<1x32xf32> to vector<8x32xf32>
    %23 = arith.mulf %21, %22 : vector<8x32xf32>
    %24 = vector.broadcast %3 : vector<1x32xf32> to vector<8x32xf32>
    %25 = arith.addf %23, %24 : vector<8x32xf32>
    %26 = arith.truncf %25 : vector<8x32xf32> to vector<8x32xbf16>
    %c0_10 = arith.constant 0 : index
    %c0_11 = arith.constant 0 : index
    %27 = vector.load %arg5[%c0_10, %c0_11] : memref<32x96xbf16, #tpu.memory_space<vmem>>, vector<32x96xbf16>
    %cst_12 = arith.constant dense<0.000000e+00> : vector<8x96xf32>
    %28 = tpu.matmul %26, %27, %cst_12 {dimension_numbers = #tpu.dot_dimension_numbers<[1], [0], [0], [1], [0, 0, 1, 1], [], []>} : vector<8x32xbf16>, vector<32x96xbf16>, vector<8x96xf32> -> vector<8x96xf32>
    %c0_13 = arith.constant 0 : index
    %c0_14 = arith.constant 0 : index
    %29 = vector.load %arg6[%c0_13, %c0_14] : memref<1x96xf32, #tpu.memory_space<vmem>>, vector<1x96xf32>
    %30 = vector.broadcast %29 : vector<1x96xf32> to vector<8x96xf32>
    %31 = arith.addf %28, %30 : vector<8x96xf32>
    %32 = vector.extract_strided_slice %31 {offsets = [0, 0], sizes = [8, 32], strides = [1, 1]} : vector<8x96xf32> to vector<8x32xf32>
    %33 = vector.extract_strided_slice %31 {offsets = [0, 32], sizes = [8, 32], strides = [1, 1]} : vector<8x96xf32> to vector<8x32xf32>
    %34 = vector.extract_strided_slice %31 {offsets = [0, 64], sizes = [8, 32], strides = [1, 1]} : vector<8x96xf32> to vector<8x32xf32>
    %35 = vector.extract_strided_slice %32 {offsets = [0, 0], sizes = [8, 8], strides = [1, 1]} : vector<8x32xf32> to vector<8x8xf32>
    %36 = vector.extract_strided_slice %32 {offsets = [0, 8], sizes = [8, 8], strides = [1, 1]} : vector<8x32xf32> to vector<8x8xf32>
    %37 = vector.extract_strided_slice %32 {offsets = [0, 16], sizes = [8, 8], strides = [1, 1]} : vector<8x32xf32> to vector<8x8xf32>
    %38 = vector.extract_strided_slice %32 {offsets = [0, 24], sizes = [8, 8], strides = [1, 1]} : vector<8x32xf32> to vector<8x8xf32>
    %39 = vector.shape_cast %35 : vector<8x8xf32> to vector<1x8x8xf32>
    %40 = vector.shape_cast %36 : vector<8x8xf32> to vector<1x8x8xf32>
    %41 = vector.shape_cast %37 : vector<8x8xf32> to vector<1x8x8xf32>
    %42 = vector.shape_cast %38 : vector<8x8xf32> to vector<1x8x8xf32>
    %43 = tpu.concatenate %39, %40, %41, %42 in 0 : vector<1x8x8xf32>, vector<1x8x8xf32>, vector<1x8x8xf32>, vector<1x8x8xf32> -> vector<4x8x8xf32>
    %44 = arith.truncf %43 : vector<4x8x8xf32> to vector<4x8x8xbf16>
    %45 = vector.extract_strided_slice %33 {offsets = [0, 0], sizes = [8, 8], strides = [1, 1]} : vector<8x32xf32> to vector<8x8xf32>
    %46 = vector.extract_strided_slice %33 {offsets = [0, 8], sizes = [8, 8], strides = [1, 1]} : vector<8x32xf32> to vector<8x8xf32>
    %47 = vector.extract_strided_slice %33 {offsets = [0, 16], sizes = [8, 8], strides = [1, 1]} : vector<8x32xf32> to vector<8x8xf32>
    %48 = vector.extract_strided_slice %33 {offsets = [0, 24], sizes = [8, 8], strides = [1, 1]} : vector<8x32xf32> to vector<8x8xf32>
    %49 = vector.shape_cast %45 : vector<8x8xf32> to vector<1x8x8xf32>
    %50 = vector.shape_cast %46 : vector<8x8xf32> to vector<1x8x8xf32>
    %51 = vector.shape_cast %47 : vector<8x8xf32> to vector<1x8x8xf32>
    %52 = vector.shape_cast %48 : vector<8x8xf32> to vector<1x8x8xf32>
    %53 = tpu.concatenate %49, %50, %51, %52 in 0 : vector<1x8x8xf32>, vector<1x8x8xf32>, vector<1x8x8xf32>, vector<1x8x8xf32> -> vector<4x8x8xf32>
    %54 = arith.truncf %53 : vector<4x8x8xf32> to vector<4x8x8xbf16>
    %55 = vector.extract_strided_slice %34 {offsets = [0, 0], sizes = [8, 8], strides = [1, 1]} : vector<8x32xf32> to vector<8x8xf32>
    %56 = vector.extract_strided_slice %34 {offsets = [0, 8], sizes = [8, 8], strides = [1, 1]} : vector<8x32xf32> to vector<8x8xf32>
    %57 = vector.extract_strided_slice %34 {offsets = [0, 16], sizes = [8, 8], strides = [1, 1]} : vector<8x32xf32> to vector<8x8xf32>
    %58 = vector.extract_strided_slice %34 {offsets = [0, 24], sizes = [8, 8], strides = [1, 1]} : vector<8x32xf32> to vector<8x8xf32>
    %59 = vector.shape_cast %55 : vector<8x8xf32> to vector<1x8x8xf32>
    %60 = vector.shape_cast %56 : vector<8x8xf32> to vector<1x8x8xf32>
    %61 = vector.shape_cast %57 : vector<8x8xf32> to vector<1x8x8xf32>
    %62 = vector.shape_cast %58 : vector<8x8xf32> to vector<1x8x8xf32>
    %63 = tpu.concatenate %59, %60, %61, %62 in 0 : vector<1x8x8xf32>, vector<1x8x8xf32>, vector<1x8x8xf32>, vector<1x8x8xf32> -> vector<4x8x8xf32>
    %64 = arith.truncf %63 : vector<4x8x8xf32> to vector<4x8x8xbf16>
    "tpu.trace_start"() <{level = 10 : i32, message = "htd,hsd->hts"}> : () -> ()
    %cst_15 = arith.constant dense<0.000000e+00> : vector<4x8x8xf32>
    %65 = tpu.matmul %44, %54, %cst_15 {dimension_numbers = #tpu.dot_dimension_numbers<[2], [2], [1], [1], [0, 0, 0, 1, 1, 1], [0], [0]>} : vector<4x8x8xbf16>, vector<4x8x8xbf16>, vector<4x8x8xf32> -> vector<4x8x8xf32>
    "tpu.trace_stop"() : () -> ()
    %c0_16 = arith.constant 0 : index
    %c0_17 = arith.constant 0 : index
    %66 = vector.load %arg2[%c0_16, %c0_17] : memref<8x8xf32, #tpu.memory_space<vmem>>, vector<8x8xf32>
    %67 = vector.shape_cast %66 : vector<8x8xf32> to vector<1x8x8xf32>
    %68 = vector.broadcast %67 : vector<1x8x8xf32> to vector<4x8x8xf32>
    %69 = arith.addf %65, %68 : vector<4x8x8xf32>
    %cst_18 = arith.constant dense<0xFF800000> : vector<4x8xf32>
    %70 = vector.multi_reduction <maximumf>, %69, %cst_18 [2] : vector<4x8x8xf32> to vector<4x8xf32>
    %71 = vector.shape_cast %70 : vector<4x8xf32> to vector<4x8x1xf32>
    %72 = vector.broadcast %71 : vector<4x8x1xf32> to vector<4x8x8xf32>
    %73 = arith.subf %69, %72 : vector<4x8x8xf32>
    %74 = math.exp %73 : vector<4x8x8xf32>
    %cst_19 = arith.constant dense<0.000000e+00> : vector<4x8xf32>
    %75 = vector.multi_reduction <add>, %74, %cst_19 [2] : vector<4x8x8xf32> to vector<4x8xf32>
    %76 = vector.shape_cast %75 : vector<4x8xf32> to vector<4x8x1xf32>
    %77 = arith.truncf %74 : vector<4x8x8xf32> to vector<4x8x8xbf16>
    "tpu.trace_start"() <{level = 10 : i32, message = "hts,hsd->htd"}> : () -> ()
    %cst_20 = arith.constant dense<0.000000e+00> : vector<4x8x8xf32>
    %78 = tpu.matmul %77, %64, %cst_20 {dimension_numbers = #tpu.dot_dimension_numbers<[2], [1], [1], [2], [0, 0, 0, 1, 1, 2], [0], [0]>} : vector<4x8x8xbf16>, vector<4x8x8xbf16>, vector<4x8x8xf32> -> vector<4x8x8xf32>
    "tpu.trace_stop"() : () -> ()
    %79 = tpu.reciprocal %76 {approx = true} : vector<4x8x1xf32> -> vector<4x8x1xf32>
    %80 = vector.broadcast %79 : vector<4x8x1xf32> to vector<4x8x8xf32>
    %81 = arith.mulf %78, %80 : vector<4x8x8xf32>
    %82 = arith.truncf %81 : vector<4x8x8xf32> to vector<4x8x8xbf16>
    %cst_21 = arith.constant 0.000000e+00 : f32
    %83 = vector.broadcast %cst_21 : f32 to vector<8x32xf32>
    %84 = vector.extract_strided_slice %82 {offsets = [0, 0, 0], sizes = [1, 8, 8], strides = [1, 1, 1]} : vector<4x8x8xbf16> to vector<1x8x8xbf16>
    %85 = vector.shape_cast %84 : vector<1x8x8xbf16> to vector<8x8xbf16>
    %c0_22 = arith.constant 0 : index
    %c0_23 = arith.constant 0 : index
    %c0_24 = arith.constant 0 : index
    %86 = vector.load %arg7[%c0_22, %c0_23, %c0_24] : memref<4x8x32xbf16, #tpu.memory_space<vmem>>, vector<1x8x32xbf16>
    %87 = vector.shape_cast %86 : vector<1x8x32xbf16> to vector<8x32xbf16>
    %cst_25 = arith.constant dense<0.000000e+00> : vector<8x32xf32>
    %88 = tpu.matmul %85, %87, %cst_25 {dimension_numbers = #tpu.dot_dimension_numbers<[1], [0], [0], [1], [0, 0, 1, 1], [], []>} : vector<8x8xbf16>, vector<8x32xbf16>, vector<8x32xf32> -> vector<8x32xf32>
    %89 = arith.addf %83, %88 : vector<8x32xf32>
    %90 = vector.extract_strided_slice %82 {offsets = [1, 0, 0], sizes = [1, 8, 8], strides = [1, 1, 1]} : vector<4x8x8xbf16> to vector<1x8x8xbf16>
    %91 = vector.shape_cast %90 : vector<1x8x8xbf16> to vector<8x8xbf16>
    %c1 = arith.constant 1 : index
    %c0_26 = arith.constant 0 : index
    %c0_27 = arith.constant 0 : index
    %92 = vector.load %arg7[%c1, %c0_26, %c0_27] : memref<4x8x32xbf16, #tpu.memory_space<vmem>>, vector<1x8x32xbf16>
    %93 = vector.shape_cast %92 : vector<1x8x32xbf16> to vector<8x32xbf16>
    %cst_28 = arith.constant dense<0.000000e+00> : vector<8x32xf32>
    %94 = tpu.matmul %91, %93, %cst_28 {dimension_numbers = #tpu.dot_dimension_numbers<[1], [0], [0], [1], [0, 0, 1, 1], [], []>} : vector<8x8xbf16>, vector<8x32xbf16>, vector<8x32xf32> -> vector<8x32xf32>
    %95 = arith.addf %89, %94 : vector<8x32xf32>
    %96 = vector.extract_strided_slice %82 {offsets = [2, 0, 0], sizes = [1, 8, 8], strides = [1, 1, 1]} : vector<4x8x8xbf16> to vector<1x8x8xbf16>
    %97 = vector.shape_cast %96 : vector<1x8x8xbf16> to vector<8x8xbf16>
    %c2 = arith.constant 2 : index
    %c0_29 = arith.constant 0 : index
    %c0_30 = arith.constant 0 : index
    %98 = vector.load %arg7[%c2, %c0_29, %c0_30] : memref<4x8x32xbf16, #tpu.memory_space<vmem>>, vector<1x8x32xbf16>
    %99 = vector.shape_cast %98 : vector<1x8x32xbf16> to vector<8x32xbf16>
    %cst_31 = arith.constant dense<0.000000e+00> : vector<8x32xf32>
    %100 = tpu.matmul %97, %99, %cst_31 {dimension_numbers = #tpu.dot_dimension_numbers<[1], [0], [0], [1], [0, 0, 1, 1], [], []>} : vector<8x8xbf16>, vector<8x32xbf16>, vector<8x32xf32> -> vector<8x32xf32>
    %101 = arith.addf %95, %100 : vector<8x32xf32>
    %102 = vector.extract_strided_slice %82 {offsets = [3, 0, 0], sizes = [1, 8, 8], strides = [1, 1, 1]} : vector<4x8x8xbf16> to vector<1x8x8xbf16>
    %103 = vector.shape_cast %102 : vector<1x8x8xbf16> to vector<8x8xbf16>
    %c3 = arith.constant 3 : index
    %c0_32 = arith.constant 0 : index
    %c0_33 = arith.constant 0 : index
    %104 = vector.load %arg7[%c3, %c0_32, %c0_33] : memref<4x8x32xbf16, #tpu.memory_space<vmem>>, vector<1x8x32xbf16>
    %105 = vector.shape_cast %104 : vector<1x8x32xbf16> to vector<8x32xbf16>
    %cst_34 = arith.constant dense<0.000000e+00> : vector<8x32xf32>
    %106 = tpu.matmul %103, %105, %cst_34 {dimension_numbers = #tpu.dot_dimension_numbers<[1], [0], [0], [1], [0, 0, 1, 1], [], []>} : vector<8x8xbf16>, vector<8x32xbf16>, vector<8x32xf32> -> vector<8x32xf32>
    %107 = arith.addf %101, %106 : vector<8x32xf32>
    %c0_35 = arith.constant 0 : index
    %c0_36 = arith.constant 0 : index
    %108 = vector.load %arg8[%c0_35, %c0_36] : memref<1x32xf32, #tpu.memory_space<vmem>>, vector<1x32xf32>
    %109 = vector.broadcast %108 : vector<1x32xf32> to vector<8x32xf32>
    %110 = arith.addf %107, %109 : vector<8x32xf32>
    %111 = arith.addf %1, %110 : vector<8x32xf32>
    %c0_37 = arith.constant 0 : index
    %c0_38 = arith.constant 0 : index
    %112 = vector.load %arg9[%c0_37, %c0_38] : memref<1x32xf32, #tpu.memory_space<vmem>>, vector<1x32xf32>
    %c0_39 = arith.constant 0 : index
    %c0_40 = arith.constant 0 : index
    %113 = vector.load %arg10[%c0_39, %c0_40] : memref<1x32xf32, #tpu.memory_space<vmem>>, vector<1x32xf32>
    %cst_41 = arith.constant dense<0.000000e+00> : vector<8xf32>
    %114 = vector.multi_reduction <add>, %111, %cst_41 [1] : vector<8x32xf32> to vector<8xf32>
    %115 = vector.shape_cast %114 : vector<8xf32> to vector<8x1xf32>
    %cst_42 = arith.constant 3.200000e+01 : f32
    %116 = vector.broadcast %cst_42 : f32 to vector<8x1xf32>
    %117 = arith.divf %115, %116 : vector<8x1xf32>
    %118 = vector.broadcast %117 : vector<8x1xf32> to vector<8x32xf32>
    %119 = arith.subf %111, %118 : vector<8x32xf32>
    %120 = arith.mulf %119, %119 : vector<8x32xf32>
    %cst_43 = arith.constant dense<0.000000e+00> : vector<8xf32>
    %121 = vector.multi_reduction <add>, %120, %cst_43 [1] : vector<8x32xf32> to vector<8xf32>
    %122 = vector.shape_cast %121 : vector<8xf32> to vector<8x1xf32>
    %cst_44 = arith.constant 3.200000e+01 : f32
    %123 = vector.broadcast %cst_44 : f32 to vector<8x1xf32>
    %124 = arith.divf %122, %123 : vector<8x1xf32>
    %125 = vector.broadcast %117 : vector<8x1xf32> to vector<8x32xf32>
    %126 = arith.subf %111, %125 : vector<8x32xf32>
    %cst_45 = arith.constant 9.99999974E-6 : f32
    %127 = vector.broadcast %cst_45 : f32 to vector<8x1xf32>
    %128 = arith.addf %124, %127 : vector<8x1xf32>
    %129 = math.rsqrt %128 : vector<8x1xf32>
    %130 = vector.broadcast %129 : vector<8x1xf32> to vector<8x32xf32>
    %131 = arith.mulf %126, %130 : vector<8x32xf32>
    %132 = vector.broadcast %112 : vector<1x32xf32> to vector<8x32xf32>
    %133 = arith.mulf %131, %132 : vector<8x32xf32>
    %134 = vector.broadcast %113 : vector<1x32xf32> to vector<8x32xf32>
    %135 = arith.addf %133, %134 : vector<8x32xf32>
    %136 = arith.truncf %135 : vector<8x32xf32> to vector<8x32xbf16>
    %c0_46 = arith.constant 0 : index
    %c0_47 = arith.constant 0 : index
    %137 = vector.load %arg11[%c0_46, %c0_47] : memref<32x128xbf16, #tpu.memory_space<vmem>>, vector<32x128xbf16>
    %cst_48 = arith.constant dense<0.000000e+00> : vector<8x128xf32>
    %138 = tpu.matmul %136, %137, %cst_48 {dimension_numbers = #tpu.dot_dimension_numbers<[1], [0], [0], [1], [0, 0, 1, 1], [], []>} : vector<8x32xbf16>, vector<32x128xbf16>, vector<8x128xf32> -> vector<8x128xf32>
    %c0_49 = arith.constant 0 : index
    %c0_50 = arith.constant 0 : index
    %139 = vector.load %arg12[%c0_49, %c0_50] : memref<1x128xf32, #tpu.memory_space<vmem>>, vector<1x128xf32>
    %140 = vector.broadcast %139 : vector<1x128xf32> to vector<8x128xf32>
    %141 = arith.addf %138, %140 : vector<8x128xf32>
    %cst_51 = arith.constant 5.000000e-01 : f32
    %142 = vector.broadcast %cst_51 : f32 to vector<8x128xf32>
    %143 = arith.mulf %142, %141 : vector<8x128xf32>
    %cst_52 = arith.constant 4.471500e-02 : f32
    %144 = vector.broadcast %cst_52 : f32 to vector<8x128xf32>
    %145 = arith.mulf %144, %141 : vector<8x128xf32>
    %146 = arith.mulf %145, %141 : vector<8x128xf32>
    %147 = arith.mulf %146, %141 : vector<8x128xf32>
    %148 = arith.addf %141, %147 : vector<8x128xf32>
    %cst_53 = arith.constant 0.797884583 : f32
    %149 = vector.broadcast %cst_53 : f32 to vector<8x128xf32>
    %150 = arith.mulf %149, %148 : vector<8x128xf32>
    %151 = math.tanh %150 : vector<8x128xf32>
    %cst_54 = arith.constant 1.000000e+00 : f32
    %152 = vector.broadcast %cst_54 : f32 to vector<8x128xf32>
    %153 = arith.addf %152, %151 : vector<8x128xf32>
    %154 = arith.mulf %143, %153 : vector<8x128xf32>
    %155 = arith.truncf %154 : vector<8x128xf32> to vector<8x128xbf16>
    %c0_55 = arith.constant 0 : index
    %c0_56 = arith.constant 0 : index
    %156 = vector.load %arg13[%c0_55, %c0_56] : memref<128x32xbf16, #tpu.memory_space<vmem>>, vector<128x32xbf16>
    %cst_57 = arith.constant dense<0.000000e+00> : vector<8x32xf32>
    %157 = tpu.matmul %155, %156, %cst_57 {dimension_numbers = #tpu.dot_dimension_numbers<[1], [0], [0], [1], [0, 0, 1, 1], [], []>} : vector<8x128xbf16>, vector<128x32xbf16>, vector<8x32xf32> -> vector<8x32xf32>
    %c0_58 = arith.constant 0 : index
    %c0_59 = arith.constant 0 : index
    %158 = vector.load %arg14[%c0_58, %c0_59] : memref<1x32xf32, #tpu.memory_space<vmem>>, vector<1x32xf32>
    %159 = vector.broadcast %158 : vector<1x32xf32> to vector<8x32xf32>
    %160 = arith.addf %157, %159 : vector<8x32xf32>
    %161 = arith.addf %111, %160 : vector<8x32xf32>
    %c0_60 = arith.constant 0 : index
    %c0_61 = arith.constant 0 : index
    %c0_62 = arith.constant 0 : index
    %162 = vector.load %arg15[%c0_60, %c0_61, %c0_62] : memref<1x8x32xf32, #tpu.memory_space<vmem>>, vector<1x8x32xf32>
    %163 = vector.shape_cast %162 : vector<1x8x32xf32> to vector<8x32xf32>
    %164 = vector.shape_cast %161 : vector<8x32xf32> to vector<1x8x32xf32>
    tpu.vector_store %arg15[%c0_60, %c0_61, %c0_62], %164 {strides = array<i32>} : memref<1x8x32xf32, #tpu.memory_space<vmem>>, vector<1x8x32xf32>,
    return
  }
  func.func @transform_0(%arg0: i32) -> (i32, i32, i32) {
    %c0_i32 = arith.constant 0 : i32
    %c0_i32_0 = arith.constant 0 : i32
    %c0_i32_1 = arith.constant 0 : i32
    return %arg0, %c0_i32, %c0_i32_0 : i32, i32, i32
  }
  func.func @transform_1(%arg0: i32) -> (i32, i32) {
    %c0_i32 = arith.constant 0 : i32
    %c0_i32_0 = arith.constant 0 : i32
    %c0_i32_1 = arith.constant 0 : i32
    return %c0_i32, %c0_i32_0 : i32, i32
  }
  func.func @transform_2(%arg0: i32) -> (i32, i32) {
    %c0_i32 = arith.constant 0 : i32
    %c0_i32_0 = arith.constant 0 : i32
    %c0_i32_1 = arith.constant 0 : i32
    return %c0_i32, %c0_i32_0 : i32, i32
  }
  func.func @transform_3(%arg0: i32) -> (i32, i32) {
    %c0_i32 = arith.constant 0 : i32
    %c0_i32_0 = arith.constant 0 : i32
    %c0_i32_1 = arith.constant 0 : i32
    return %c0_i32, %c0_i32_0 : i32, i32
  }
  func.func @transform_4(%arg0: i32) -> (i32, i32) {
    %c0_i32 = arith.constant 0 : i32
    %c0_i32_0 = arith.constant 0 : i32
    %c0_i32_1 = arith.constant 0 : i32
    return %c0_i32, %c0_i32_0 : i32, i32
  }
  func.func @transform_5(%arg0: i32) -> (i32, i32) {
    %c0_i32 = arith.constant 0 : i32
    %c0_i32_0 = arith.constant 0 : i32
    %c0_i32_1 = arith.constant 0 : i32
    return %c0_i32, %c0_i32_0 : i32, i32
  }
  func.func @transform_6(%arg0: i32) -> (i32, i32, i32) {
    %c0_i32 = arith.constant 0 : i32
    %c0_i32_0 = arith.constant 0 : i32
    %c0_i32_1 = arith.constant 0 : i32
    %c0_i32_2 = arith.constant 0 : i32
    return %c0_i32, %c0_i32_0, %c0_i32_1 : i32, i32, i32
  }
  func.func @transform_7(%arg0: i32) -> (i32, i32) {
    %c0_i32 = arith.constant 0 : i32
    %c0_i32_0 = arith.constant 0 : i32
    %c0_i32_1 = arith.constant 0 : i32
    return %c0_i32, %c0_i32_0 : i32, i32
  }
  func.func @transform_8(%arg0: i32) -> (i32, i32) {
    %c0_i32 = arith.constant 0 : i32
    %c0_i32_0 = arith.constant 0 : i32
    %c0_i32_1 = arith.constant 0 : i32
    return %c0_i32, %c0_i32_0 : i32, i32
  }
  func.func @transform_9(%arg0: i32) -> (i32, i32) {
    %c0_i32 = arith.constant 0 : i32
    %c0_i32_0 = arith.constant 0 : i32
    %c0_i32_1 = arith.constant 0 : i32
    return %c0_i32, %c0_i32_0 : i32, i32
  }
  func.func @transform_10(%arg0: i32) -> (i32, i32) {
    %c0_i32 = arith.constant 0 : i32
    %c0_i32_0 = arith.constant 0 : i32
    %c0_i32_1 = arith.constant 0 : i32
    return %c0_i32, %c0_i32_0 : i32, i32
  }
  func.func @transform_11(%arg0: i32) -> (i32, i32) {
    %c0_i32 = arith.constant 0 : i32
    %c0_i32_0 = arith.constant 0 : i32
    %c0_i32_1 = arith.constant 0 : i32
    return %c0_i32, %c0_i32_0 : i32, i32
  }
  func.func @transform_12(%arg0: i32) -> (i32, i32) {
    %c0_i32 = arith.constant 0 : i32
    %c0_i32_0 = arith.constant 0 : i32
    %c0_i32_1 = arith.constant 0 : i32
    return %c0_i32, %c0_i32_0 : i32, i32
  }
  func.func @transform_13(%arg0: i32) -> (i32, i32) {
    %c0_i32 = arith.constant 0 : i32
    %c0_i32_0 = arith.constant 0 : i32
    %c0_i32_1 = arith.constant 0 : i32
    return %c0_i32, %c0_i32_0 : i32, i32
  }
  func.func @transform_14(%arg0: i32) -> (i32, i32, i32) {
    %c0_i32 = arith.constant 0 : i32
    %c0_i32_0 = arith.constant 0 : i32
    %c0_i32_1 = arith.constant 0 : i32
    return %arg0, %c0_i32, %c0_i32_0 : i32, i32, i32
  }
}

</mosaic_0001>

<llo_original>
// kernel: tpu_custom_call.1
$region0: #{tpu_custom_call.1}
  #allocation0 [shape = 'u32[]', space=smem, size = 0x4, offset = 0x4, fixed_abs, tag = 'smem constant byte address 0x4 - core index']
  #allocation1 [shape = 'u32[144,128]{1,0:T(1,128)}', space=vmem, size = 0x12000, scoped, tag = 'internal scratch']
  %s0 = inlined_call_operand.vmem [shape: f32[2,8,32], index: 0, kind: input, shape index: {}]
  %s1 = inlined_call_operand.vmem [shape: f32[8,8], index: 1, kind: input, shape index: {}]
  %s2 = inlined_call_operand.vmem [shape: f32[1,32], index: 2, kind: input, shape index: {}]
  %s3 = inlined_call_operand.vmem [shape: f32[1,32], index: 3, kind: input, shape index: {}]
  %s4 = inlined_call_operand.vmem [shape: bf16[32,96], index: 4, kind: input, shape index: {}]
  %s5 = inlined_call_operand.vmem [shape: f32[1,96], index: 5, kind: input, shape index: {}]
  %s6 = inlined_call_operand.vmem [shape: bf16[4,8,32], index: 6, kind: input, shape index: {}]
  %s7 = inlined_call_operand.vmem [shape: f32[1,32], index: 7, kind: input, shape index: {}]
  %s8 = inlined_call_operand.vmem [shape: f32[1,32], index: 8, kind: input, shape index: {}]
  %s9 = inlined_call_operand.vmem [shape: f32[1,32], index: 9, kind: input, shape index: {}]
  %s10 = inlined_call_operand.vmem [shape: bf16[32,128], index: 10, kind: input, shape index: {}]
  %s11 = inlined_call_operand.vmem [shape: f32[1,128], index: 11, kind: input, shape index: {}]
  %s12 = inlined_call_operand.vmem [shape: bf16[128,32], index: 12, kind: input, shape index: {}]
  %s13 = inlined_call_operand.vmem [shape: f32[1,32], index: 13, kind: input, shape index: {}]
  %s14 = inlined_call_operand.hbm [shape: f32[2,8,32], index: 14, kind: output, shape index: {}]
  %s15 = sld [smem:[#allocation0]]
  $region89: #{tpu_custom_call.1} parent=0
    _
  %s17 = ssub.s32 1, %s15
  %s18 = scalar_select 0, %s17, %s15
  $region1: #{tpu_custom_call.1} parent=0
    #allocation2 [shape = 'u8[8192]{0}', space=vmem, size = 0x2000, scoped, tag = 'output window, operand 0']
    #allocation3 [shape = 's32[2]{0}', space=sflag, size = 0x8, scoped, tag = 'scoped memory for tpu_custom_call.1']
    %19 = vsyncpa [#allocation3], 0
    %s20 = scalar_lea.sflag [#allocation3], 1
    %21 = vsyncpa %s20, 0
    loop: start=0, step=1, limit=4
    $region2: #{tpu_custom_call.1} parent=1 // loop_pre_header
      _
    $region3: #{tpu_custom_call.1} parent=1 // loop_header
      %s23 = sphi 0, %s27
      %p24 = scmp.ge.s32.totalorder %s23, 4
      %s33 = sphi 0, %s35
      %s36 = sphi 0, %s33
      %s37 = sphi 0, %s36
      %s53 = sphi 0, %s37
      %s57 = sphi 0, %s57
      %s59 = sphi 0, %s57
      %s60 = sphi 0, %s59
      %s74 = sphi 0, %s60
      %s78 = sphi 0, %s78
      %s80 = sphi 0, %s78
      %s81 = sphi 0, %s80
      %s95 = sphi 0, %s81
      %s99 = sphi 0, %s99
      %s101 = sphi 0, %s99
      %s102 = sphi 0, %s101
      %s116 = sphi 0, %s102
      %s120 = sphi 0, %s120
      %s122 = sphi 0, %s120
      %s123 = sphi 0, %s122
      %s137 = sphi 0, %s123
      %s141 = sphi 0, %s141
      %s143 = sphi 0, %s141
      %s144 = sphi 0, %s143
      %s158 = sphi 0, %s144
      %s162 = sphi 0, %s162
      %s164 = sphi 0, %s162
      %s165 = sphi 0, %s164
      %s179 = sphi 0, %s165
      %s183 = sphi 0, %s183
      %s185 = sphi 0, %s183
      %s186 = sphi 0, %s185
      %s200 = sphi 0, %s186
      %s204 = sphi 0, %s204
      %s206 = sphi 0, %s204
      %s207 = sphi 0, %s206
      %s221 = sphi 0, %s207
      %s225 = sphi 0, %s225
      %s227 = sphi 0, %s225
      %s228 = sphi 0, %s227
      %s242 = sphi 0, %s228
      %s246 = sphi 0, %s246
      %s248 = sphi 0, %s246
      %s249 = sphi 0, %s248
      %s263 = sphi 0, %s249
      %s267 = sphi 0, %s267
      %s269 = sphi 0, %s267
      %s270 = sphi 0, %s269
      %s284 = sphi 0, %s270
      %s288 = sphi 0, %s288
      %s290 = sphi 0, %s288
      %s291 = sphi 0, %s290
      %s305 = sphi 0, %s291
      %s309 = sphi 0, %s309
      %s311 = sphi 0, %s309
      %s312 = sphi 0, %s311
      %s326 = sphi 0, %s312
      %s332 = sphi 0, %s334
      %s335 = sphi 0, %s332
      %s336 = sphi 0, %s335
      %s352 = sphi 0, %s336
    $region4: #{tpu_custom_call.1} parent=1 // loop_header_branch
      %26 = sbr.rel (%p24) target = $region8
    $region5: #{tpu_custom_call.1} parent=1 // loop_body
      %s28 = ssub.s32 %s23, 1
      %s29 = ssub.s32 %s23, 2
      %s30 = sadd.s32 %s23, 1
      %s31 = ssub.s32 %s23, %s30
      %p32 = scmp.eq.s32.totalorder %s31, 0
      %s34 = sadd.s32 %s33, 1
      %s35 = scalar_select %p32, %s33, %s34
      %p38 = pneg %p32
      %p39 = scmp.eq.s32.totalorder %s23, 1
      %p40 = por %p38, %p39
      %p41 = scmp.ne.s32.totalorder %s33, %s36
      %p42 = scmp.eq.s32.totalorder %s23, 0
      %p43 = por %p41, %p42
      %p44 = scmp.ne.s32.totalorder %s33, %s36
      %p45 = scmp.eq.s32.totalorder %s28, 1
      %p46 = por %p44, %p45
      %p47 = scmp.ne.s32.totalorder %s36, %s37
      %p48 = scmp.eq.s32.totalorder %s28, 0
      %p49 = por %p47, %p48
      %p50 = scmp.ne.s32.totalorder %s36, %s37
      %p51 = scmp.eq.s32.totalorder %s29, 1
      %p52 = por %p50, %p51
      %p54 = scmp.ne.s32.totalorder %s37, %s53
      %p55 = scmp.eq.s32.totalorder %s29, 0
      %p56 = por %p54, %p55
      %s58 = sadd.s32 %s57, 1
      %p61 = scmp.eq.s32.totalorder %s23, 1
      %p62 = scmp.ne.s32.totalorder %s57, %s59
      %p63 = scmp.eq.s32.totalorder %s23, 0
      %p64 = por %p62, %p63
      %p65 = scmp.ne.s32.totalorder %s57, %s59
      %p66 = scmp.eq.s32.totalorder %s28, 1
      %p67 = por %p65, %p66
      %p68 = scmp.ne.s32.totalorder %s59, %s60
      %p69 = scmp.eq.s32.totalorder %s28, 0
      %p70 = por %p68, %p69
      %p71 = scmp.ne.s32.totalorder %s59, %s60
      %p72 = scmp.eq.s32.totalorder %s29, 1
      %p73 = por %p71, %p72
      %p75 = scmp.ne.s32.totalorder %s60, %s74
      %p76 = scmp.eq.s32.totalorder %s29, 0
      %p77 = por %p75, %p76
      %s79 = sadd.s32 %s78, 1
      %p82 = scmp.eq.s32.totalorder %s23, 1
      %p83 = scmp.ne.s32.totalorder %s78, %s80
      %p84 = scmp.eq.s32.totalorder %s23, 0
      %p85 = por %p83, %p84
      %p86 = scmp.ne.s32.totalorder %s78, %s80
      %p87 = scmp.eq.s32.totalorder %s28, 1
      %p88 = por %p86, %p87
      %p89 = scmp.ne.s32.totalorder %s80, %s81
      %p90 = scmp.eq.s32.totalorder %s28, 0
      %p91 = por %p89, %p90
      %p92 = scmp.ne.s32.totalorder %s80, %s81
      %p93 = scmp.eq.s32.totalorder %s29, 1
      %p94 = por %p92, %p93
      %p96 = scmp.ne.s32.totalorder %s81, %s95
      %p97 = scmp.eq.s32.totalorder %s29, 0
      %p98 = por %p96, %p97
      %s100 = sadd.s32 %s99, 1
      %p103 = scmp.eq.s32.totalorder %s23, 1
      %p104 = scmp.ne.s32.totalorder %s99, %s101
      %p105 = scmp.eq.s32.totalorder %s23, 0
      %p106 = por %p104, %p105
      %p107 = scmp.ne.s32.totalorder %s99, %s101
      %p108 = scmp.eq.s32.totalorder %s28, 1
      %p109 = por %p107, %p108
      %p110 = scmp.ne.s32.totalorder %s101, %s102
      %p111 = scmp.eq.s32.totalorder %s28, 0
      %p112 = por %p110, %p111
      %p113 = scmp.ne.s32.totalorder %s101, %s102
      %p114 = scmp.eq.s32.totalorder %s29, 1
      %p115 = por %p113, %p114
      %p117 = scmp.ne.s32.totalorder %s102, %s116
      %p118 = scmp.eq.s32.totalorder %s29, 0
      %p119 = por %p117, %p118
      %s121 = sadd.s32 %s120, 1
      %p124 = scmp.eq.s32.totalorder %s23, 1
      %p125 = scmp.ne.s32.totalorder %s120, %s122
      %p126 = scmp.eq.s32.totalorder %s23, 0
      %p127 = por %p125, %p126
      %p128 = scmp.ne.s32.totalorder %s120, %s122
      %p129 = scmp.eq.s32.totalorder %s28, 1
      %p130 = por %p128, %p129
      %p131 = scmp.ne.s32.totalorder %s122, %s123
      %p132 = scmp.eq.s32.totalorder %s28, 0
      %p133 = por %p131, %p132
      %p134 = scmp.ne.s32.totalorder %s122, %s123
      %p135 = scmp.eq.s32.totalorder %s29, 1
      %p136 = por %p134, %p135
      %p138 = scmp.ne.s32.totalorder %s123, %s137
      %p139 = scmp.eq.s32.totalorder %s29, 0
      %p140 = por %p138, %p139
      %s142 = sadd.s32 %s141, 1
      %p145 = scmp.eq.s32.totalorder %s23, 1
      %p146 = scmp.ne.s32.totalorder %s141, %s143
      %p147 = scmp.eq.s32.totalorder %s23, 0
      %p148 = por %p146, %p147
      %p149 = scmp.ne.s32.totalorder %s141, %s143
      %p150 = scmp.eq.s32.totalorder %s28, 1
      %p151 = por %p149, %p150
      %p152 = scmp.ne.s32.totalorder %s143, %s144
      %p153 = scmp.eq.s32.totalorder %s28, 0
      %p154 = por %p152, %p153
      %p155 = scmp.ne.s32.totalorder %s143, %s144
      %p156 = scmp.eq.s32.totalorder %s29, 1
      %p157 = por %p155, %p156
      %p159 = scmp.ne.s32.totalorder %s144, %s158
      %p160 = scmp.eq.s32.totalorder %s29, 0
      %p161 = por %p159, %p160
      %s163 = sadd.s32 %s162, 1
      %p166 = scmp.eq.s32.totalorder %s23, 1
      %p167 = scmp.ne.s32.totalorder %s162, %s164
      %p168 = scmp.eq.s32.totalorder %s23, 0
      %p169 = por %p167, %p168
      %p170 = scmp.ne.s32.totalorder %s162, %s164
      %p171 = scmp.eq.s32.totalorder %s28, 1
      %p172 = por %p170, %p171
      %p173 = scmp.ne.s32.totalorder %s164, %s165
      %p174 = scmp.eq.s32.totalorder %s28, 0
      %p175 = por %p173, %p174
      %p176 = scmp.ne.s32.totalorder %s164, %s165
      %p177 = scmp.eq.s32.totalorder %s29, 1
      %p178 = por %p176, %p177
      %p180 = scmp.ne.s32.totalorder %s165, %s179
      %p181 = scmp.eq.s32.totalorder %s29, 0
      %p182 = por %p180, %p181
      %s184 = sadd.s32 %s183, 1
      %p187 = scmp.eq.s32.totalorder %s23, 1
      %p188 = scmp.ne.s32.totalorder %s183, %s185
      %p189 = scmp.eq.s32.totalorder %s23, 0
      %p190 = por %p188, %p189
      %p191 = scmp.ne.s32.totalorder %s183, %s185
      %p192 = scmp.eq.s32.totalorder %s28, 1
      %p193 = por %p191, %p192
      %p194 = scmp.ne.s32.totalorder %s185, %s186
      %p195 = scmp.eq.s32.totalorder %s28, 0
      %p196 = por %p194, %p195
      %p197 = scmp.ne.s32.totalorder %s185, %s186
      %p198 = scmp.eq.s32.totalorder %s29, 1
      %p199 = por %p197, %p198
      %p201 = scmp.ne.s32.totalorder %s186, %s200
      %p202 = scmp.eq.s32.totalorder %s29, 0
      %p203 = por %p201, %p202
      %s205 = sadd.s32 %s204, 1
      %p208 = scmp.eq.s32.totalorder %s23, 1
      %p209 = scmp.ne.s32.totalorder %s204, %s206
      %p210 = scmp.eq.s32.totalorder %s23, 0
      %p211 = por %p209, %p210
      %p212 = scmp.ne.s32.totalorder %s204, %s206
      %p213 = scmp.eq.s32.totalorder %s28, 1
      %p214 = por %p212, %p213
      %p215 = scmp.ne.s32.totalorder %s206, %s207
      %p216 = scmp.eq.s32.totalorder %s28, 0
      %p217 = por %p215, %p216
      %p218 = scmp.ne.s32.totalorder %s206, %s207
      %p219 = scmp.eq.s32.totalorder %s29, 1
      %p220 = por %p218, %p219
      %p222 = scmp.ne.s32.totalorder %s207, %s221
      %p223 = scmp.eq.s32.totalorder %s29, 0
      %p224 = por %p222, %p223
      %s226 = sadd.s32 %s225, 1
      %p229 = scmp.eq.s32.totalorder %s23, 1
      %p230 = scmp.ne.s32.totalorder %s225, %s227
      %p231 = scmp.eq.s32.totalorder %s23, 0
      %p232 = por %p230, %p231
      %p233 = scmp.ne.s32.totalorder %s225, %s227
      %p234 = scmp.eq.s32.totalorder %s28, 1
      %p235 = por %p233, %p234
      %p236 = scmp.ne.s32.totalorder %s227, %s228
      %p237 = scmp.eq.s32.totalorder %s28, 0
      %p238 = por %p236, %p237
      %p239 = scmp.ne.s32.totalorder %s227, %s228
      %p240 = scmp.eq.s32.totalorder %s29, 1
      %p241 = por %p239, %p240
      %p243 = scmp.ne.s32.totalorder %s228, %s242
      %p244 = scmp.eq.s32.totalorder %s29, 0
      %p245 = por %p243, %p244
      %s247 = sadd.s32 %s246, 1
      %p250 = scmp.eq.s32.totalorder %s23, 1
      %p251 = scmp.ne.s32.totalorder %s246, %s248
      %p252 = scmp.eq.s32.totalorder %s23, 0
      %p253 = por %p251, %p252
      %p254 = scmp.ne.s32.totalorder %s246, %s248
      %p255 = scmp.eq.s32.totalorder %s28, 1
      %p256 = por %p254, %p255
      %p257 = scmp.ne.s32.totalorder %s248, %s249
      %p258 = scmp.eq.s32.totalorder %s28, 0
      %p259 = por %p257, %p258
      %p260 = scmp.ne.s32.totalorder %s248, %s249
      %p261 = scmp.eq.s32.totalorder %s29, 1
      %p262 = por %p260, %p261
      %p264 = scmp.ne.s32.totalorder %s249, %s263
      %p265 = scmp.eq.s32.totalorder %s29, 0
      %p266 = por %p264, %p265
      %s268 = sadd.s32 %s267, 1
      %p271 = scmp.eq.s32.totalorder %s23, 1
      %p272 = scmp.ne.s32.totalorder %s267, %s269
      %p273 = scmp.eq.s32.totalorder %s23, 0
      %p274 = por %p272, %p273
      %p275 = scmp.ne.s32.totalorder %s267, %s269
      %p276 = scmp.eq.s32.totalorder %s28, 1
      %p277 = por %p275, %p276
      %p278 = scmp.ne.s32.totalorder %s269, %s270
      %p279 = scmp.eq.s32.totalorder %s28, 0
      %p280 = por %p278, %p279
      %p281 = scmp.ne.s32.totalorder %s269, %s270
      %p282 = scmp.eq.s32.totalorder %s29, 1
      %p283 = por %p281, %p282
      %p285 = scmp.ne.s32.totalorder %s270, %s284
      %p286 = scmp.eq.s32.totalorder %s29, 0
      %p287 = por %p285, %p286
      %s289 = sadd.s32 %s288, 1
      %p292 = scmp.eq.s32.totalorder %s23, 1
      %p293 = scmp.ne.s32.totalorder %s288, %s290
      %p294 = scmp.eq.s32.totalorder %s23, 0
      %p295 = por %p293, %p294
      %p296 = scmp.ne.s32.totalorder %s288, %s290
      %p297 = scmp.eq.s32.totalorder %s28, 1
      %p298 = por %p296, %p297
      %p299 = scmp.ne.s32.totalorder %s290, %s291
      %p300 = scmp.eq.s32.totalorder %s28, 0
      %p301 = por %p299, %p300
      %p302 = scmp.ne.s32.totalorder %s290, %s291
      %p303 = scmp.eq.s32.totalorder %s29, 1
      %p304 = por %p302, %p303
      %p306 = scmp.ne.s32.totalorder %s291, %s305
      %p307 = scmp.eq.s32.totalorder %s29, 0
      %p308 = por %p306, %p307
      %s310 = sadd.s32 %s309, 1
      %p313 = scmp.eq.s32.totalorder %s23, 1
      %p314 = scmp.ne.s32.totalorder %s309, %s311
      %p315 = scmp.eq.s32.totalorder %s23, 0
      %p316 = por %p314, %p315
      %p317 = scmp.ne.s32.totalorder %s309, %s311
      %p318 = scmp.eq.s32.totalorder %s28, 1
      %p319 = por %p317, %p318
      %p320 = scmp.ne.s32.totalorder %s311, %s312
      %p321 = scmp.eq.s32.totalorder %s28, 0
      %p322 = por %p320, %p321
      %p323 = scmp.ne.s32.totalorder %s311, %s312
      %p324 = scmp.eq.s32.totalorder %s29, 1
      %p325 = por %p323, %p324
      %p327 = scmp.ne.s32.totalorder %s312, %s326
      %p328 = scmp.eq.s32.totalorder %s29, 0
      %p329 = por %p327, %p328
      %s330 = ssub.s32 %s23, %s30
      %p331 = scmp.eq.s32.totalorder %s330, 0
      %s333 = sadd.s32 %s332, 1
      %s334 = scalar_select %p331, %s332, %s333
      %p337 = pneg %p331
      %p338 = scmp.eq.s32.totalorder %s23, 1
      %p339 = por %p337, %p338
      %p340 = scmp.ne.s32.totalorder %s332, %s335
      %p341 = scmp.eq.s32.totalorder %s23, 0
      %p342 = por %p340, %p341
      %p343 = scmp.ne.s32.totalorder %s332, %s335
      %p344 = scmp.eq.s32.totalorder %s28, 1
      %p345 = por %p343, %p344
      %p346 = scmp.ne.s32.totalorder %s335, %s336
      %p347 = scmp.eq.s32.totalorder %s28, 0
      %p348 = por %p346, %p347
      %p349 = scmp.ne.s32.totalorder %s335, %s336
      %p350 = scmp.eq.s32.totalorder %s29, 1
      %p351 = por %p349, %p350
      %p353 = scmp.ne.s32.totalorder %s336, %s352
      %p354 = scmp.eq.s32.totalorder %s29, 0
      %p355 = por %p353, %p354
      %p356 = scmp.le.s32.totalorder 1, %s23
      %p357 = scmp.lt.s32.totalorder %s23, 3
      %p358 = pnand %p356, %p357
      %p359 = pneg %p358
      // Predicated region
      $region9: #{tpu_custom_call.1} parent=5 // pred_check
        _
      $region10: #{tpu_custom_call.1} parent=5 // pred_check_branch
        %361 = sbr.rel (%p358) target = $region12
      $region11: #{tpu_custom_call.1} parent=5 // pred_region
        %s362 = ssub.s32 %s23, 1
        // Predicated region
        $region13: #{tpu_custom_call.1} parent=11 // pred_check
          %p363 = pneg %p70
        $region14: #{tpu_custom_call.1} parent=11 // pred_check_branch
          %365 = sbr.rel (%p363) target = $region16
        $region15: #{tpu_custom_call.1} parent=11 // pred_region
          _
        $region16: #{tpu_custom_call.1} parent=11 // pred_fallthru
          _
        // Predicated region
        $region17: #{tpu_custom_call.1} parent=11 // pred_check
          %p366 = pneg %p91
        $region18: #{tpu_custom_call.1} parent=11 // pred_check_branch
          %368 = sbr.rel (%p366) target = $region20
        $region19: #{tpu_custom_call.1} parent=11 // pred_region
          _
        $region20: #{tpu_custom_call.1} parent=11 // pred_fallthru
          _
        // Predicated region
        $region21: #{tpu_custom_call.1} parent=11 // pred_check
          %p369 = pneg %p112
        $region22: #{tpu_custom_call.1} parent=11 // pred_check_branch
          %371 = sbr.rel (%p369) target = $region24
        $region23: #{tpu_custom_call.1} parent=11 // pred_region
          _
        $region24: #{tpu_custom_call.1} parent=11 // pred_fallthru
          _
        // Predicated region
        $region25: #{tpu_custom_call.1} parent=11 // pred_check
          %p372 = pneg %p133
        $region26: #{tpu_custom_call.1} parent=11 // pred_check_branch
          %374 = sbr.rel (%p372) target = $region28
        $region27: #{tpu_custom_call.1} parent=11 // pred_region
          _
        $region28: #{tpu_custom_call.1} parent=11 // pred_fallthru
          _
        // Predicated region
        $region29: #{tpu_custom_call.1} parent=11 // pred_check
          %p375 = pneg %p154
        $region30: #{tpu_custom_call.1} parent=11 // pred_check_branch
          %377 = sbr.rel (%p375) target = $region32
        $region31: #{tpu_custom_call.1} parent=11 // pred_region
          _
        $region32: #{tpu_custom_call.1} parent=11 // pred_fallthru
          _
        // Predicated region
        $region33: #{tpu_custom_call.1} parent=11 // pred_check
          %p378 = pneg %p175
        $region34: #{tpu_custom_call.1} parent=11 // pred_check_branch
          %380 = sbr.rel (%p378) target = $region36
        $region35: #{tpu_custom_call.1} parent=11 // pred_region
          _
        $region36: #{tpu_custom_call.1} parent=11 // pred_fallthru
          _
        // Predicated region
        $region37: #{tpu_custom_call.1} parent=11 // pred_check
          %p381 = pneg %p196
        $region38: #{tpu_custom_call.1} parent=11 // pred_check_branch
          %383 = sbr.rel (%p381) target = $region40
        $region39: #{tpu_custom_call.1} parent=11 // pred_region
          _
        $region40: #{tpu_custom_call.1} parent=11 // pred_fallthru
          _
        // Predicated region
        $region41: #{tpu_custom_call.1} parent=11 // pred_check
          %p384 = pneg %p217
        $region42: #{tpu_custom_call.1} parent=11 // pred_check_branch
          %386 = sbr.rel (%p384) target = $region44
        $region43: #{tpu_custom_call.1} parent=11 // pred_region
          _
        $region44: #{tpu_custom_call.1} parent=11 // pred_fallthru
          _
        // Predicated region
        $region45: #{tpu_custom_call.1} parent=11 // pred_check
          %p387 = pneg %p238
        $region46: #{tpu_custom_call.1} parent=11 // pred_check_branch
          %389 = sbr.rel (%p387) target = $region48
        $region47: #{tpu_custom_call.1} parent=11 // pred_region
          _
        $region48: #{tpu_custom_call.1} parent=11 // pred_fallthru
          _
        // Predicated region
        $region49: #{tpu_custom_call.1} parent=11 // pred_check
          %p390 = pneg %p259
        $region50: #{tpu_custom_call.1} parent=11 // pred_check_branch
          %392 = sbr.rel (%p390) target = $region52
        $region51: #{tpu_custom_call.1} parent=11 // pred_region
          _
        $region52: #{tpu_custom_call.1} parent=11 // pred_fallthru
          _
        // Predicated region
        $region53: #{tpu_custom_call.1} parent=11 // pred_check
          %p393 = pneg %p280
        $region54: #{tpu_custom_call.1} parent=11 // pred_check_branch
          %395 = sbr.rel (%p393) target = $region56
        $region55: #{tpu_custom_call.1} parent=11 // pred_region
          _
        $region56: #{tpu_custom_call.1} parent=11 // pred_fallthru
          _
        // Predicated region
        $region57: #{tpu_custom_call.1} parent=11 // pred_check
          %p396 = pneg %p301
        $region58: #{tpu_custom_call.1} parent=11 // pred_check_branch
          %398 = sbr.rel (%p396) target = $region60
        $region59: #{tpu_custom_call.1} parent=11 // pred_region
          _
        $region60: #{tpu_custom_call.1} parent=11 // pred_fallthru
          _
        // Predicated region
        $region61: #{tpu_custom_call.1} parent=11 // pred_check
          %p399 = pneg %p322
        $region62: #{tpu_custom_call.1} parent=11 // pred_check_branch
          %401 = sbr.rel (%p399) target = $region64
        $region63: #{tpu_custom_call.1} parent=11 // pred_region
          _
        $region64: #{tpu_custom_call.1} parent=11 // pred_fallthru
          _
      $region12: #{tpu_custom_call.1} parent=5 // pred_fallthru
        _
      %p402 = scmp.lt.s32.totalorder %s23, 2
      // Predicated region
      $region65: #{tpu_custom_call.1} parent=5 // pred_check
        %p403 = pneg %p402
      $region66: #{tpu_custom_call.1} parent=5 // pred_check_branch
        %405 = sbr.rel (%p403) target = $region68
      $region67: #{tpu_custom_call.1} parent=5 // pred_region
        // Predicated region
        $region69: #{tpu_custom_call.1} parent=67 // pred_check
          %p406 = pneg %p43
        $region70: #{tpu_custom_call.1} parent=67 // pred_check_branch
          %408 = sbr.rel (%p406) target = $region72
        $region71: #{tpu_custom_call.1} parent=67 // pred_region
          %p409 = scmp.lt.s32.totalorder %s23, 1
          %s410 = scalar_select %p409, %s23, 1
          %s411 = smul.addr %s410, 8
          %s412 = scalar_lea.vmem %s0, %s411
        $region72: #{tpu_custom_call.1} parent=67 // pred_fallthru
          _
      $region68: #{tpu_custom_call.1} parent=5 // pred_fallthru
        _
      %p413 = scmp.le.s32.totalorder 1, %s23
      %p414 = scmp.lt.s32.totalorder %s23, 3
      %p415 = pnand %p413, %p414
      %p416 = pneg %p415
      // Predicated region
      $region73: #{tpu_custom_call.1} parent=5 // pred_check
        _
      $region74: #{tpu_custom_call.1} parent=5 // pred_check_branch
        %418 = sbr.rel (%p415) target = $region76
      $region75: #{tpu_custom_call.1} parent=5 // pred_region
        %s419 = ssub.s32 %s23, 1
        %p420 = scmp.lt.s32.totalorder %s28, 1
        %s421 = scalar_select %p420, %s28, 1
        %s422 = smul.addr %s421, 8
        %s423 = scalar_lea.vmem %s0, %s422
        %p424 = pneg %p49
        %p425 = pneg %p46
        %p426 = pneg %p70
        %p427 = pneg %p67
        %p428 = pneg %p91
        %p429 = pneg %p88
        %p430 = pneg %p112
        %p431 = pneg %p109
        %p432 = pneg %p133
        %p433 = pneg %p130
        %p434 = pneg %p154
        %p435 = pneg %p151
        %p436 = pneg %p175
        %p437 = pneg %p172
        %p438 = pneg %p196
        %p439 = pneg %p193
        %p440 = pneg %p217
        %p441 = pneg %p214
        %p442 = pneg %p238
        %p443 = pneg %p235
        %p444 = pneg %p259
        %p445 = pneg %p256
        %p446 = pneg %p280
        %p447 = pneg %p277
        %p448 = pneg %p301
        %p449 = pneg %p298
        %p450 = pneg %p322
        %p451 = pneg %p319
        %p452 = pneg %p348
        %p453 = pneg %p345
        %s454 = sand.u32 %s335, 1
        %s455 = scalar_lea.sflag [#allocation3], %s454
        %s456 = sand.u32 %s335, 1
        %s457 = smul.addr %s456, 8
        %s458 = scalar_lea.vmem [#allocation2], %s457
        %p459 = scmp.lt.s32.totalorder %s28, 1
        %s460 = scalar_select %p459, %s28, 1
        %s461 = smul.addr %s460, 8
        %s462 = scalar_lea.vmem %s0, %s461
        %v464 = vld [vmem:[%s462] sm:$0xff]
        %v465 = vld [vmem:[%s2] sm:$0x1]
        %v466 = vld [vmem:[%s3] sm:$0x1]
        %vm467 = vcmask 261120
        %v468 = vsel %vm467, %v464, 0.0
        %469 = vadd.xlane.f32.xlu0 %v468
        %v470 = vpop.xlane.xlu0 %469
        %v471 = vrcp.pop 32.0
        %v472 = vmul.f32 %v470, %v471
        %v473 = vsub.f32 %v464, %v472
        %v474 = vmul.f32 %v473, %v473
        %v475 = vsel %vm467, %v474, 0.0
        %476 = vadd.xlane.f32.xlu0 %v475
        %v477 = vpop.xlane.xlu0 %476
        %v478 = vmul.f32 %v477, %v471
        %v479 = vadd.f32 %v478, 1e-05
        %v480 = vrsqrt.pop %v479
        %v481 = vmul.f32 %v473, %v480
        %v483 = vlaneseq
        %v484 = vshrl.u32 %v483, 7
        %v485 = vsub.s32 0, %v484
        %v486 = vrot.slane %v465, %v485
        %v488 = vmul.f32 %v481, %v486
        %v490 = vlaneseq
        %v491 = vshrl.u32 %v490, 7
        %v492 = vsub.s32 0, %v491
        %v493 = vrot.slane %v466, %v492
        %v495 = vadd.f32 %v488, %v493
        %v496 = vpack.c.bf16 %v495, %v495
        %v497 = vld [vmem:[%s4] sm:$0xf]
        %v498 = vld [vmem:[%s4 + $0x4] sm:$0xf]
        %v499 = vld [vmem:[%s4 + $0x8] sm:$0xf]
        %v500 = vld [vmem:[%s4 + $0xc] sm:$0xf]
        %v501 = vld [vmem:[%s5] sm:$0x1]
        %v503 = vlaneseq
        %v504 = vshrl.u32 %v503, 7
        %v505 = vsub.s32 0, %v504
        %v506 = vrot.slane %v501, %v505
        %v512 = vunpack.c.l.b16 %v497
        %v513 = vunpack.c.l.b16 %v498
        %v514 = vunpack.c.l.b16 %v499
        %v515 = vunpack.c.l.b16 %v500
        %v516 = vpack.c.b16 %v513, %v512
        %v517 = vpack.c.b16 %v515, %v514
        %v521 = vsel %vm467, %v496, 0
        %523 = vmatprep.subr.bf16.mxu0 0
        %524 = vmatpush1.bf16.msra.mxu0 %v516
        %525 = vmatprep.subr.bf16.mxu0 0
        %526 = vmatpush1.bf16.msra.mxu0 %v517
        %527 = vmatprep.subr.bf16.mxu0 0
        %528 = vmatpush1.bf16.msra.mxu0 0
        %529 = vmatprep.subr.bf16.mxu0 0
        %530 = vmatpush1.bf16.msra.mxu0 0
        %531 = vmatprep.subr.bf16.mxu0 0
        %532 = vmatpush1.bf16.msra.mxu0 0
        %533 = vmatprep.subr.bf16.mxu0 0
        %534 = vmatpush1.bf16.msra.mxu0 0
        %535 = vmatprep.subr.bf16.mxu0 0
        %536 = vmatpush1.bf16.msra.mxu0 0
        %537 = vmatprep.subr.bf16.mxu0 0
        %538 = vmatpush1.bf16.msra.mxu0 0
        %539 = vmatprep.subr.bf16.mxu0 0
        %540 = vmatpush1.bf16.msra.mxu0 0
        %541 = vmatprep.subr.bf16.mxu0 0
        %542 = vmatpush1.bf16.msra.mxu0 0
        %543 = vmatprep.subr.bf16.mxu0 0
        %544 = vmatpush1.bf16.msra.mxu0 0
        %545 = vmatprep.subr.bf16.mxu0 0
        %546 = vmatpush1.bf16.msra.mxu0 0
        %547 = vmatprep.subr.bf16.mxu0 0
        %548 = vmatpush1.bf16.msra.mxu0 0
        %549 = vmatprep.subr.bf16.mxu0 0
        %550 = vmatpush1.bf16.msra.mxu0 0
        %551 = vmatprep.subr.bf16.mxu0 0
        %552 = vmatpush1.bf16.msra.mxu0 0
        %553 = vmatprep.subr.bf16.mxu0 0
        %554 = vmatpush1.bf16.msra.mxu0 0
        %555 = vmatprep.mubr.bf16.mxu0 0
        %556 = vmatmul.mubr.bf16.gmra.mrb[0].mxu0 %v521
        %v557 = vpop.f32.mrb[0].mxu0
        %v558 = vadd.f32 %v506, %v557
        %v559 = vpop.f32.mrb[0].mxu0
        %v560 = vpop.f32.mrb[0].mxu0
        %v561 = vpop.f32.mrb[0].mxu0
        %562 = vdwg.mxu0
        %564 = vrot.lane.b32.xlu0 %v558, 120
        %v565 = vpop.permute.xlu0 %564
        %567 = vrot.lane.b32.xlu0 %v558, 112
        %v568 = vpop.permute.xlu0 %567
        %570 = vrot.lane.b32.xlu0 %v558, 104
        %v571 = vpop.permute.xlu0 %570
        %v573 = vpack.c.bf16 %v558, %v558
        %v574 = vpack.c.bf16 %v565, %v565
        %v575 = vpack.c.bf16 %v568, %v568
        %v576 = vpack.c.bf16 %v571, %v571
        %v577 = vld [vmem:[%s1] sm:$0xff]
        %579 = vrot.lane.b32.xlu0 %v573, 96
        %v580 = vpop.permute.xlu0 %579
        %vm581 = vcmask 64512
        %v583 = vsel %vm581, %v573, 0
        %v586 = vsel %vm581, %v580, 0
        %588 = vmatprep.subr.bf16.mxu0 0
        %589 = vmatpush1.bf16.xpose.msra.mxu0 %v586
        %590 = vmatprep.subr.bf16.mxu0 0
        %591 = vmatpush1.bf16.xpose.msra.mxu0 0
        %592 = vmatprep.subr.bf16.mxu0 0
        %593 = vmatpush1.bf16.xpose.msra.mxu0 0
        %594 = vmatprep.subr.bf16.mxu0 0
        %595 = vmatpush1.bf16.xpose.msra.mxu0 0
        %596 = vmatprep.subr.bf16.mxu0 0
        %597 = vmatpush1.bf16.xpose.msra.mxu0 0
        %598 = vmatprep.subr.bf16.mxu0 0
        %599 = vmatpush1.bf16.xpose.msra.mxu0 0
        %600 = vmatprep.subr.bf16.mxu0 0
        %601 = vmatpush1.bf16.xpose.msra.mxu0 0
        %602 = vmatprep.subr.bf16.mxu0 0
        %603 = vmatpush1.bf16.xpose.msra.mxu0 0
        %604 = vmatprep.subr.bf16.mxu0 0
        %605 = vmatpush1.bf16.xpose.msra.mxu0 0
        %606 = vmatprep.subr.bf16.mxu0 0
        %607 = vmatpush1.bf16.xpose.msra.mxu0 0
        %608 = vmatprep.subr.bf16.mxu0 0
        %609 = vmatpush1.bf16.xpose.msra.mxu0 0
        %610 = vmatprep.subr.bf16.mxu0 0
        %611 = vmatpush1.bf16.xpose.msra.mxu0 0
        %612 = vmatprep.subr.bf16.mxu0 0
        %613 = vmatpush1.bf16.xpose.msra.mxu0 0
        %614 = vmatprep.subr.bf16.mxu0 0
        %615 = vmatpush1.bf16.xpose.msra.mxu0 0
        %616 = vmatprep.subr.bf16.mxu0 0
        %617 = vmatpush1.bf16.xpose.msra.mxu0 0
        %618 = vmatprep.subr.bf16.mxu0 0
        %619 = vmatpush1.bf16.xpose.msra.mxu0 0
        %620 = vmatprep.mubr.bf16.mxu0 0
        %621 = vmatmul.mubr.bf16.gmra.mrb[0].mxu0 %v583
        %v622 = vpop.f32.mrb[0].mxu0
        %v623 = vadd.f32 %v577, %v622
        %v624 = vpop.f32.mrb[0].mxu0
        %v625 = vpop.f32.mrb[0].mxu0
        %v626 = vpop.f32.mrb[0].mxu0
        %627 = vdwg.mxu0
        %629 = vrot.lane.b32.xlu0 %v574, 96
        %v630 = vpop.permute.xlu0 %629
        %v632 = vsel %vm581, %v574, 0
        %v635 = vsel %vm581, %v630, 0
        %637 = vmatprep.subr.bf16.mxu0 0
        %638 = vmatpush1.bf16.xpose.msra.mxu0 %v635
        %639 = vmatprep.subr.bf16.mxu0 0
        %640 = vmatpush1.bf16.xpose.msra.mxu0 0
        %641 = vmatprep.subr.bf16.mxu0 0
        %642 = vmatpush1.bf16.xpose.msra.mxu0 0
        %643 = vmatprep.subr.bf16.mxu0 0
        %644 = vmatpush1.bf16.xpose.msra.mxu0 0
        %645 = vmatprep.subr.bf16.mxu0 0
        %646 = vmatpush1.bf16.xpose.msra.mxu0 0
        %647 = vmatprep.subr.bf16.mxu0 0
        %648 = vmatpush1.bf16.xpose.msra.mxu0 0
        %649 = vmatprep.subr.bf16.mxu0 0
        %650 = vmatpush1.bf16.xpose.msra.mxu0 0
        %651 = vmatprep.subr.bf16.mxu0 0
        %652 = vmatpush1.bf16.xpose.msra.mxu0 0
        %653 = vmatprep.subr.bf16.mxu0 0
        %654 = vmatpush1.bf16.xpose.msra.mxu0 0
        %655 = vmatprep.subr.bf16.mxu0 0
        %656 = vmatpush1.bf16.xpose.msra.mxu0 0
        %657 = vmatprep.subr.bf16.mxu0 0
        %658 = vmatpush1.bf16.xpose.msra.mxu0 0
        %659 = vmatprep.subr.bf16.mxu0 0
        %660 = vmatpush1.bf16.xpose.msra.mxu0 0
        %661 = vmatprep.subr.bf16.mxu0 0
        %662 = vmatpush1.bf16.xpose.msra.mxu0 0
        %663 = vmatprep.subr.bf16.mxu0 0
        %664 = vmatpush1.bf16.xpose.msra.mxu0 0
        %665 = vmatprep.subr.bf16.mxu0 0
        %666 = vmatpush1.bf16.xpose.msra.mxu0 0
        %667 = vmatprep.subr.bf16.mxu0 0
        %668 = vmatpush1.bf16.xpose.msra.mxu0 0
        %669 = vmatprep.mubr.bf16.mxu0 0
        %670 = vmatmul.mubr.bf16.gmra.mrb[0].mxu0 %v632
        %v671 = vpop.f32.mrb[0].mxu0
        %v672 = vadd.f32 %v577, %v671
        %v673 = vpop.f32.mrb[0].mxu0
        %v674 = vpop.f32.mrb[0].mxu0
        %v675 = vpop.f32.mrb[0].mxu0
        %676 = vdwg.mxu0
        %678 = vrot.lane.b32.xlu0 %v575, 96
        %v679 = vpop.permute.xlu0 %678
        %v681 = vsel %vm581, %v575, 0
        %v684 = vsel %vm581, %v679, 0
        %686 = vmatprep.subr.bf16.mxu0 0
        %687 = vmatpush1.bf16.xpose.msra.mxu0 %v684
        %688 = vmatprep.subr.bf16.mxu0 0
        %689 = vmatpush1.bf16.xpose.msra.mxu0 0
        %690 = vmatprep.subr.bf16.mxu0 0
        %691 = vmatpush1.bf16.xpose.msra.mxu0 0
        %692 = vmatprep.subr.bf16.mxu0 0
        %693 = vmatpush1.bf16.xpose.msra.mxu0 0
        %694 = vmatprep.subr.bf16.mxu0 0
        %695 = vmatpush1.bf16.xpose.msra.mxu0 0
        %696 = vmatprep.subr.bf16.mxu0 0
        %697 = vmatpush1.bf16.xpose.msra.mxu0 0
        %698 = vmatprep.subr.bf16.mxu0 0
        %699 = vmatpush1.bf16.xpose.msra.mxu0 0
        %700 = vmatprep.subr.bf16.mxu0 0
        %701 = vmatpush1.bf16.xpose.msra.mxu0 0
        %702 = vmatprep.subr.bf16.mxu0 0
        %703 = vmatpush1.bf16.xpose.msra.mxu0 0
        %704 = vmatprep.subr.bf16.mxu0 0
        %705 = vmatpush1.bf16.xpose.msra.mxu0 0
        %706 = vmatprep.subr.bf16.mxu0 0
        %707 = vmatpush1.bf16.xpose.msra.mxu0 0
        %708 = vmatprep.subr.bf16.mxu0 0
        %709 = vmatpush1.bf16.xpose.msra.mxu0 0
        %710 = vmatprep.subr.bf16.mxu0 0
        %711 = vmatpush1.bf16.xpose.msra.mxu0 0
        %712 = vmatprep.subr.bf16.mxu0 0
        %713 = vmatpush1.bf16.xpose.msra.mxu0 0
        %714 = vmatprep.subr.bf16.mxu0 0
        %715 = vmatpush1.bf16.xpose.msra.mxu0 0
        %716 = vmatprep.subr.bf16.mxu0 0
        %717 = vmatpush1.bf16.xpose.msra.mxu0 0
        %718 = vmatprep.mubr.bf16.mxu0 0
        %719 = vmatmul.mubr.bf16.gmra.mrb[0].mxu0 %v681
        %v720 = vpop.f32.mrb[0].mxu0
        %v721 = vadd.f32 %v577, %v720
        %v722 = vpop.f32.mrb[0].mxu0
        %v723 = vpop.f32.mrb[0].mxu0
        %v724 = vpop.f32.mrb[0].mxu0
        %725 = vdwg.mxu0
        %727 = vrot.lane.b32.xlu0 %v576, 96
        %v728 = vpop.permute.xlu0 %727
        %v730 = vsel %vm581, %v576, 0
        %v733 = vsel %vm581, %v728, 0
        %735 = vmatprep.subr.bf16.mxu0 0
        %736 = vmatpush1.bf16.xpose.msra.mxu0 %v733
        %737 = vmatprep.subr.bf16.mxu0 0
        %738 = vmatpush1.bf16.xpose.msra.mxu0 0
        %739 = vmatprep.subr.bf16.mxu0 0
        %740 = vmatpush1.bf16.xpose.msra.mxu0 0
        %741 = vmatprep.subr.bf16.mxu0 0
        %742 = vmatpush1.bf16.xpose.msra.mxu0 0
        %743 = vmatprep.subr.bf16.mxu0 0
        %744 = vmatpush1.bf16.xpose.msra.mxu0 0
        %745 = vmatprep.subr.bf16.mxu0 0
        %746 = vmatpush1.bf16.xpose.msra.mxu0 0
        %747 = vmatprep.subr.bf16.mxu0 0
        %748 = vmatpush1.bf16.xpose.msra.mxu0 0
        %749 = vmatprep.subr.bf16.mxu0 0
        %750 = vmatpush1.bf16.xpose.msra.mxu0 0
        %751 = vmatprep.subr.bf16.mxu0 0
        %752 = vmatpush1.bf16.xpose.msra.mxu0 0
        %753 = vmatprep.subr.bf16.mxu0 0
        %754 = vmatpush1.bf16.xpose.msra.mxu0 0
        %755 = vmatprep.subr.bf16.mxu0 0
        %756 = vmatpush1.bf16.xpose.msra.mxu0 0
        %757 = vmatprep.subr.bf16.mxu0 0
        %758 = vmatpush1.bf16.xpose.msra.mxu0 0
        %759 = vmatprep.subr.bf16.mxu0 0
        %760 = vmatpush1.bf16.xpose.msra.mxu0 0
        %761 = vmatprep.subr.bf16.mxu0 0
        %762 = vmatpush1.bf16.xpose.msra.mxu0 0
        %763 = vmatprep.subr.bf16.mxu0 0
        %764 = vmatpush1.bf16.xpose.msra.mxu0 0
        %765 = vmatprep.subr.bf16.mxu0 0
        %766 = vmatpush1.bf16.xpose.msra.mxu0 0
        %767 = vmatprep.mubr.bf16.mxu0 0
        %768 = vmatmul.mubr.bf16.gmra.mrb[0].mxu0 %v730
        %v769 = vpop.f32.mrb[0].mxu0
        %v770 = vadd.f32 %v577, %v769
        %v771 = vpop.f32.mrb[0].mxu0
        %v772 = vpop.f32.mrb[0].mxu0
        %v773 = vpop.f32.mrb[0].mxu0
        %774 = vdwg.mxu0
        %v775 = vsel %vm581, %v623, -inf
        %776 = vmax.xlane.f32.xlu0 %v775
        %v777 = vpop.xlane.xlu0 %776
        %v778 = vsel %vm581, %v672, -inf
        %779 = vmax.xlane.f32.xlu0 %v778
        %v780 = vpop.xlane.xlu0 %779
        %v781 = vsel %vm581, %v721, -inf
        %782 = vmax.xlane.f32.xlu0 %v781
        %v783 = vpop.xlane.xlu0 %782
        %v784 = vsel %vm581, %v770, -inf
        %785 = vmax.xlane.f32.xlu0 %v784
        %v786 = vpop.xlane.xlu0 %785
        %v787 = vsub.f32 %v623, %v777
        %v788 = vsub.f32 %v672, %v780
        %v789 = vsub.f32 %v721, %v783
        %v790 = vsub.f32 %v770, %v786
        %v791 = vmul.f32 %v787, 1.442695
        %v792 = vpow.pop %v791
        %v793 = vmul.f32 %v788, 1.442695
        %v794 = vpow.pop %v793
        %v795 = vmul.f32 %v789, 1.442695
        %v796 = vpow.pop %v795
        %v797 = vmul.f32 %v790, 1.442695
        %v798 = vpow.pop %v797
        %v799 = vsel %vm581, %v792, 0.0
        %800 = vadd.xlane.f32.xlu0 %v799
        %v801 = vpop.xlane.xlu0 %800
        %v802 = vsel %vm581, %v794, 0.0
        %803 = vadd.xlane.f32.xlu0 %v802
        %v804 = vpop.xlane.xlu0 %803
        %v805 = vsel %vm581, %v796, 0.0
        %806 = vadd.xlane.f32.xlu0 %v805
        %v807 = vpop.xlane.xlu0 %806
        %v808 = vsel %vm581, %v798, 0.0
        %809 = vadd.xlane.f32.xlu0 %v808
        %v810 = vpop.xlane.xlu0 %809
        %v811 = vpack.c.bf16 %v792, %v792
        %v812 = vpack.c.bf16 %v794, %v794
        %v813 = vpack.c.bf16 %v796, %v796
        %v814 = vpack.c.bf16 %v798, %v798
        %815 = vrot.lane.b32.xlu0 %v573, 64
        %v816 = vpop.permute.xlu0 %815
        %v818 = vsel %vm581, %v811, 0
        %vm820 = vcmask 1043456
        %v822 = vsel %vm820, %v816, 0
        %824 = vmatprep.subr.bf16.mxu0 0
        %825 = vmatpush1.bf16.msra.mxu0 %v822
        %826 = vmatprep.subr.bf16.mxu0 0
        %827 = vmatpush1.bf16.msra.mxu0 0
        %828 = vmatprep.subr.bf16.mxu0 0
        %829 = vmatpush1.bf16.msra.mxu0 0
        %830 = vmatprep.subr.bf16.mxu0 0
        %831 = vmatpush1.bf16.msra.mxu0 0
        %832 = vmatprep.subr.bf16.mxu0 0
        %833 = vmatpush1.bf16.msra.mxu0 0
        %834 = vmatprep.subr.bf16.mxu0 0
        %835 = vmatpush1.bf16.msra.mxu0 0
        %836 = vmatprep.subr.bf16.mxu0 0
        %837 = vmatpush1.bf16.msra.mxu0 0
        %838 = vmatprep.subr.bf16.mxu0 0
        %839 = vmatpush1.bf16.msra.mxu0 0
        %840 = vmatprep.subr.bf16.mxu0 0
        %841 = vmatpush1.bf16.msra.mxu0 0
        %842 = vmatprep.subr.bf16.mxu0 0
        %843 = vmatpush1.bf16.msra.mxu0 0
        %844 = vmatprep.subr.bf16.mxu0 0
        %845 = vmatpush1.bf16.msra.mxu0 0
        %846 = vmatprep.subr.bf16.mxu0 0
        %847 = vmatpush1.bf16.msra.mxu0 0
        %848 = vmatprep.subr.bf16.mxu0 0
        %849 = vmatpush1.bf16.msra.mxu0 0
        %850 = vmatprep.subr.bf16.mxu0 0
        %851 = vmatpush1.bf16.msra.mxu0 0
        %852 = vmatprep.subr.bf16.mxu0 0
        %853 = vmatpush1.bf16.msra.mxu0 0
        %854 = vmatprep.subr.bf16.mxu0 0
        %855 = vmatpush1.bf16.msra.mxu0 0
        %856 = vmatprep.mubr.bf16.mxu0 0
        %857 = vmatmul.mubr.bf16.gmra.mrb[0].mxu0 %v818
        %v858 = vpop.f32.mrb[0].mxu0
        %v859 = vadd.f32 0.0, %v858
        %v860 = vpop.f32.mrb[0].mxu0
        %v861 = vpop.f32.mrb[0].mxu0
        %v862 = vpop.f32.mrb[0].mxu0
        %863 = vdwg.mxu0
        %864 = vrot.lane.b32.xlu0 %v574, 64
        %v865 = vpop.permute.xlu0 %864
        %v867 = vsel %vm581, %v812, 0
        %v870 = vsel %vm820, %v865, 0
        %872 = vmatprep.subr.bf16.mxu0 0
        %873 = vmatpush1.bf16.msra.mxu0 %v870
        %874 = vmatprep.subr.bf16.mxu0 0
        %875 = vmatpush1.bf16.msra.mxu0 0
        %876 = vmatprep.subr.bf16.mxu0 0
        %877 = vmatpush1.bf16.msra.mxu0 0
        %878 = vmatprep.subr.bf16.mxu0 0
        %879 = vmatpush1.bf16.msra.mxu0 0
        %880 = vmatprep.subr.bf16.mxu0 0
        %881 = vmatpush1.bf16.msra.mxu0 0
        %882 = vmatprep.subr.bf16.mxu0 0
        %883 = vmatpush1.bf16.msra.mxu0 0
        %884 = vmatprep.subr.bf16.mxu0 0
        %885 = vmatpush1.bf16.msra.mxu0 0
        %886 = vmatprep.subr.bf16.mxu0 0
        %887 = vmatpush1.bf16.msra.mxu0 0
        %888 = vmatprep.subr.bf16.mxu0 0
        %889 = vmatpush1.bf16.msra.mxu0 0
        %890 = vmatprep.subr.bf16.mxu0 0
        %891 = vmatpush1.bf16.msra.mxu0 0
        %892 = vmatprep.subr.bf16.mxu0 0
        %893 = vmatpush1.bf16.msra.mxu0 0
        %894 = vmatprep.subr.bf16.mxu0 0
        %895 = vmatpush1.bf16.msra.mxu0 0
        %896 = vmatprep.subr.bf16.mxu0 0
        %897 = vmatpush1.bf16.msra.mxu0 0
        %898 = vmatprep.subr.bf16.mxu0 0
        %899 = vmatpush1.bf16.msra.mxu0 0
        %900 = vmatprep.subr.bf16.mxu0 0
        %901 = vmatpush1.bf16.msra.mxu0 0
        %902 = vmatprep.subr.bf16.mxu0 0
        %903 = vmatpush1.bf16.msra.mxu0 0
        %904 = vmatprep.mubr.bf16.mxu0 0
        %905 = vmatmul.mubr.bf16.gmra.mrb[0].mxu0 %v867
        %v906 = vpop.f32.mrb[0].mxu0
        %v907 = vadd.f32 0.0, %v906
        %v908 = vpop.f32.mrb[0].mxu0
        %v909 = vpop.f32.mrb[0].mxu0
        %v910 = vpop.f32.mrb[0].mxu0
        %911 = vdwg.mxu0
        %912 = vrot.lane.b32.xlu0 %v575, 64
        %v913 = vpop.permute.xlu0 %912
        %v915 = vsel %vm581, %v813, 0
        %v918 = vsel %vm820, %v913, 0
        %920 = vmatprep.subr.bf16.mxu0 0
        %921 = vmatpush1.bf16.msra.mxu0 %v918
        %922 = vmatprep.subr.bf16.mxu0 0
        %923 = vmatpush1.bf16.msra.mxu0 0
        %924 = vmatprep.subr.bf16.mxu0 0
        %925 = vmatpush1.bf16.msra.mxu0 0
        %926 = vmatprep.subr.bf16.mxu0 0
        %927 = vmatpush1.bf16.msra.mxu0 0
        %928 = vmatprep.subr.bf16.mxu0 0
        %929 = vmatpush1.bf16.msra.mxu0 0
        %930 = vmatprep.subr.bf16.mxu0 0
        %931 = vmatpush1.bf16.msra.mxu0 0
        %932 = vmatprep.subr.bf16.mxu0 0
        %933 = vmatpush1.bf16.msra.mxu0 0
        %934 = vmatprep.subr.bf16.mxu0 0
        %935 = vmatpush1.bf16.msra.mxu0 0
        %936 = vmatprep.subr.bf16.mxu0 0
        %937 = vmatpush1.bf16.msra.mxu0 0
        %938 = vmatprep.subr.bf16.mxu0 0
        %939 = vmatpush1.bf16.msra.mxu0 0
        %940 = vmatprep.subr.bf16.mxu0 0
        %941 = vmatpush1.bf16.msra.mxu0 0
        %942 = vmatprep.subr.bf16.mxu0 0
        %943 = vmatpush1.bf16.msra.mxu0 0
        %944 = vmatprep.subr.bf16.mxu0 0
        %945 = vmatpush1.bf16.msra.mxu0 0
        %946 = vmatprep.subr.bf16.mxu0 0
        %947 = vmatpush1.bf16.msra.mxu0 0
        %948 = vmatprep.subr.bf16.mxu0 0
        %949 = vmatpush1.bf16.msra.mxu0 0
        %950 = vmatprep.subr.bf16.mxu0 0
        %951 = vmatpush1.bf16.msra.mxu0 0
        %952 = vmatprep.mubr.bf16.mxu0 0
        %953 = vmatmul.mubr.bf16.gmra.mrb[0].mxu0 %v915
        %v954 = vpop.f32.mrb[0].mxu0
        %v955 = vadd.f32 0.0, %v954
        %v956 = vpop.f32.mrb[0].mxu0
        %v957 = vpop.f32.mrb[0].mxu0
        %v958 = vpop.f32.mrb[0].mxu0
        %959 = vdwg.mxu0
        %960 = vrot.lane.b32.xlu0 %v576, 64
        %v961 = vpop.permute.xlu0 %960
        %v963 = vsel %vm581, %v814, 0
        %v966 = vsel %vm820, %v961, 0
        %968 = vmatprep.subr.bf16.mxu0 0
        %969 = vmatpush1.bf16.msra.mxu0 %v966
        %970 = vmatprep.subr.bf16.mxu0 0
        %971 = vmatpush1.bf16.msra.mxu0 0
        %972 = vmatprep.subr.bf16.mxu0 0
        %973 = vmatpush1.bf16.msra.mxu0 0
        %974 = vmatprep.subr.bf16.mxu0 0
        %975 = vmatpush1.bf16.msra.mxu0 0
        %976 = vmatprep.subr.bf16.mxu0 0
        %977 = vmatpush1.bf16.msra.mxu0 0
        %978 = vmatprep.subr.bf16.mxu0 0
        %979 = vmatpush1.bf16.msra.mxu0 0
        %980 = vmatprep.subr.bf16.mxu0 0
        %981 = vmatpush1.bf16.msra.mxu0 0
        %982 = vmatprep.subr.bf16.mxu0 0
        %983 = vmatpush1.bf16.msra.mxu0 0
        %984 = vmatprep.subr.bf16.mxu0 0
        %985 = vmatpush1.bf16.msra.mxu0 0
        %986 = vmatprep.subr.bf16.mxu0 0
        %987 = vmatpush1.bf16.msra.mxu0 0
        %988 = vmatprep.subr.bf16.mxu0 0
        %989 = vmatpush1.bf16.msra.mxu0 0
        %990 = vmatprep.subr.bf16.mxu0 0
        %991 = vmatpush1.bf16.msra.mxu0 0
        %992 = vmatprep.subr.bf16.mxu0 0
        %993 = vmatpush1.bf16.msra.mxu0 0
        %994 = vmatprep.subr.bf16.mxu0 0
        %995 = vmatpush1.bf16.msra.mxu0 0
        %996 = vmatprep.subr.bf16.mxu0 0
        %997 = vmatpush1.bf16.msra.mxu0 0
        %998 = vmatprep.subr.bf16.mxu0 0
        %999 = vmatpush1.bf16.msra.mxu0 0
        %1000 = vmatprep.mubr.bf16.mxu0 0
        %1001 = vmatmul.mubr.bf16.gmra.mrb[0].mxu0 %v963
        %v1002 = vpop.f32.mrb[0].mxu0
        %v1003 = vadd.f32 0.0, %v1002
        %v1004 = vpop.f32.mrb[0].mxu0
        %v1005 = vpop.f32.mrb[0].mxu0
        %v1006 = vpop.f32.mrb[0].mxu0
        %1007 = vdwg.mxu0
        %v1008 = vrcp.pop %v801
        %v1009 = vrcp.pop %v804
        %v1010 = vrcp.pop %v807
        %v1011 = vrcp.pop %v810
        %v1012 = vmul.f32 %v859, %v1008
        %v1013 = vmul.f32 %v907, %v1009
        %v1014 = vmul.f32 %v955, %v1010
        %v1015 = vmul.f32 %v1003, %v1011
        %v1016 = vpack.c.bf16 %v1012, %v1012
        %v1017 = vpack.c.bf16 %v1013, %v1013
        %v1018 = vpack.c.bf16 %v1014, %v1014
        %v1019 = vpack.c.bf16 %v1015, %v1015
        %v1020 = vld [vmem:[%s6] sm:$0xf]
        %s1021 = scalar_lea.vmem %s6, 4
        %v1022 = vld [vmem:[%s1021] sm:$0xf]
        %v1024 = vsel %vm581, %v1017, 0
        %v1027 = vsel %vm820, %v1022, 0
        %1029 = vmatprep.subr.bf16.mxu0 0
        %1030 = vmatpush1.bf16.msra.mxu0 %v1027
        %1031 = vmatprep.subr.bf16.mxu0 0
        %1032 = vmatpush1.bf16.msra.mxu0 0
        %1033 = vmatprep.subr.bf16.mxu0 0
        %1034 = vmatpush1.bf16.msra.mxu0 0
        %1035 = vmatprep.subr.bf16.mxu0 0
        %1036 = vmatpush1.bf16.msra.mxu0 0
        %1037 = vmatprep.subr.bf16.mxu0 0
        %1038 = vmatpush1.bf16.msra.mxu0 0
        %1039 = vmatprep.subr.bf16.mxu0 0
        %1040 = vmatpush1.bf16.msra.mxu0 0
        %1041 = vmatprep.subr.bf16.mxu0 0
        %1042 = vmatpush1.bf16.msra.mxu0 0
        %1043 = vmatprep.subr.bf16.mxu0 0
        %1044 = vmatpush1.bf16.msra.mxu0 0
        %1045 = vmatprep.subr.bf16.mxu0 0
        %1046 = vmatpush1.bf16.msra.mxu0 0
        %1047 = vmatprep.subr.bf16.mxu0 0
        %1048 = vmatpush1.bf16.msra.mxu0 0
        %1049 = vmatprep.subr.bf16.mxu0 0
        %1050 = vmatpush1.bf16.msra.mxu0 0
        %1051 = vmatprep.subr.bf16.mxu0 0
        %1052 = vmatpush1.bf16.msra.mxu0 0
        %1053 = vmatprep.subr.bf16.mxu0 0
        %1054 = vmatpush1.bf16.msra.mxu0 0
        %1055 = vmatprep.subr.bf16.mxu0 0
        %1056 = vmatpush1.bf16.msra.mxu0 0
        %1057 = vmatprep.subr.bf16.mxu0 0
        %1058 = vmatpush1.bf16.msra.mxu0 0
        %1059 = vmatprep.subr.bf16.mxu0 0
        %1060 = vmatpush1.bf16.msra.mxu0 0
        %1061 = vmatprep.mubr.bf16.mxu0 0
        %1062 = vmatmul.mubr.bf16.gmra.mrb[0].mxu0 %v1024
        %v1063 = vpop.f32.mrb[0].mxu0
        %v1064 = vadd.f32 0.0, %v1063
        %v1065 = vpop.f32.mrb[0].mxu0
        %v1066 = vpop.f32.mrb[0].mxu0
        %v1067 = vpop.f32.mrb[0].mxu0
        %1068 = vdwg.mxu0
        %v1070 = vsel %vm581, %v1016, 0
        %v1073 = vsel %vm820, %v1020, 0
        %1075 = vmatprep.subr.bf16.mxu0 0
        %1076 = vmatpush1.bf16.msra.mxu0 %v1073
        %1077 = vmatprep.subr.bf16.mxu0 0
        %1078 = vmatpush1.bf16.msra.mxu0 0
        %1079 = vmatprep.subr.bf16.mxu0 0
        %1080 = vmatpush1.bf16.msra.mxu0 0
        %1081 = vmatprep.subr.bf16.mxu0 0
        %1082 = vmatpush1.bf16.msra.mxu0 0
        %1083 = vmatprep.subr.bf16.mxu0 0
        %1084 = vmatpush1.bf16.msra.mxu0 0
        %1085 = vmatprep.subr.bf16.mxu0 0
        %1086 = vmatpush1.bf16.msra.mxu0 0
        %1087 = vmatprep.subr.bf16.mxu0 0
        %1088 = vmatpush1.bf16.msra.mxu0 0
        %1089 = vmatprep.subr.bf16.mxu0 0
        %1090 = vmatpush1.bf16.msra.mxu0 0
        %1091 = vmatprep.subr.bf16.mxu0 0
        %1092 = vmatpush1.bf16.msra.mxu0 0
        %1093 = vmatprep.subr.bf16.mxu0 0
        %1094 = vmatpush1.bf16.msra.mxu0 0
        %1095 = vmatprep.subr.bf16.mxu0 0
        %1096 = vmatpush1.bf16.msra.mxu0 0
        %1097 = vmatprep.subr.bf16.mxu0 0
        %1098 = vmatpush1.bf16.msra.mxu0 0
        %1099 = vmatprep.subr.bf16.mxu0 0
        %1100 = vmatpush1.bf16.msra.mxu0 0
        %1101 = vmatprep.subr.bf16.mxu0 0
        %1102 = vmatpush1.bf16.msra.mxu0 0
        %1103 = vmatprep.subr.bf16.mxu0 0
        %1104 = vmatpush1.bf16.msra.mxu0 0
        %1105 = vmatprep.subr.bf16.mxu0 0
        %1106 = vmatpush1.bf16.msra.mxu0 0
        %1107 = vmatprep.mubr.bf16.mxu0 0
        %1108 = vmatmul.mubr.bf16.gmra.mrb[0].mxu0 %v1070
        %v1109 = vpop.f32.mrb[0].mxu0
        %v1110 = vadd.f32 %v1064, %v1109
        %v1111 = vpop.f32.mrb[0].mxu0
        %v1112 = vpop.f32.mrb[0].mxu0
        %v1113 = vpop.f32.mrb[0].mxu0
        %1114 = vdwg.mxu0
        %s1115 = scalar_lea.vmem %s6, 8
        %v1116 = vld [vmem:[%s1115] sm:$0xf]
        %v1118 = vsel %vm581, %v1018, 0
        %v1121 = vsel %vm820, %v1116, 0
        %1123 = vmatprep.subr.bf16.mxu0 0
        %1124 = vmatpush1.bf16.msra.mxu0 %v1121
        %1125 = vmatprep.subr.bf16.mxu0 0
        %1126 = vmatpush1.bf16.msra.mxu0 0
        %1127 = vmatprep.subr.bf16.mxu0 0
        %1128 = vmatpush1.bf16.msra.mxu0 0
        %1129 = vmatprep.subr.bf16.mxu0 0
        %1130 = vmatpush1.bf16.msra.mxu0 0
        %1131 = vmatprep.subr.bf16.mxu0 0
        %1132 = vmatpush1.bf16.msra.mxu0 0
        %1133 = vmatprep.subr.bf16.mxu0 0
        %1134 = vmatpush1.bf16.msra.mxu0 0
        %1135 = vmatprep.subr.bf16.mxu0 0
        %1136 = vmatpush1.bf16.msra.mxu0 0
        %1137 = vmatprep.subr.bf16.mxu0 0
        %1138 = vmatpush1.bf16.msra.mxu0 0
        %1139 = vmatprep.subr.bf16.mxu0 0
        %1140 = vmatpush1.bf16.msra.mxu0 0
        %1141 = vmatprep.subr.bf16.mxu0 0
        %1142 = vmatpush1.bf16.msra.mxu0 0
        %1143 = vmatprep.subr.bf16.mxu0 0
        %1144 = vmatpush1.bf16.msra.mxu0 0
        %1145 = vmatprep.subr.bf16.mxu0 0
        %1146 = vmatpush1.bf16.msra.mxu0 0
        %1147 = vmatprep.subr.bf16.mxu0 0
        %1148 = vmatpush1.bf16.msra.mxu0 0
        %1149 = vmatprep.subr.bf16.mxu0 0
        %1150 = vmatpush1.bf16.msra.mxu0 0
        %1151 = vmatprep.subr.bf16.mxu0 0
        %1152 = vmatpush1.bf16.msra.mxu0 0
        %1153 = vmatprep.subr.bf16.mxu0 0
        %1154 = vmatpush1.bf16.msra.mxu0 0
        %1155 = vmatprep.mubr.bf16.mxu0 0
        %1156 = vmatmul.mubr.bf16.gmra.mrb[0].mxu0 %v1118
        %v1157 = vpop.f32.mrb[0].mxu0
        %v1158 = vadd.f32 0.0, %v1157
        %v1159 = vpop.f32.mrb[0].mxu0
        %v1160 = vpop.f32.mrb[0].mxu0
        %v1161 = vpop.f32.mrb[0].mxu0
        %1162 = vdwg.mxu0
        %v1163 = vadd.f32 %v1110, %v1158
        %s1164 = scalar_lea.vmem %s6, 12
        %v1165 = vld [vmem:[%s1164] sm:$0xf]
        %v1167 = vsel %vm581, %v1019, 0
        %v1170 = vsel %vm820, %v1165, 0
        %1172 = vmatprep.subr.bf16.mxu0 0
        %1173 = vmatpush1.bf16.msra.mxu0 %v1170
        %1174 = vmatprep.subr.bf16.mxu0 0
        %1175 = vmatpush1.bf16.msra.mxu0 0
        %1176 = vmatprep.subr.bf16.mxu0 0
        %1177 = vmatpush1.bf16.msra.mxu0 0
        %1178 = vmatprep.subr.bf16.mxu0 0
        %1179 = vmatpush1.bf16.msra.mxu0 0
        %1180 = vmatprep.subr.bf16.mxu0 0
        %1181 = vmatpush1.bf16.msra.mxu0 0
        %1182 = vmatprep.subr.bf16.mxu0 0
        %1183 = vmatpush1.bf16.msra.mxu0 0
        %1184 = vmatprep.subr.bf16.mxu0 0
        %1185 = vmatpush1.bf16.msra.mxu0 0
        %1186 = vmatprep.subr.bf16.mxu0 0
        %1187 = vmatpush1.bf16.msra.mxu0 0
        %1188 = vmatprep.subr.bf16.mxu0 0
        %1189 = vmatpush1.bf16.msra.mxu0 0
        %1190 = vmatprep.subr.bf16.mxu0 0
        %1191 = vmatpush1.bf16.msra.mxu0 0
        %1192 = vmatprep.subr.bf16.mxu0 0
        %1193 = vmatpush1.bf16.msra.mxu0 0
        %1194 = vmatprep.subr.bf16.mxu0 0
        %1195 = vmatpush1.bf16.msra.mxu0 0
        %1196 = vmatprep.subr.bf16.mxu0 0
        %1197 = vmatpush1.bf16.msra.mxu0 0
        %1198 = vmatprep.subr.bf16.mxu0 0
        %1199 = vmatpush1.bf16.msra.mxu0 0
        %1200 = vmatprep.subr.bf16.mxu0 0
        %1201 = vmatpush1.bf16.msra.mxu0 0
        %1202 = vmatprep.subr.bf16.mxu0 0
        %1203 = vmatpush1.bf16.msra.mxu0 0
        %1204 = vmatprep.mubr.bf16.mxu0 0
        %1205 = vmatmul.mubr.bf16.gmra.mrb[0].mxu0 %v1167
        %v1206 = vpop.f32.mrb[0].mxu0
        %v1207 = vadd.f32 0.0, %v1206
        %v1208 = vpop.f32.mrb[0].mxu0
        %v1209 = vpop.f32.mrb[0].mxu0
        %v1210 = vpop.f32.mrb[0].mxu0
        %1211 = vdwg.mxu0
        %v1212 = vadd.f32 %v1163, %v1207
        %v1213 = vld [vmem:[%s7] sm:$0x1]
        %v1215 = vlaneseq
        %v1216 = vshrl.u32 %v1215, 7
        %v1217 = vsub.s32 0, %v1216
        %v1218 = vrot.slane %v1213, %v1217
        %v1220 = vadd.f32 %v1212, %v1218
        %v1221 = vadd.f32 %v464, %v1220
        %v1222 = vld [vmem:[%s8] sm:$0x1]
        %v1223 = vld [vmem:[%s9] sm:$0x1]
        %v1224 = vsel %vm467, %v1221, 0.0
        %1225 = vadd.xlane.f32.xlu0 %v1224
        %v1226 = vpop.xlane.xlu0 %1225
        %v1227 = vmul.f32 %v1226, %v471
        %v1228 = vsub.f32 %v1221, %v1227
        %v1229 = vmul.f32 %v1228, %v1228
        %v1230 = vsel %vm467, %v1229, 0.0
        %1231 = vadd.xlane.f32.xlu0 %v1230
        %v1232 = vpop.xlane.xlu0 %1231
        %v1233 = vmul.f32 %v1232, %v471
        %v1234 = vadd.f32 %v1233, 1e-05
        %v1235 = vrsqrt.pop %v1234
        %v1236 = vmul.f32 %v1228, %v1235
        %v1238 = vlaneseq
        %v1239 = vshrl.u32 %v1238, 7
        %v1240 = vsub.s32 0, %v1239
        %v1241 = vrot.slane %v1222, %v1240
        %v1243 = vmul.f32 %v1236, %v1241
        %v1245 = vlaneseq
        %v1246 = vshrl.u32 %v1245, 7
        %v1247 = vsub.s32 0, %v1246
        %v1248 = vrot.slane %v1223, %v1247
        %v1250 = vadd.f32 %v1243, %v1248
        %v1251 = vpack.c.bf16 %v1250, %v1250
        %v1252 = vld [vmem:[%s10] sm:$0xf]
        %v1253 = vld [vmem:[%s10 + $0x4] sm:$0xf]
        %v1254 = vld [vmem:[%s10 + $0x8] sm:$0xf]
        %v1255 = vld [vmem:[%s10 + $0xc] sm:$0xf]
        %v1256 = vld [vmem:[%s11] sm:$0x1]
        %v1258 = vlaneseq
        %v1259 = vshrl.u32 %v1258, 7
        %v1260 = vsub.s32 0, %v1259
        %v1261 = vrot.slane %v1256, %v1260
        %v1267 = vunpack.c.l.b16 %v1252
        %v1268 = vunpack.c.l.b16 %v1253
        %v1269 = vunpack.c.l.b16 %v1254
        %v1270 = vunpack.c.l.b16 %v1255
        %v1271 = vpack.c.b16 %v1268, %v1267
        %v1272 = vpack.c.b16 %v1270, %v1269
        %v1276 = vsel %vm467, %v1251, 0
        %1278 = vmatprep.subr.bf16.mxu0 0
        %1279 = vmatpush1.bf16.msra.mxu0 %v1271
        %1280 = vmatprep.subr.bf16.mxu0 0
        %1281 = vmatpush1.bf16.msra.mxu0 %v1272
        %1282 = vmatprep.subr.bf16.mxu0 0
        %1283 = vmatpush1.bf16.msra.mxu0 0
        %1284 = vmatprep.subr.bf16.mxu0 0
        %1285 = vmatpush1.bf16.msra.mxu0 0
        %1286 = vmatprep.subr.bf16.mxu0 0
        %1287 = vmatpush1.bf16.msra.mxu0 0
        %1288 = vmatprep.subr.bf16.mxu0 0
        %1289 = vmatpush1.bf16.msra.mxu0 0
        %1290 = vmatprep.subr.bf16.mxu0 0
        %1291 = vmatpush1.bf16.msra.mxu0 0
        %1292 = vmatprep.subr.bf16.mxu0 0
        %1293 = vmatpush1.bf16.msra.mxu0 0
        %1294 = vmatprep.subr.bf16.mxu0 0
        %1295 = vmatpush1.bf16.msra.mxu0 0
        %1296 = vmatprep.subr.bf16.mxu0 0
        %1297 = vmatpush1.bf16.msra.mxu0 0
        %1298 = vmatprep.subr.bf16.mxu0 0
        %1299 = vmatpush1.bf16.msra.mxu0 0
        %1300 = vmatprep.subr.bf16.mxu0 0
        %1301 = vmatpush1.bf16.msra.mxu0 0
        %1302 = vmatprep.subr.bf16.mxu0 0
        %1303 = vmatpush1.bf16.msra.mxu0 0
        %1304 = vmatprep.subr.bf16.mxu0 0
        %1305 = vmatpush1.bf16.msra.mxu0 0
        %1306 = vmatprep.subr.bf16.mxu0 0
        %1307 = vmatpush1.bf16.msra.mxu0 0
        %1308 = vmatprep.subr.bf16.mxu0 0
        %1309 = vmatpush1.bf16.msra.mxu0 0
        %1310 = vmatprep.mubr.bf16.mxu0 0
        %1311 = vmatmul.mubr.bf16.gmra.mrb[0].mxu0 %v1276
        %v1312 = vpop.f32.mrb[0].mxu0
        %v1313 = vadd.f32 %v1261, %v1312
        %v1314 = vpop.f32.mrb[0].mxu0
        %v1315 = vpop.f32.mrb[0].mxu0
        %v1316 = vpop.f32.mrb[0].mxu0
        %1317 = vdwg.mxu0
        %v1318 = vmul.f32 %v1313, 0.5
        %v1319 = vmul.f32 %v1313, 0.044715
        %v1320 = vmul.f32 %v1319, %v1313
        %v1321 = vmul.f32 %v1320, %v1313
        %v1322 = vadd.f32 %v1313, %v1321
        %v1323 = vmul.f32 %v1322, 0.7978846
        %v1324 = vtanh.pop %v1323
        %v1325 = vadd.f32 %v1324, 1.0
        %v1326 = vmul.f32 %v1318, %v1325
        %v1327 = vpack.c.bf16 %v1326, %v1326
        %v1328 = vld [vmem:[%s12] sm:$0xf]
        %v1329 = vld [vmem:[%s12 + $0x4] sm:$0xf]
        %v1330 = vld [vmem:[%s12 + $0x8] sm:$0xf]
        %v1331 = vld [vmem:[%s12 + $0xc] sm:$0xf]
        %v1332 = vld [vmem:[%s12 + $0x10] sm:$0xf]
        %v1333 = vld [vmem:[%s12 + $0x14] sm:$0xf]
        %v1334 = vld [vmem:[%s12 + $0x18] sm:$0xf]
        %v1335 = vld [vmem:[%s12 + $0x1c] sm:$0xf]
        %v1336 = vld [vmem:[%s12 + $0x20] sm:$0xf]
        %v1337 = vld [vmem:[%s12 + $0x24] sm:$0xf]
        %v1338 = vld [vmem:[%s12 + $0x28] sm:$0xf]
        %v1339 = vld [vmem:[%s12 + $0x2c] sm:$0xf]
        %v1340 = vld [vmem:[%s12 + $0x30] sm:$0xf]
        %v1341 = vld [vmem:[%s12 + $0x34] sm:$0xf]
        %v1342 = vld [vmem:[%s12 + $0x38] sm:$0xf]
        %v1343 = vld [vmem:[%s12 + $0x3c] sm:$0xf]
        %v1344 = vld [vmem:[%s13] sm:$0x1]
        %v1346 = vlaneseq
        %v1347 = vshrl.u32 %v1346, 7
        %v1348 = vsub.s32 0, %v1347
        %v1349 = vrot.slane %v1344, %v1348
        %v1367 = vunpack.c.l.b16 %v1328
        %v1368 = vunpack.c.l.b16 %v1329
        %v1369 = vunpack.c.l.b16 %v1330
        %v1370 = vunpack.c.l.b16 %v1331
        %v1371 = vunpack.c.l.b16 %v1332
        %v1372 = vunpack.c.l.b16 %v1333
        %v1373 = vunpack.c.l.b16 %v1334
        %v1374 = vunpack.c.l.b16 %v1335
        %v1375 = vunpack.c.l.b16 %v1336
        %v1376 = vunpack.c.l.b16 %v1337
        %v1377 = vunpack.c.l.b16 %v1338
        %v1378 = vunpack.c.l.b16 %v1339
        %v1379 = vunpack.c.l.b16 %v1340
        %v1380 = vunpack.c.l.b16 %v1341
        %v1381 = vunpack.c.l.b16 %v1342
        %v1382 = vunpack.c.l.b16 %v1343
        %v1383 = vpack.c.b16 %v1368, %v1367
        %v1384 = vpack.c.b16 %v1370, %v1369
        %v1385 = vpack.c.b16 %v1372, %v1371
        %v1386 = vpack.c.b16 %v1374, %v1373
        %v1387 = vpack.c.b16 %v1376, %v1375
        %v1388 = vpack.c.b16 %v1378, %v1377
        %v1389 = vpack.c.b16 %v1380, %v1379
        %v1390 = vpack.c.b16 %v1382, %v1381
        %1399 = vmatprep.subr.bf16.mxu0 0
        %1400 = vmatpush1.bf16.msra.mxu0 %v1383
        %1401 = vmatprep.subr.bf16.mxu0 0
        %1402 = vmatpush1.bf16.msra.mxu0 %v1384
        %1403 = vmatprep.subr.bf16.mxu0 0
        %1404 = vmatpush1.bf16.msra.mxu0 %v1385
        %1405 = vmatprep.subr.bf16.mxu0 0
        %1406 = vmatpush1.bf16.msra.mxu0 %v1386
        %1407 = vmatprep.subr.bf16.mxu0 0
        %1408 = vmatpush1.bf16.msra.mxu0 %v1387
        %1409 = vmatprep.subr.bf16.mxu0 0
        %1410 = vmatpush1.bf16.msra.mxu0 %v1388
        %1411 = vmatprep.subr.bf16.mxu0 0
        %1412 = vmatpush1.bf16.msra.mxu0 %v1389
        %1413 = vmatprep.subr.bf16.mxu0 0
        %1414 = vmatpush1.bf16.msra.mxu0 %v1390
        %1415 = vmatprep.subr.bf16.mxu0 0
        %1416 = vmatpush1.bf16.msra.mxu0 0
        %1417 = vmatprep.subr.bf16.mxu0 0
        %1418 = vmatpush1.bf16.msra.mxu0 0
        %1419 = vmatprep.subr.bf16.mxu0 0
        %1420 = vmatpush1.bf16.msra.mxu0 0
        %1421 = vmatprep.subr.bf16.mxu0 0
        %1422 = vmatpush1.bf16.msra.mxu0 0
        %1423 = vmatprep.subr.bf16.mxu0 0
        %1424 = vmatpush1.bf16.msra.mxu0 0
        %1425 = vmatprep.subr.bf16.mxu0 0
        %1426 = vmatpush1.bf16.msra.mxu0 0
        %1427 = vmatprep.subr.bf16.mxu0 0
        %1428 = vmatpush1.bf16.msra.mxu0 0
        %1429 = vmatprep.subr.bf16.mxu0 0
        %1430 = vmatpush1.bf16.msra.mxu0 0
        %1431 = vmatprep.mubr.bf16.mxu0 0
        %1432 = vmatmul.mubr.bf16.gmra.mrb[0].mxu0 %v1327
        %v1433 = vpop.f32.mrb[0].mxu0
        %v1434 = vadd.f32 %v1349, %v1433
        %v1435 = vpop.f32.mrb[0].mxu0
        %v1436 = vpop.f32.mrb[0].mxu0
        %v1437 = vpop.f32.mrb[0].mxu0
        %1438 = vdwg.mxu0
        %v1439 = vadd.f32 %v1221, %v1434
        %1440 = vst.msk [vmem:[%s458] sm:$0xff] %vm467, %v1439
        %s1441 = sand.u32 %s335, 1
        %s1442 = scalar_lea.sflag [#allocation3], %s1441
        %s1443 = sand.u32 %s335, 1
        %s1444 = smul.addr %s1443, 8
        %s1445 = scalar_lea.vmem [#allocation2], %s1444
        // Predicated region
        $region77: #{tpu_custom_call.1} parent=75 // pred_check
          %p1446 = pneg %p345
        $region78: #{tpu_custom_call.1} parent=75 // pred_check_branch
          %1448 = sbr.rel (%p1446) target = $region80
        $region79: #{tpu_custom_call.1} parent=75 // pred_region
          %s1450 = ssub.s32 128, 128
          %1451 = vsyncadd %s1442, %s1450
          %s1452 = smul.addr %s28, 128
          %s1453 = scalar_lea.hbm %s14, %s1452
          %s1455 = sshll.u32 %s1445, 4
          %s1456 = int_to_ptr.vmem [resolvable:$true] %s1455
          %1458 = dma.vmem_to_hbm [thread:$0]  %s1456, 128, %s1453, %s1442
        $region80: #{tpu_custom_call.1} parent=75 // pred_fallthru
          _
      $region76: #{tpu_custom_call.1} parent=5 // pred_fallthru
        _
      %p1459 = scmp.le.s32.totalorder 2, %s23
      // Predicated region
      $region81: #{tpu_custom_call.1} parent=5 // pred_check
        %p1460 = pneg %p1459
      $region82: #{tpu_custom_call.1} parent=5 // pred_check_branch
        %1462 = sbr.rel (%p1460) target = $region84
      $region83: #{tpu_custom_call.1} parent=5 // pred_region
        %s1463 = ssub.s32 %s23, 2
        // Predicated region
        $region85: #{tpu_custom_call.1} parent=83 // pred_check
          %p1464 = pneg %p351
        $region86: #{tpu_custom_call.1} parent=83 // pred_check_branch
          %1466 = sbr.rel (%p1464) target = $region88
        $region87: #{tpu_custom_call.1} parent=83 // pred_region
          %s1467 = sand.u32 %s336, 1
          %s1468 = scalar_lea.sflag [#allocation3], %s1467
          %s1469 = sand.u32 %s336, 1
          %s1470 = smul.addr %s1469, 8
          %s1471 = scalar_lea.vmem [#allocation2], %s1470
          %1472 = dma.done %s1468, 128
        $region88: #{tpu_custom_call.1} parent=83 // pred_fallthru
          _
      $region84: #{tpu_custom_call.1} parent=5 // pred_fallthru
        _
    $region6: #{tpu_custom_call.1} parent=1 // loop_footer
      %s27 = sadd.s32 1, %s23
    $region7: #{tpu_custom_call.1} parent=1 // loop_footer_branch
      %22 = sbr.rel target = $region3
    $region8: #{tpu_custom_call.1} parent=1 // loop_exit
      _
    %1473 = vsyncpa [#allocation3], 1
    %s1474 = scalar_lea.sflag [#allocation3], 1
    %1475 = vsyncpa %s1474, 1

// kernel: tpu_custom_call.1
$region0: #{tpu_custom_call.1}
  #allocation0 [shape = 'u32[]', space=smem, size = 0x4, offset = 0x4, fixed_abs, tag = 'smem constant byte address 0x4 - core index']
  #allocation1 [shape = 'u32[144,128]{1,0:T(1,128)}', space=vmem, size = 0x12000, scoped, tag = 'internal scratch']
  %s0 = inlined_call_operand.vmem [shape: f32[2,8,32], index: 0, kind: input, shape index: {}]
  %s1 = inlined_call_operand.vmem [shape: f32[8,8], index: 1, kind: input, shape index: {}]
  %s2 = inlined_call_operand.vmem [shape: f32[1,32], index: 2, kind: input, shape index: {}]
  %s3 = inlined_call_operand.vmem [shape: f32[1,32], index: 3, kind: input, shape index: {}]
  %s4 = inlined_call_operand.vmem [shape: bf16[32,96], index: 4, kind: input, shape index: {}]
  %s5 = inlined_call_operand.vmem [shape: f32[1,96], index: 5, kind: input, shape index: {}]
  %s6 = inlined_call_operand.vmem [shape: bf16[4,8,32], index: 6, kind: input, shape index: {}]
  %s7 = inlined_call_operand.vmem [shape: f32[1,32], index: 7, kind: input, shape index: {}]
  %s8 = inlined_call_operand.vmem [shape: f32[1,32], index: 8, kind: input, shape index: {}]
  %s9 = inlined_call_operand.vmem [shape: f32[1,32], index: 9, kind: input, shape index: {}]
  %s10 = inlined_call_operand.vmem [shape: bf16[32,128], index: 10, kind: input, shape index: {}]
  %s11 = inlined_call_operand.vmem [shape: f32[1,128], index: 11, kind: input, shape index: {}]
  %s12 = inlined_call_operand.vmem [shape: bf16[128,32], index: 12, kind: input, shape index: {}]
  %s13 = inlined_call_operand.vmem [shape: f32[1,32], index: 13, kind: input, shape index: {}]
  %s14 = inlined_call_operand.hbm [shape: f32[2,8,32], index: 14, kind: output, shape index: {}]
  %s15 = sld [smem:[#allocation0]]
  $region89: #{tpu_custom_call.1} parent=0
    _
  %s17 = ssub.s32 1, %s15
  %s18 = scalar_select 0, %s17, %s15
  $region1: #{tpu_custom_call.1} parent=0
    #allocation2 [shape = 'u8[8192]{0}', space=vmem, size = 0x2000, scoped, tag = 'output window, operand 0']
    #allocation3 [shape = 's32[2]{0}', space=sflag, size = 0x8, scoped, tag = 'scoped memory for tpu_custom_call.1']
    %19 = vsyncpa [#allocation3], 0
    %s20 = scalar_lea.sflag [#allocation3], 1
    %21 = vsyncpa %s20, 0
    loop: start=0, step=1, limit=4
    $region2: #{tpu_custom_call.1} parent=1 // loop_pre_header
      _
    $region3: #{tpu_custom_call.1} parent=1 // loop_header
      %s23 = sphi 0, %s27
      %p24 = scmp.ge.s32.totalorder %s23, 4
      %s33 = sphi 0, %s35
      %s36 = sphi 0, %s33
      %s37 = sphi 0, %s36
      %s53 = sphi 0, %s37
      %s57 = sphi 0, %s57
      %s59 = sphi 0, %s57
      %s60 = sphi 0, %s59
      %s74 = sphi 0, %s60
      %s78 = sphi 0, %s78
      %s80 = sphi 0, %s78
      %s81 = sphi 0, %s80
      %s95 = sphi 0, %s81
      %s99 = sphi 0, %s99
      %s101 = sphi 0, %s99
      %s102 = sphi 0, %s101
      %s116 = sphi 0, %s102
      %s120 = sphi 0, %s120
      %s122 = sphi 0, %s120
      %s123 = sphi 0, %s122
      %s137 = sphi 0, %s123
      %s141 = sphi 0, %s141
      %s143 = sphi 0, %s141
      %s144 = sphi 0, %s143
      %s158 = sphi 0, %s144
      %s162 = sphi 0, %s162
      %s164 = sphi 0, %s162
      %s165 = sphi 0, %s164
      %s179 = sphi 0, %s165
      %s183 = sphi 0, %s183
      %s185 = sphi 0, %s183
      %s186 = sphi 0, %s185
      %s200 = sphi 0, %s186
      %s204 = sphi 0, %s204
      %s206 = sphi 0, %s204
      %s207 = sphi 0, %s206
      %s221 = sphi 0, %s207
      %s225 = sphi 0, %s225
      %s227 = sphi 0, %s225
      %s228 = sphi 0, %s227
      %s242 = sphi 0, %s228
      %s246 = sphi 0, %s246
      %s248 = sphi 0, %s246
      %s249 = sphi 0, %s248
      %s263 = sphi 0, %s249
      %s267 = sphi 0, %s267
      %s269 = sphi 0, %s267
      %s270 = sphi 0, %s269
      %s284 = sphi 0, %s270
      %s288 = sphi 0, %s288
      %s290 = sphi 0, %s288
      %s291 = sphi 0, %s290
      %s305 = sphi 0, %s291
      %s309 = sphi 0, %s309
      %s311 = sphi 0, %s309
      %s312 = sphi 0, %s311
      %s326 = sphi 0, %s312
      %s332 = sphi 0, %s334
      %s335 = sphi 0, %s332
      %s336 = sphi 0, %s335
      %s352 = sphi 0, %s336
    $region4: #{tpu_custom_call.1} parent=1 // loop_header_branch
      %26 = sbr.rel (%p24) target = $region8
    $region5: #{tpu_custom_call.1} parent=1 // loop_body
      %s28 = ssub.s32 %s23, 1
      %s29 = ssub.s32 %s23, 2
      %s30 = sadd.s32 %s23, 1
      %s31 = ssub.s32 %s23, %s30
      %p32 = scmp.eq.s32.totalorder %s31, 0
      %s34 = sadd.s32 %s33, 1
      %s35 = scalar_select %p32, %s33, %s34
      %p38 = pneg %p32
      %p39 = scmp.eq.s32.totalorder %s23, 1
      %p40 = por %p38, %p39
      %p41 = scmp.ne.s32.totalorder %s33, %s36
      %p42 = scmp.eq.s32.totalorder %s23, 0
      %p43 = por %p41, %p42
      %p44 = scmp.ne.s32.totalorder %s33, %s36
      %p45 = scmp.eq.s32.totalorder %s28, 1
      %p46 = por %p44, %p45
      %p47 = scmp.ne.s32.totalorder %s36, %s37
      %p48 = scmp.eq.s32.totalorder %s28, 0
      %p49 = por %p47, %p48
      %p50 = scmp.ne.s32.totalorder %s36, %s37
      %p51 = scmp.eq.s32.totalorder %s29, 1
      %p52 = por %p50, %p51
      %p54 = scmp.ne.s32.totalorder %s37, %s53
      %p55 = scmp.eq.s32.totalorder %s29, 0
      %p56 = por %p54, %p55
      %s58 = sadd.s32 %s57, 1
      %p61 = scmp.eq.s32.totalorder %s23, 1
      %p62 = scmp.ne.s32.totalorder %s57, %s59
      %p63 = scmp.eq.s32.totalorder %s23, 0
      %p64 = por %p62, %p63
      %p65 = scmp.ne.s32.totalorder %s57, %s59
      %p66 = scmp.eq.s32.totalorder %s28, 1
      %p67 = por %p65, %p66
      %p68 = scmp.ne.s32.totalorder %s59, %s60
      %p69 = scmp.eq.s32.totalorder %s28, 0
      %p70 = por %p68, %p69
      %p71 = scmp.ne.s32.totalorder %s59, %s60
      %p72 = scmp.eq.s32.totalorder %s29, 1
      %p73 = por %p71, %p72
      %p75 = scmp.ne.s32.totalorder %s60, %s74
      %p76 = scmp.eq.s32.totalorder %s29, 0
      %p77 = por %p75, %p76
      %s79 = sadd.s32 %s78, 1
      %p82 = scmp.eq.s32.totalorder %s23, 1
      %p83 = scmp.ne.s32.totalorder %s78, %s80
      %p84 = scmp.eq.s32.totalorder %s23, 0
      %p85 = por %p83, %p84
      %p86 = scmp.ne.s32.totalorder %s78, %s80
      %p87 = scmp.eq.s32.totalorder %s28, 1
      %p88 = por %p86, %p87
      %p89 = scmp.ne.s32.totalorder %s80, %s81
      %p90 = scmp.eq.s32.totalorder %s28, 0
      %p91 = por %p89, %p90
      %p92 = scmp.ne.s32.totalorder %s80, %s81
      %p93 = scmp.eq.s32.totalorder %s29, 1
      %p94 = por %p92, %p93
      %p96 = scmp.ne.s32.totalorder %s81, %s95
      %p97 = scmp.eq.s32.totalorder %s29, 0
      %p98 = por %p96, %p97
      %s100 = sadd.s32 %s99, 1
      %p103 = scmp.eq.s32.totalorder %s23, 1
      %p104 = scmp.ne.s32.totalorder %s99, %s101
      %p105 = scmp.eq.s32.totalorder %s23, 0
      %p106 = por %p104, %p105
      %p107 = scmp.ne.s32.totalorder %s99, %s101
      %p108 = scmp.eq.s32.totalorder %s28, 1
      %p109 = por %p107, %p108
      %p110 = scmp.ne.s32.totalorder %s101, %s102
      %p111 = scmp.eq.s32.totalorder %s28, 0
      %p112 = por %p110, %p111
      %p113 = scmp.ne.s32.totalorder %s101, %s102
      %p114 = scmp.eq.s32.totalorder %s29, 1
      %p115 = por %p113, %p114
      %p117 = scmp.ne.s32.totalorder %s102, %s116
      %p118 = scmp.eq.s32.totalorder %s29, 0
      %p119 = por %p117, %p118
      %s121 = sadd.s32 %s120, 1
      %p124 = scmp.eq.s32.totalorder %s23, 1
      %p125 = scmp.ne.s32.totalorder %s120, %s122
      %p126 = scmp.eq.s32.totalorder %s23, 0
      %p127 = por %p125, %p126
      %p128 = scmp.ne.s32.totalorder %s120, %s122
      %p129 = scmp.eq.s32.totalorder %s28, 1
      %p130 = por %p128, %p129
      %p131 = scmp.ne.s32.totalorder %s122, %s123
      %p132 = scmp.eq.s32.totalorder %s28, 0
      %p133 = por %p131, %p132
      %p134 = scmp.ne.s32.totalorder %s122, %s123
      %p135 = scmp.eq.s32.totalorder %s29, 1
      %p136 = por %p134, %p135
      %p138 = scmp.ne.s32.totalorder %s123, %s137
      %p139 = scmp.eq.s32.totalorder %s29, 0
      %p140 = por %p138, %p139
      %s142 = sadd.s32 %s141, 1
      %p145 = scmp.eq.s32.totalorder %s23, 1
      %p146 = scmp.ne.s32.totalorder %s141, %s143
      %p147 = scmp.eq.s32.totalorder %s23, 0
      %p148 = por %p146, %p147
      %p149 = scmp.ne.s32.totalorder %s141, %s143
      %p150 = scmp.eq.s32.totalorder %s28, 1
      %p151 = por %p149, %p150
      %p152 = scmp.ne.s32.totalorder %s143, %s144
      %p153 = scmp.eq.s32.totalorder %s28, 0
      %p154 = por %p152, %p153
      %p155 = scmp.ne.s32.totalorder %s143, %s144
      %p156 = scmp.eq.s32.totalorder %s29, 1
      %p157 = por %p155, %p156
      %p159 = scmp.ne.s32.totalorder %s144, %s158
      %p160 = scmp.eq.s32.totalorder %s29, 0
      %p161 = por %p159, %p160
      %s163 = sadd.s32 %s162, 1
      %p166 = scmp.eq.s32.totalorder %s23, 1
      %p167 = scmp.ne.s32.totalorder %s162, %s164
      %p168 = scmp.eq.s32.totalorder %s23, 0
      %p169 = por %p167, %p168
      %p170 = scmp.ne.s32.totalorder %s162, %s164
      %p171 = scmp.eq.s32.totalorder %s28, 1
      %p172 = por %p170, %p171
      %p173 = scmp.ne.s32.totalorder %s164, %s165
      %p174 = scmp.eq.s32.totalorder %s28, 0
      %p175 = por %p173, %p174
      %p176 = scmp.ne.s32.totalorder %s164, %s165
      %p177 = scmp.eq.s32.totalorder %s29, 1
      %p178 = por %p176, %p177
      %p180 = scmp.ne.s32.totalorder %s165, %s179
      %p181 = scmp.eq.s32.totalorder %s29, 0
      %p182 = por %p180, %p181
      %s184 = sadd.s32 %s183, 1
      %p187 = scmp.eq.s32.totalorder %s23, 1
      %p188 = scmp.ne.s32.totalorder %s183, %s185
      %p189 = scmp.eq.s32.totalorder %s23, 0
      %p190 = por %p188, %p189
      %p191 = scmp.ne.s32.totalorder %s183, %s185
      %p192 = scmp.eq.s32.totalorder %s28, 1
      %p193 = por %p191, %p192
      %p194 = scmp.ne.s32.totalorder %s185, %s186
      %p195 = scmp.eq.s32.totalorder %s28, 0
      %p196 = por %p194, %p195
      %p197 = scmp.ne.s32.totalorder %s185, %s186
      %p198 = scmp.eq.s32.totalorder %s29, 1
      %p199 = por %p197, %p198
      %p201 = scmp.ne.s32.totalorder %s186, %s200
      %p202 = scmp.eq.s32.totalorder %s29, 0
      %p203 = por %p201, %p202
      %s205 = sadd.s32 %s204, 1
      %p208 = scmp.eq.s32.totalorder %s23, 1
      %p209 = scmp.ne.s32.totalorder %s204, %s206
      %p210 = scmp.eq.s32.totalorder %s23, 0
      %p211 = por %p209, %p210
      %p212 = scmp.ne.s32.totalorder %s204, %s206
      %p213 = scmp.eq.s32.totalorder %s28, 1
      %p214 = por %p212, %p213
      %p215 = scmp.ne.s32.totalorder %s206, %s207
      %p216 = scmp.eq.s32.totalorder %s28, 0
      %p217 = por %p215, %p216
      %p218 = scmp.ne.s32.totalorder %s206, %s207
      %p219 = scmp.eq.s32.totalorder %s29, 1
      %p220 = por %p218, %p219
      %p222 = scmp.ne.s32.totalorder %s207, %s221
      %p223 = scmp.eq.s32.totalorder %s29, 0
      %p224 = por %p222, %p223
      %s226 = sadd.s32 %s225, 1
      %p229 = scmp.eq.s32.totalorder %s23, 1
      %p230 = scmp.ne.s32.totalorder %s225, %s227
      %p231 = scmp.eq.s32.totalorder %s23, 0
      %p232 = por %p230, %p231
      %p233 = scmp.ne.s32.totalorder %s225, %s227
      %p234 = scmp.eq.s32.totalorder %s28, 1
      %p235 = por %p233, %p234
      %p236 = scmp.ne.s32.totalorder %s227, %s228
      %p237 = scmp.eq.s32.totalorder %s28, 0
      %p238 = por %p236, %p237
      %p239 = scmp.ne.s32.totalorder %s227, %s228
      %p240 = scmp.eq.s32.totalorder %s29, 1
      %p241 = por %p239, %p240
      %p243 = scmp.ne.s32.totalorder %s228, %s242
      %p244 = scmp.eq.s32.totalorder %s29, 0
      %p245 = por %p243, %p244
      %s247 = sadd.s32 %s246, 1
      %p250 = scmp.eq.s32.totalorder %s23, 1
      %p251 = scmp.ne.s32.totalorder %s246, %s248
      %p252 = scmp.eq.s32.totalorder %s23, 0
      %p253 = por %p251, %p252
      %p254 = scmp.ne.s32.totalorder %s246, %s248
      %p255 = scmp.eq.s32.totalorder %s28, 1
      %p256 = por %p254, %p255
      %p257 = scmp.ne.s32.totalorder %s248, %s249
      %p258 = scmp.eq.s32.totalorder %s28, 0
      %p259 = por %p257, %p258
      %p260 = scmp.ne.s32.totalorder %s248, %s249
      %p261 = scmp.eq.s32.totalorder %s29, 1
      %p262 = por %p260, %p261
      %p264 = scmp.ne.s32.totalorder %s249, %s263
      %p265 = scmp.eq.s32.totalorder %s29, 0
      %p266 = por %p264, %p265
      %s268 = sadd.s32 %s267, 1
      %p271 = scmp.eq.s32.totalorder %s23, 1
      %p272 = scmp.ne.s32.totalorder %s267, %s269
      %p273 = scmp.eq.s32.totalorder %s23, 0
      %p274 = por %p272, %p273
      %p275 = scmp.ne.s32.totalorder %s267, %s269
      %p276 = scmp.eq.s32.totalorder %s28, 1
      %p277 = por %p275, %p276
      %p278 = scmp.ne.s32.totalorder %s269, %s270
      %p279 = scmp.eq.s32.totalorder %s28, 0
      %p280 = por %p278, %p279
      %p281 = scmp.ne.s32.totalorder %s269, %s270
      %p282 = scmp.eq.s32.totalorder %s29, 1
      %p283 = por %p281, %p282
      %p285 = scmp.ne.s32.totalorder %s270, %s284
      %p286 = scmp.eq.s32.totalorder %s29, 0
      %p287 = por %p285, %p286
      %s289 = sadd.s32 %s288, 1
      %p292 = scmp.eq.s32.totalorder %s23, 1
      %p293 = scmp.ne.s32.totalorder %s288, %s290
      %p294 = scmp.eq.s32.totalorder %s23, 0
      %p295 = por %p293, %p294
      %p296 = scmp.ne.s32.totalorder %s288, %s290
      %p297 = scmp.eq.s32.totalorder %s28, 1
      %p298 = por %p296, %p297
      %p299 = scmp.ne.s32.totalorder %s290, %s291
      %p300 = scmp.eq.s32.totalorder %s28, 0
      %p301 = por %p299, %p300
      %p302 = scmp.ne.s32.totalorder %s290, %s291
      %p303 = scmp.eq.s32.totalorder %s29, 1
      %p304 = por %p302, %p303
      %p306 = scmp.ne.s32.totalorder %s291, %s305
      %p307 = scmp.eq.s32.totalorder %s29, 0
      %p308 = por %p306, %p307
      %s310 = sadd.s32 %s309, 1
      %p313 = scmp.eq.s32.totalorder %s23, 1
      %p314 = scmp.ne.s32.totalorder %s309, %s311
      %p315 = scmp.eq.s32.totalorder %s23, 0
      %p316 = por %p314, %p315
      %p317 = scmp.ne.s32.totalorder %s309, %s311
      %p318 = scmp.eq.s32.totalorder %s28, 1
      %p319 = por %p317, %p318
      %p320 = scmp.ne.s32.totalorder %s311, %s312
      %p321 = scmp.eq.s32.totalorder %s28, 0
      %p322 = por %p320, %p321
      %p323 = scmp.ne.s32.totalorder %s311, %s312
      %p324 = scmp.eq.s32.totalorder %s29, 1
      %p325 = por %p323, %p324
      %p327 = scmp.ne.s32.totalorder %s312, %s326
      %p328 = scmp.eq.s32.totalorder %s29, 0
      %p329 = por %p327, %p328
      %s330 = ssub.s32 %s23, %s30
      %p331 = scmp.eq.s32.totalorder %s330, 0
      %s333 = sadd.s32 %s332, 1
      %s334 = scalar_select %p331, %s332, %s333
      %p337 = pneg %p331
      %p338 = scmp.eq.s32.totalorder %s23, 1
      %p339 = por %p337, %p338
      %p340 = scmp.ne.s32.totalorder %s332, %s335
      %p341 = scmp.eq.s32.totalorder %s23, 0
      %p342 = por %p340, %p341
      %p343 = scmp.ne.s32.totalorder %s332, %s335
      %p344 = scmp.eq.s32.totalorder %s28, 1
      %p345 = por %p343, %p344
      %p346 = scmp.ne.s32.totalorder %s335, %s336
      %p347 = scmp.eq.s32.totalorder %s28, 0
      %p348 = por %p346, %p347
      %p349 = scmp.ne.s32.totalorder %s335, %s336
      %p350 = scmp.eq.s32.totalorder %s29, 1
      %p351 = por %p349, %p350
      %p353 = scmp.ne.s32.totalorder %s336, %s352
      %p354 = scmp.eq.s32.totalorder %s29, 0
      %p355 = por %p353, %p354
      %p356 = scmp.le.s32.totalorder 1, %s23
      %p357 = scmp.lt.s32.totalorder %s23, 3
      %p358 = pnand %p356, %p357
      %p359 = pneg %p358
      // Predicated region
      $region9: #{tpu_custom_call.1} parent=5 // pred_check
        _
      $region10: #{tpu_custom_call.1} parent=5 // pred_check_branch
        %361 = sbr.rel (%p358) target = $region12
      $region11: #{tpu_custom_call.1} parent=5 // pred_region
        %s362 = ssub.s32 %s23, 1
        // Predicated region
        $region13: #{tpu_custom_call.1} parent=11 // pred_check
          %p363 = pneg %p70
        $region14: #{tpu_custom_call.1} parent=11 // pred_check_branch
          %365 = sbr.rel (%p363) target = $region16
        $region15: #{tpu_custom_call.1} parent=11 // pred_region
          _
        $region16: #{tpu_custom_call.1} parent=11 // pred_fallthru
          _
        // Predicated region
        $region17: #{tpu_custom_call.1} parent=11 // pred_check
          %p366 = pneg %p91
        $region18: #{tpu_custom_call.1} parent=11 // pred_check_branch
          %368 = sbr.rel (%p366) target = $region20
        $region19: #{tpu_custom_call.1} parent=11 // pred_region
          _
        $region20: #{tpu_custom_call.1} parent=11 // pred_fallthru
          _
        // Predicated region
        $region21: #{tpu_custom_call.1} parent=11 // pred_check
          %p369 = pneg %p112
        $region22: #{tpu_custom_call.1} parent=11 // pred_check_branch
          %371 = sbr.rel (%p369) target = $region24
        $region23: #{tpu_custom_call.1} parent=11 // pred_region
          _
        $region24: #{tpu_custom_call.1} parent=11 // pred_fallthru
          _
        // Predicated region
        $region25: #{tpu_custom_call.1} parent=11 // pred_check
          %p372 = pneg %p133
        $region26: #{tpu_custom_call.1} parent=11 // pred_check_branch
          %374 = sbr.rel (%p372) target = $region28
        $region27: #{tpu_custom_call.1} parent=11 // pred_region
          _
        $region28: #{tpu_custom_call.1} parent=11 // pred_fallthru
          _
        // Predicated region
        $region29: #{tpu_custom_call.1} parent=11 // pred_check
          %p375 = pneg %p154
        $region30: #{tpu_custom_call.1} parent=11 // pred_check_branch
          %377 = sbr.rel (%p375) target = $region32
        $region31: #{tpu_custom_call.1} parent=11 // pred_region
          _
        $region32: #{tpu_custom_call.1} parent=11 // pred_fallthru
          _
        // Predicated region
        $region33: #{tpu_custom_call.1} parent=11 // pred_check
          %p378 = pneg %p175
        $region34: #{tpu_custom_call.1} parent=11 // pred_check_branch
          %380 = sbr.rel (%p378) target = $region36
        $region35: #{tpu_custom_call.1} parent=11 // pred_region
          _
        $region36: #{tpu_custom_call.1} parent=11 // pred_fallthru
          _
        // Predicated region
        $region37: #{tpu_custom_call.1} parent=11 // pred_check
          %p381 = pneg %p196
        $region38: #{tpu_custom_call.1} parent=11 // pred_check_branch
          %383 = sbr.rel (%p381) target = $region40
        $region39: #{tpu_custom_call.1} parent=11 // pred_region
          _
        $region40: #{tpu_custom_call.1} parent=11 // pred_fallthru
          _
        // Predicated region
        $region41: #{tpu_custom_call.1} parent=11 // pred_check
          %p384 = pneg %p217
        $region42: #{tpu_custom_call.1} parent=11 // pred_check_branch
          %386 = sbr.rel (%p384) target = $region44
        $region43: #{tpu_custom_call.1} parent=11 // pred_region
          _
        $region44: #{tpu_custom_call.1} parent=11 // pred_fallthru
          _
        // Predicated region
        $region45: #{tpu_custom_call.1} parent=11 // pred_check
          %p387 = pneg %p238
        $region46: #{tpu_custom_call.1} parent=11 // pred_check_branch
          %389 = sbr.rel (%p387) target = $region48
        $region47: #{tpu_custom_call.1} parent=11 // pred_region
          _
        $region48: #{tpu_custom_call.1} parent=11 // pred_fallthru
          _
        // Predicated region
        $region49: #{tpu_custom_call.1} parent=11 // pred_check
          %p390 = pneg %p259
        $region50: #{tpu_custom_call.1} parent=11 // pred_check_branch
          %392 = sbr.rel (%p390) target = $region52
        $region51: #{tpu_custom_call.1} parent=11 // pred_region
          _
        $region52: #{tpu_custom_call.1} parent=11 // pred_fallthru
          _
        // Predicated region
        $region53: #{tpu_custom_call.1} parent=11 // pred_check
          %p393 = pneg %p280
        $region54: #{tpu_custom_call.1} parent=11 // pred_check_branch
          %395 = sbr.rel (%p393) target = $region56
        $region55: #{tpu_custom_call.1} parent=11 // pred_region
          _
        $region56: #{tpu_custom_call.1} parent=11 // pred_fallthru
          _
        // Predicated region
        $region57: #{tpu_custom_call.1} parent=11 // pred_check
          %p396 = pneg %p301
        $region58: #{tpu_custom_call.1} parent=11 // pred_check_branch
          %398 = sbr.rel (%p396) target = $region60
        $region59: #{tpu_custom_call.1} parent=11 // pred_region
          _
        $region60: #{tpu_custom_call.1} parent=11 // pred_fallthru
          _
        // Predicated region
        $region61: #{tpu_custom_call.1} parent=11 // pred_check
          %p399 = pneg %p322
        $region62: #{tpu_custom_call.1} parent=11 // pred_check_branch
          %401 = sbr.rel (%p399) target = $region64
        $region63: #{tpu_custom_call.1} parent=11 // pred_region
          _
        $region64: #{tpu_custom_call.1} parent=11 // pred_fallthru
          _
      $region12: #{tpu_custom_call.1} parent=5 // pred_fallthru
        _
      %p402 = scmp.lt.s32.totalorder %s23, 2
      // Predicated region
      $region65: #{tpu_custom_call.1} parent=5 // pred_check
        %p403 = pneg %p402
      $region66: #{tpu_custom_call.1} parent=5 // pred_check_branch
        %405 = sbr.rel (%p403) target = $region68
      $region67: #{tpu_custom_call.1} parent=5 // pred_region
        // Predicated region
        $region69: #{tpu_custom_call.1} parent=67 // pred_check
          %p406 = pneg %p43
        $region70: #{tpu_custom_call.1} parent=67 // pred_check_branch
          %408 = sbr.rel (%p406) target = $region72
        $region71: #{tpu_custom_call.1} parent=67 // pred_region
          %p409 = scmp.lt.s32.totalorder %s23, 1
          %s410 = scalar_select %p409, %s23, 1
          %s411 = smul.addr %s410, 8
          %s412 = scalar_lea.vmem %s0, %s411
        $region72: #{tpu_custom_call.1} parent=67 // pred_fallthru
          _
      $region68: #{tpu_custom_call.1} parent=5 // pred_fallthru
        _
      %p413 = scmp.le.s32.totalorder 1, %s23
      %p414 = scmp.lt.s32.totalorder %s23, 3
      %p415 = pnand %p413, %p414
      %p416 = pneg %p415
      // Predicated region
      $region73: #{tpu_custom_call.1} parent=5 // pred_check
        _
      $region74: #{tpu_custom_call.1} parent=5 // pred_check_branch
        %418 = sbr.rel (%p415) target = $region76
      $region75: #{tpu_custom_call.1} parent=5 // pred_region
        %s419 = ssub.s32 %s23, 1
        %p420 = scmp.lt.s32.totalorder %s28, 1
        %s421 = scalar_select %p420, %s28, 1
        %s422 = smul.addr %s421, 8
        %s423 = scalar_lea.vmem %s0, %s422
        %p424 = pneg %p49
        %p425 = pneg %p46
        %p426 = pneg %p70
        %p427 = pneg %p67
        %p428 = pneg %p91
        %p429 = pneg %p88
        %p430 = pneg %p112
        %p431 = pneg %p109
        %p432 = pneg %p133
        %p433 = pneg %p130
        %p434 = pneg %p154
        %p435 = pneg %p151
        %p436 = pneg %p175
        %p437 = pneg %p172
        %p438 = pneg %p196
        %p439 = pneg %p193
        %p440 = pneg %p217
        %p441 = pneg %p214
        %p442 = pneg %p238
        %p443 = pneg %p235
        %p444 = pneg %p259
        %p445 = pneg %p256
        %p446 = pneg %p280
        %p447 = pneg %p277
        %p448 = pneg %p301
        %p449 = pneg %p298
        %p450 = pneg %p322
        %p451 = pneg %p319
        %p452 = pneg %p348
        %p453 = pneg %p345
        %s454 = sand.u32 %s335, 1
        %s455 = scalar_lea.sflag [#allocation3], %s454
        %s456 = sand.u32 %s335, 1
        %s457 = smul.addr %s456, 8
        %s458 = scalar_lea.vmem [#allocation2], %s457
        %p459 = scmp.lt.s32.totalorder %s28, 1
        %s460 = scalar_select %p459, %s28, 1
        %s461 = smul.addr %s460, 8
        %s462 = scalar_lea.vmem %s0, %s461
        %v464 = vld [vmem:[%s462] sm:$0xff]
        %v465 = vld [vmem:[%s2] sm:$0x1]
        %v466 = vld [vmem:[%s3] sm:$0x1]
        %vm467 = vcmask 261120
        %v468 = vsel %vm467, %v464, 0.0
        %469 = vadd.xlane.f32.xlu0 %v468
        %v470 = vpop.xlane.xlu0 %469
        %v471 = vrcp.pop 32.0
        %v472 = vmul.f32 %v470, %v471
        %v473 = vsub.f32 %v464, %v472
        %v474 = vmul.f32 %v473, %v473
        %v475 = vsel %vm467, %v474, 0.0
        %476 = vadd.xlane.f32.xlu0 %v475
        %v477 = vpop.xlane.xlu0 %476
        %v478 = vmul.f32 %v477, %v471
        %v479 = vadd.f32 %v478, 1e-05
        %v480 = vrsqrt.pop %v479
        %v481 = vmul.f32 %v473, %v480
        %v483 = vlaneseq
        %v484 = vshrl.u32 %v483, 7
        %v485 = vsub.s32 0, %v484
        %v486 = vrot.slane %v465, %v485
        %v488 = vmul.f32 %v481, %v486
        %v490 = vlaneseq
        %v491 = vshrl.u32 %v490, 7
        %v492 = vsub.s32 0, %v491
        %v493 = vrot.slane %v466, %v492
        %v495 = vadd.f32 %v488, %v493
        %v496 = vpack.c.bf16 %v495, %v495
        %v497 = vld [vmem:[%s4] sm:$0xf]
        %v498 = vld [vmem:[%s4 + $0x4] sm:$0xf]
        %v499 = vld [vmem:[%s4 + $0x8] sm:$0xf]
        %v500 = vld [vmem:[%s4 + $0xc] sm:$0xf]
        %v501 = vld [vmem:[%s5] sm:$0x1]
        %v503 = vlaneseq
        %v504 = vshrl.u32 %v503, 7
        %v505 = vsub.s32 0, %v504
        %v506 = vrot.slane %v501, %v505
        %v512 = vunpack.c.l.b16 %v497
        %v513 = vunpack.c.l.b16 %v498
        %v514 = vunpack.c.l.b16 %v499
        %v515 = vunpack.c.l.b16 %v500
        %v516 = vpack.c.b16 %v513, %v512
        %v517 = vpack.c.b16 %v515, %v514
        %v521 = vsel %vm467, %v496, 0
        %523 = vmatprep.subr.bf16.mxu0 0
        %524 = vmatpush1.bf16.msra.mxu0 %v516
        %525 = vmatprep.subr.bf16.mxu0 0
        %526 = vmatpush1.bf16.msra.mxu0 %v517
        %527 = vmatprep.subr.bf16.mxu0 0
        %528 = vmatpush1.bf16.msra.mxu0 0
        %529 = vmatprep.subr.bf16.mxu0 0
        %530 = vmatpush1.bf16.msra.mxu0 0
        %531 = vmatprep.subr.bf16.mxu0 0
        %532 = vmatpush1.bf16.msra.mxu0 0
        %533 = vmatprep.subr.bf16.mxu0 0
        %534 = vmatpush1.bf16.msra.mxu0 0
        %535 = vmatprep.subr.bf16.mxu0 0
        %536 = vmatpush1.bf16.msra.mxu0 0
        %537 = vmatprep.subr.bf16.mxu0 0
        %538 = vmatpush1.bf16.msra.mxu0 0
        %539 = vmatprep.subr.bf16.mxu0 0
        %540 = vmatpush1.bf16.msra.mxu0 0
        %541 = vmatprep.subr.bf16.mxu0 0
        %542 = vmatpush1.bf16.msra.mxu0 0
        %543 = vmatprep.subr.bf16.mxu0 0
        %544 = vmatpush1.bf16.msra.mxu0 0
        %545 = vmatprep.subr.bf16.mxu0 0
        %546 = vmatpush1.bf16.msra.mxu0 0
        %547 = vmatprep.subr.bf16.mxu0 0
        %548 = vmatpush1.bf16.msra.mxu0 0
        %549 = vmatprep.subr.bf16.mxu0 0
        %550 = vmatpush1.bf16.msra.mxu0 0
        %551 = vmatprep.subr.bf16.mxu0 0
        %552 = vmatpush1.bf16.msra.mxu0 0
        %553 = vmatprep.subr.bf16.mxu0 0
        %554 = vmatpush1.bf16.msra.mxu0 0
        %555 = vmatprep.mubr.bf16.mxu0 0
        %556 = vmatmul.mubr.bf16.gmra.mrb[0].mxu0 %v521
        %v557 = vpop.f32.mrb[0].mxu0
        %v558 = vadd.f32 %v506, %v557
        %v559 = vpop.f32.mrb[0].mxu0
        %v560 = vpop.f32.mrb[0].mxu0
        %v561 = vpop.f32.mrb[0].mxu0
        %562 = vdwg.mxu0
        %564 = vrot.lane.b32.xlu0 %v558, 120
        %v565 = vpop.permute.xlu0 %564
        %567 = vrot.lane.b32.xlu0 %v558, 112
        %v568 = vpop.permute.xlu0 %567
        %570 = vrot.lane.b32.xlu0 %v558, 104
        %v571 = vpop.permute.xlu0 %570
        %v573 = vpack.c.bf16 %v558, %v558
        %v574 = vpack.c.bf16 %v565, %v565
        %v575 = vpack.c.bf16 %v568, %v568
        %v576 = vpack.c.bf16 %v571, %v571
        %v577 = vld [vmem:[%s1] sm:$0xff]
        %579 = vrot.lane.b32.xlu0 %v573, 96
        %v580 = vpop.permute.xlu0 %579
        %vm581 = vcmask 64512
        %v583 = vsel %vm581, %v573, 0
        %v586 = vsel %vm581, %v580, 0
        %588 = vmatprep.subr.bf16.mxu0 0
        %589 = vmatpush1.bf16.xpose.msra.mxu0 %v586
        %590 = vmatprep.subr.bf16.mxu0 0
        %591 = vmatpush1.bf16.xpose.msra.mxu0 0
        %592 = vmatprep.subr.bf16.mxu0 0
        %593 = vmatpush1.bf16.xpose.msra.mxu0 0
        %594 = vmatprep.subr.bf16.mxu0 0
        %595 = vmatpush1.bf16.xpose.msra.mxu0 0
        %596 = vmatprep.subr.bf16.mxu0 0
        %597 = vmatpush1.bf16.xpose.msra.mxu0 0
        %598 = vmatprep.subr.bf16.mxu0 0
        %599 = vmatpush1.bf16.xpose.msra.mxu0 0
        %600 = vmatprep.subr.bf16.mxu0 0
        %601 = vmatpush1.bf16.xpose.msra.mxu0 0
        %602 = vmatprep.subr.bf16.mxu0 0
        %603 = vmatpush1.bf16.xpose.msra.mxu0 0
        %604 = vmatprep.subr.bf16.mxu0 0
        %605 = vmatpush1.bf16.xpose.msra.mxu0 0
        %606 = vmatprep.subr.bf16.mxu0 0
        %607 = vmatpush1.bf16.xpose.msra.mxu0 0
        %608 = vmatprep.subr.bf16.mxu0 0
        %609 = vmatpush1.bf16.xpose.msra.mxu0 0
        %610 = vmatprep.subr.bf16.mxu0 0
        %611 = vmatpush1.bf16.xpose.msra.mxu0 0
        %612 = vmatprep.subr.bf16.mxu0 0
        %613 = vmatpush1.bf16.xpose.msra.mxu0 0
        %614 = vmatprep.subr.bf16.mxu0 0
        %615 = vmatpush1.bf16.xpose.msra.mxu0 0
        %616 = vmatprep.subr.bf16.mxu0 0
        %617 = vmatpush1.bf16.xpose.msra.mxu0 0
        %618 = vmatprep.subr.bf16.mxu0 0
        %619 = vmatpush1.bf16.xpose.msra.mxu0 0
        %620 = vmatprep.mubr.bf16.mxu0 0
        %621 = vmatmul.mubr.bf16.gmra.mrb[0].mxu0 %v583
        %v622 = vpop.f32.mrb[0].mxu0
        %v623 = vadd.f32 %v577, %v622
        %v624 = vpop.f32.mrb[0].mxu0
        %v625 = vpop.f32.mrb[0].mxu0
        %v626 = vpop.f32.mrb[0].mxu0
        %627 = vdwg.mxu0
        %629 = vrot.lane.b32.xlu0 %v574, 96
        %v630 = vpop.permute.xlu0 %629
        %v632 = vsel %vm581, %v574, 0
        %v635 = vsel %vm581, %v630, 0
        %637 = vmatprep.subr.bf16.mxu0 0
        %638 = vmatpush1.bf16.xpose.msra.mxu0 %v635
        %639 = vmatprep.subr.bf16.mxu0 0
        %640 = vmatpush1.bf16.xpose.msra.mxu0 0
        %641 = vmatprep.subr.bf16.mxu0 0
        %642 = vmatpush1.bf16.xpose.msra.mxu0 0
        %643 = vmatprep.subr.bf16.mxu0 0
        %644 = vmatpush1.bf16.xpose.msra.mxu0 0
        %645 = vmatprep.subr.bf16.mxu0 0
        %646 = vmatpush1.bf16.xpose.msra.mxu0 0
        %647 = vmatprep.subr.bf16.mxu0 0
        %648 = vmatpush1.bf16.xpose.msra.mxu0 0
        %649 = vmatprep.subr.bf16.mxu0 0
        %650 = vmatpush1.bf16.xpose.msra.mxu0 0
        %651 = vmatprep.subr.bf16.mxu0 0
        %652 = vmatpush1.bf16.xpose.msra.mxu0 0
        %653 = vmatprep.subr.bf16.mxu0 0
        %654 = vmatpush1.bf16.xpose.msra.mxu0 0
        %655 = vmatprep.subr.bf16.mxu0 0
        %656 = vmatpush1.bf16.xpose.msra.mxu0 0
        %657 = vmatprep.subr.bf16.mxu0 0
        %658 = vmatpush1.bf16.xpose.msra.mxu0 0
        %659 = vmatprep.subr.bf16.mxu0 0
        %660 = vmatpush1.bf16.xpose.msra.mxu0 0
        %661 = vmatprep.subr.bf16.mxu0 0
        %662 = vmatpush1.bf16.xpose.msra.mxu0 0
        %663 = vmatprep.subr.bf16.mxu0 0
        %664 = vmatpush1.bf16.xpose.msra.mxu0 0
        %665 = vmatprep.subr.bf16.mxu0 0
        %666 = vmatpush1.bf16.xpose.msra.mxu0 0
        %667 = vmatprep.subr.bf16.mxu0 0
        %668 = vmatpush1.bf16.xpose.msra.mxu0 0
        %669 = vmatprep.mubr.bf16.mxu0 0
        %670 = vmatmul.mubr.bf16.gmra.mrb[0].mxu0 %v632
        %v671 = vpop.f32.mrb[0].mxu0
        %v672 = vadd.f32 %v577, %v671
        %v673 = vpop.f32.mrb[0].mxu0
        %v674 = vpop.f32.mrb[0].mxu0
        %v675 = vpop.f32.mrb[0].mxu0
        %676 = vdwg.mxu0
        %678 = vrot.lane.b32.xlu0 %v575, 96
        %v679 = vpop.permute.xlu0 %678
        %v681 = vsel %vm581, %v575, 0
        %v684 = vsel %vm581, %v679, 0
        %686 = vmatprep.subr.bf16.mxu0 0
        %687 = vmatpush1.bf16.xpose.msra.mxu0 %v684
        %688 = vmatprep.subr.bf16.mxu0 0
        %689 = vmatpush1.bf16.xpose.msra.mxu0 0
        %690 = vmatprep.subr.bf16.mxu0 0
        %691 = vmatpush1.bf16.xpose.msra.mxu0 0
        %692 = vmatprep.subr.bf16.mxu0 0
        %693 = vmatpush1.bf16.xpose.msra.mxu0 0
        %694 = vmatprep.subr.bf16.mxu0 0
        %695 = vmatpush1.bf16.xpose.msra.mxu0 0
        %696 = vmatprep.subr.bf16.mxu0 0
        %697 = vmatpush1.bf16.xpose.msra.mxu0 0
        %698 = vmatprep.subr.bf16.mxu0 0
        %699 = vmatpush1.bf16.xpose.msra.mxu0 0
        %700 = vmatprep.subr.bf16.mxu0 0
        %701 = vmatpush1.bf16.xpose.msra.mxu0 0
        %702 = vmatprep.subr.bf16.mxu0 0
        %703 = vmatpush1.bf16.xpose.msra.mxu0 0
        %704 = vmatprep.subr.bf16.mxu0 0
        %705 = vmatpush1.bf16.xpose.msra.mxu0 0
        %706 = vmatprep.subr.bf16.mxu0 0
        %707 = vmatpush1.bf16.xpose.msra.mxu0 0
        %708 = vmatprep.subr.bf16.mxu0 0
        %709 = vmatpush1.bf16.xpose.msra.mxu0 0
        %710 = vmatprep.subr.bf16.mxu0 0
        %711 = vmatpush1.bf16.xpose.msra.mxu0 0
        %712 = vmatprep.subr.bf16.mxu0 0
        %713 = vmatpush1.bf16.xpose.msra.mxu0 0
        %714 = vmatprep.subr.bf16.mxu0 0
        %715 = vmatpush1.bf16.xpose.msra.mxu0 0
        %716 = vmatprep.subr.bf16.mxu0 0
        %717 = vmatpush1.bf16.xpose.msra.mxu0 0
        %718 = vmatprep.mubr.bf16.mxu0 0
        %719 = vmatmul.mubr.bf16.gmra.mrb[0].mxu0 %v681
        %v720 = vpop.f32.mrb[0].mxu0
        %v721 = vadd.f32 %v577, %v720
        %v722 = vpop.f32.mrb[0].mxu0
        %v723 = vpop.f32.mrb[0].mxu0
        %v724 = vpop.f32.mrb[0].mxu0
        %725 = vdwg.mxu0
        %727 = vrot.lane.b32.xlu0 %v576, 96
        %v728 = vpop.permute.xlu0 %727
        %v730 = vsel %vm581, %v576, 0
        %v733 = vsel %vm581, %v728, 0
        %735 = vmatprep.subr.bf16.mxu0 0
        %736 = vmatpush1.bf16.xpose.msra.mxu0 %v733
        %737 = vmatprep.subr.bf16.mxu0 0
        %738 = vmatpush1.bf16.xpose.msra.mxu0 0
        %739 = vmatprep.subr.bf16.mxu0 0
        %740 = vmatpush1.bf16.xpose.msra.mxu0 0
        %741 = vmatprep.subr.bf16.mxu0 0
        %742 = vmatpush1.bf16.xpose.msra.mxu0 0
        %743 = vmatprep.subr.bf16.mxu0 0
        %744 = vmatpush1.bf16.xpose.msra.mxu0 0
        %745 = vmatprep.subr.bf16.mxu0 0
        %746 = vmatpush1.bf16.xpose.msra.mxu0 0
        %747 = vmatprep.subr.bf16.mxu0 0
        %748 = vmatpush1.bf16.xpose.msra.mxu0 0
        %749 = vmatprep.subr.bf16.mxu0 0
        %750 = vmatpush1.bf16.xpose.msra.mxu0 0
        %751 = vmatprep.subr.bf16.mxu0 0
        %752 = vmatpush1.bf16.xpose.msra.mxu0 0
        %753 = vmatprep.subr.bf16.mxu0 0
        %754 = vmatpush1.bf16.xpose.msra.mxu0 0
        %755 = vmatprep.subr.bf16.mxu0 0
        %756 = vmatpush1.bf16.xpose.msra.mxu0 0
        %757 = vmatprep.subr.bf16.mxu0 0
        %758 = vmatpush1.bf16.xpose.msra.mxu0 0
        %759 = vmatprep.subr.bf16.mxu0 0
        %760 = vmatpush1.bf16.xpose.msra.mxu0 0
        %761 = vmatprep.subr.bf16.mxu0 0
        %762 = vmatpush1.bf16.xpose.msra.mxu0 0
        %763 = vmatprep.subr.bf16.mxu0 0
        %764 = vmatpush1.bf16.xpose.msra.mxu0 0
        %765 = vmatprep.subr.bf16.mxu0 0
        %766 = vmatpush1.bf16.xpose.msra.mxu0 0
        %767 = vmatprep.mubr.bf16.mxu0 0
        %768 = vmatmul.mubr.bf16.gmra.mrb[0].mxu0 %v730
        %v769 = vpop.f32.mrb[0].mxu0
        %v770 = vadd.f32 %v577, %v769
        %v771 = vpop.f32.mrb[0].mxu0
        %v772 = vpop.f32.mrb[0].mxu0
        %v773 = vpop.f32.mrb[0].mxu0
        %774 = vdwg.mxu0
        %v775 = vsel %vm581, %v623, -inf
        %776 = vmax.xlane.f32.xlu0 %v775
        %v777 = vpop.xlane.xlu0 %776
        %v778 = vsel %vm581, %v672, -inf
        %779 = vmax.xlane.f32.xlu0 %v778
        %v780 = vpop.xlane.xlu0 %779
        %v781 = vsel %vm581, %v721, -inf
        %782 = vmax.xlane.f32.xlu0 %v781
        %v783 = vpop.xlane.xlu0 %782
        %v784 = vsel %vm581, %v770, -inf
        %785 = vmax.xlane.f32.xlu0 %v784
        %v786 = vpop.xlane.xlu0 %785
        %v787 = vsub.f32 %v623, %v777
        %v788 = vsub.f32 %v672, %v780
        %v789 = vsub.f32 %v721, %v783
        %v790 = vsub.f32 %v770, %v786
        %v791 = vmul.f32 %v787, 1.442695
        %v792 = vpow.pop %v791
        %v793 = vmul.f32 %v788, 1.442695
        %v794 = vpow.pop %v793
        %v795 = vmul.f32 %v789, 1.442695
        %v796 = vpow.pop %v795
        %v797 = vmul.f32 %v790, 1.442695
        %v798 = vpow.pop %v797
        %v799 = vsel %vm581, %v792, 0.0
        %800 = vadd.xlane.f32.xlu0 %v799
        %v801 = vpop.xlane.xlu0 %800
        %v802 = vsel %vm581, %v794, 0.0
        %803 = vadd.xlane.f32.xlu0 %v802
        %v804 = vpop.xlane.xlu0 %803
        %v805 = vsel %vm581, %v796, 0.0
        %806 = vadd.xlane.f32.xlu0 %v805
        %v807 = vpop.xlane.xlu0 %806
        %v808 = vsel %vm581, %v798, 0.0
        %809 = vadd.xlane.f32.xlu0 %v808
        %v810 = vpop.xlane.xlu0 %809
        %v811 = vpack.c.bf16 %v792, %v792
        %v812 = vpack.c.bf16 %v794, %v794
        %v813 = vpack.c.bf16 %v796, %v796
        %v814 = vpack.c.bf16 %v798, %v798
        %815 = vrot.lane.b32.xlu0 %v573, 64
        %v816 = vpop.permute.xlu0 %815
        %v818 = vsel %vm581, %v811, 0
        %vm820 = vcmask 1043456
        %v822 = vsel %vm820, %v816, 0
        %824 = vmatprep.subr.bf16.mxu0 0
        %825 = vmatpush1.bf16.msra.mxu0 %v822
        %826 = vmatprep.subr.bf16.mxu0 0
        %827 = vmatpush1.bf16.msra.mxu0 0
        %828 = vmatprep.subr.bf16.mxu0 0
        %829 = vmatpush1.bf16.msra.mxu0 0
        %830 = vmatprep.subr.bf16.mxu0 0
        %831 = vmatpush1.bf16.msra.mxu0 0
        %832 = vmatprep.subr.bf16.mxu0 0
        %833 = vmatpush1.bf16.msra.mxu0 0
        %834 = vmatprep.subr.bf16.mxu0 0
        %835 = vmatpush1.bf16.msra.mxu0 0
        %836 = vmatprep.subr.bf16.mxu0 0
        %837 = vmatpush1.bf16.msra.mxu0 0
        %838 = vmatprep.subr.bf16.mxu0 0
        %839 = vmatpush1.bf16.msra.mxu0 0
        %840 = vmatprep.subr.bf16.mxu0 0
        %841 = vmatpush1.bf16.msra.mxu0 0
        %842 = vmatprep.subr.bf16.mxu0 0
        %843 = vmatpush1.bf16.msra.mxu0 0
        %844 = vmatprep.subr.bf16.mxu0 0
        %845 = vmatpush1.bf16.msra.mxu0 0
        %846 = vmatprep.subr.bf16.mxu0 0
        %847 = vmatpush1.bf16.msra.mxu0 0
        %848 = vmatprep.subr.bf16.mxu0 0
        %849 = vmatpush1.bf16.msra.mxu0 0
        %850 = vmatprep.subr.bf16.mxu0 0
        %851 = vmatpush1.bf16.msra.mxu0 0
        %852 = vmatprep.subr.bf16.mxu0 0
        %853 = vmatpush1.bf16.msra.mxu0 0
        %854 = vmatprep.subr.bf16.mxu0 0
        %855 = vmatpush1.bf16.msra.mxu0 0
        %856 = vmatprep.mubr.bf16.mxu0 0
        %857 = vmatmul.mubr.bf16.gmra.mrb[0].mxu0 %v818
        %v858 = vpop.f32.mrb[0].mxu0
        %v859 = vadd.f32 0.0, %v858
        %v860 = vpop.f32.mrb[0].mxu0
        %v861 = vpop.f32.mrb[0].mxu0
        %v862 = vpop.f32.mrb[0].mxu0
        %863 = vdwg.mxu0
        %864 = vrot.lane.b32.xlu0 %v574, 64
        %v865 = vpop.permute.xlu0 %864
        %v867 = vsel %vm581, %v812, 0
        %v870 = vsel %vm820, %v865, 0
        %872 = vmatprep.subr.bf16.mxu0 0
        %873 = vmatpush1.bf16.msra.mxu0 %v870
        %874 = vmatprep.subr.bf16.mxu0 0
        %875 = vmatpush1.bf16.msra.mxu0 0
        %876 = vmatprep.subr.bf16.mxu0 0
        %877 = vmatpush1.bf16.msra.mxu0 0
        %878 = vmatprep.subr.bf16.mxu0 0
        %879 = vmatpush1.bf16.msra.mxu0 0
        %880 = vmatprep.subr.bf16.mxu0 0
        %881 = vmatpush1.bf16.msra.mxu0 0
        %882 = vmatprep.subr.bf16.mxu0 0
        %883 = vmatpush1.bf16.msra.mxu0 0
        %884 = vmatprep.subr.bf16.mxu0 0
        %885 = vmatpush1.bf16.msra.mxu0 0
        %886 = vmatprep.subr.bf16.mxu0 0
        %887 = vmatpush1.bf16.msra.mxu0 0
        %888 = vmatprep.subr.bf16.mxu0 0
        %889 = vmatpush1.bf16.msra.mxu0 0
        %890 = vmatprep.subr.bf16.mxu0 0
        %891 = vmatpush1.bf16.msra.mxu0 0
        %892 = vmatprep.subr.bf16.mxu0 0
        %893 = vmatpush1.bf16.msra.mxu0 0
        %894 = vmatprep.subr.bf16.mxu0 0
        %895 = vmatpush1.bf16.msra.mxu0 0
        %896 = vmatprep.subr.bf16.mxu0 0
        %897 = vmatpush1.bf16.msra.mxu0 0
        %898 = vmatprep.subr.bf16.mxu0 0
        %899 = vmatpush1.bf16.msra.mxu0 0
        %900 = vmatprep.subr.bf16.mxu0 0
        %901 = vmatpush1.bf16.msra.mxu0 0
        %902 = vmatprep.subr.bf16.mxu0 0
        %903 = vmatpush1.bf16.msra.mxu0 0
        %904 = vmatprep.mubr.bf16.mxu0 0
        %905 = vmatmul.mubr.bf16.gmra.mrb[0].mxu0 %v867
        %v906 = vpop.f32.mrb[0].mxu0
        %v907 = vadd.f32 0.0, %v906
        %v908 = vpop.f32.mrb[0].mxu0
        %v909 = vpop.f32.mrb[0].mxu0
        %v910 = vpop.f32.mrb[0].mxu0
        %911 = vdwg.mxu0
        %912 = vrot.lane.b32.xlu0 %v575, 64
        %v913 = vpop.permute.xlu0 %912
        %v915 = vsel %vm581, %v813, 0
        %v918 = vsel %vm820, %v913, 0
        %920 = vmatprep.subr.bf16.mxu0 0
        %921 = vmatpush1.bf16.msra.mxu0 %v918
        %922 = vmatprep.subr.bf16.mxu0 0
        %923 = vmatpush1.bf16.msra.mxu0 0
        %924 = vmatprep.subr.bf16.mxu0 0
        %925 = vmatpush1.bf16.msra.mxu0 0
        %926 = vmatprep.subr.bf16.mxu0 0
        %927 = vmatpush1.bf16.msra.mxu0 0
        %928 = vmatprep.subr.bf16.mxu0 0
        %929 = vmatpush1.bf16.msra.mxu0 0
        %930 = vmatprep.subr.bf16.mxu0 0
        %931 = vmatpush1.bf16.msra.mxu0 0
        %932 = vmatprep.subr.bf16.mxu0 0
        %933 = vmatpush1.bf16.msra.mxu0 0
        %934 = vmatprep.subr.bf16.mxu0 0
        %935 = vmatpush1.bf16.msra.mxu0 0
        %936 = vmatprep.subr.bf16.mxu0 0
        %937 = vmatpush1.bf16.msra.mxu0 0
        %938 = vmatprep.subr.bf16.mxu0 0
        %939 = vmatpush1.bf16.msra.mxu0 0
        %940 = vmatprep.subr.bf16.mxu0 0
        %941 = vmatpush1.bf16.msra.mxu0 0
        %942 = vmatprep.subr.bf16.mxu0 0
        %943 = vmatpush1.bf16.msra.mxu0 0
        %944 = vmatprep.subr.bf16.mxu0 0
        %945 = vmatpush1.bf16.msra.mxu0 0
        %946 = vmatprep.subr.bf16.mxu0 0
        %947 = vmatpush1.bf16.msra.mxu0 0
        %948 = vmatprep.subr.bf16.mxu0 0
        %949 = vmatpush1.bf16.msra.mxu0 0
        %950 = vmatprep.subr.bf16.mxu0 0
        %951 = vmatpush1.bf16.msra.mxu0 0
        %952 = vmatprep.mubr.bf16.mxu0 0
        %953 = vmatmul.mubr.bf16.gmra.mrb[0].mxu0 %v915
        %v954 = vpop.f32.mrb[0].mxu0
        %v955 = vadd.f32 0.0, %v954
        %v956 = vpop.f32.mrb[0].mxu0
        %v957 = vpop.f32.mrb[0].mxu0
        %v958 = vpop.f32.mrb[0].mxu0
        %959 = vdwg.mxu0
        %960 = vrot.lane.b32.xlu0 %v576, 64
        %v961 = vpop.permute.xlu0 %960
        %v963 = vsel %vm581, %v814, 0
        %v966 = vsel %vm820, %v961, 0
        %968 = vmatprep.subr.bf16.mxu0 0
        %969 = vmatpush1.bf16.msra.mxu0 %v966
        %970 = vmatprep.subr.bf16.mxu0 0
        %971 = vmatpush1.bf16.msra.mxu0 0
        %972 = vmatprep.subr.bf16.mxu0 0
        %973 = vmatpush1.bf16.msra.mxu0 0
        %974 = vmatprep.subr.bf16.mxu0 0
        %975 = vmatpush1.bf16.msra.mxu0 0
        %976 = vmatprep.subr.bf16.mxu0 0
        %977 = vmatpush1.bf16.msra.mxu0 0
        %978 = vmatprep.subr.bf16.mxu0 0
        %979 = vmatpush1.bf16.msra.mxu0 0
        %980 = vmatprep.subr.bf16.mxu0 0
        %981 = vmatpush1.bf16.msra.mxu0 0
        %982 = vmatprep.subr.bf16.mxu0 0
        %983 = vmatpush1.bf16.msra.mxu0 0
        %984 = vmatprep.subr.bf16.mxu0 0
        %985 = vmatpush1.bf16.msra.mxu0 0
        %986 = vmatprep.subr.bf16.mxu0 0
        %987 = vmatpush1.bf16.msra.mxu0 0
        %988 = vmatprep.subr.bf16.mxu0 0
        %989 = vmatpush1.bf16.msra.mxu0 0
        %990 = vmatprep.subr.bf16.mxu0 0
        %991 = vmatpush1.bf16.msra.mxu0 0
        %992 = vmatprep.subr.bf16.mxu0 0
        %993 = vmatpush1.bf16.msra.mxu0 0
        %994 = vmatprep.subr.bf16.mxu0 0
        %995 = vmatpush1.bf16.msra.mxu0 0
        %996 = vmatprep.subr.bf16.mxu0 0
        %997 = vmatpush1.bf16.msra.mxu0 0
        %998 = vmatprep.subr.bf16.mxu0 0
        %999 = vmatpush1.bf16.msra.mxu0 0
        %1000 = vmatprep.mubr.bf16.mxu0 0
        %1001 = vmatmul.mubr.bf16.gmra.mrb[0].mxu0 %v963
        %v1002 = vpop.f32.mrb[0].mxu0
        %v1003 = vadd.f32 0.0, %v1002
        %v1004 = vpop.f32.mrb[0].mxu0
        %v1005 = vpop.f32.mrb[0].mxu0
        %v1006 = vpop.f32.mrb[0].mxu0
        %1007 = vdwg.mxu0
        %v1008 = vrcp.pop %v801
        %v1009 = vrcp.pop %v804
        %v1010 = vrcp.pop %v807
        %v1011 = vrcp.pop %v810
        %v1012 = vmul.f32 %v859, %v1008
        %v1013 = vmul.f32 %v907, %v1009
        %v1014 = vmul.f32 %v955, %v1010
        %v1015 = vmul.f32 %v1003, %v1011
        %v1016 = vpack.c.bf16 %v1012, %v1012
        %v1017 = vpack.c.bf16 %v1013, %v1013
        %v1018 = vpack.c.bf16 %v1014, %v1014
        %v1019 = vpack.c.bf16 %v1015, %v1015
        %v1020 = vld [vmem:[%s6] sm:$0xf]
        %s1021 = scalar_lea.vmem %s6, 4
        %v1022 = vld [vmem:[%s1021] sm:$0xf]
        %v1024 = vsel %vm581, %v1017, 0
        %v1027 = vsel %vm820, %v1022, 0
        %1029 = vmatprep.subr.bf16.mxu0 0
        %1030 = vmatpush1.bf16.msra.mxu0 %v1027
        %1031 = vmatprep.subr.bf16.mxu0 0
        %1032 = vmatpush1.bf16.msra.mxu0 0
        %1033 = vmatprep.subr.bf16.mxu0 0
        %1034 = vmatpush1.bf16.msra.mxu0 0
        %1035 = vmatprep.subr.bf16.mxu0 0
        %1036 = vmatpush1.bf16.msra.mxu0 0
        %1037 = vmatprep.subr.bf16.mxu0 0
        %1038 = vmatpush1.bf16.msra.mxu0 0
        %1039 = vmatprep.subr.bf16.mxu0 0
        %1040 = vmatpush1.bf16.msra.mxu0 0
        %1041 = vmatprep.subr.bf16.mxu0 0
        %1042 = vmatpush1.bf16.msra.mxu0 0
        %1043 = vmatprep.subr.bf16.mxu0 0
        %1044 = vmatpush1.bf16.msra.mxu0 0
        %1045 = vmatprep.subr.bf16.mxu0 0
        %1046 = vmatpush1.bf16.msra.mxu0 0
        %1047 = vmatprep.subr.bf16.mxu0 0
        %1048 = vmatpush1.bf16.msra.mxu0 0
        %1049 = vmatprep.subr.bf16.mxu0 0
        %1050 = vmatpush1.bf16.msra.mxu0 0
        %1051 = vmatprep.subr.bf16.mxu0 0
        %1052 = vmatpush1.bf16.msra.mxu0 0
        %1053 = vmatprep.subr.bf16.mxu0 0
        %1054 = vmatpush1.bf16.msra.mxu0 0
        %1055 = vmatprep.subr.bf16.mxu0 0
        %1056 = vmatpush1.bf16.msra.mxu0 0
        %1057 = vmatprep.subr.bf16.mxu0 0
        %1058 = vmatpush1.bf16.msra.mxu0 0
        %1059 = vmatprep.subr.bf16.mxu0 0
        %1060 = vmatpush1.bf16.msra.mxu0 0
        %1061 = vmatprep.mubr.bf16.mxu0 0
        %1062 = vmatmul.mubr.bf16.gmra.mrb[0].mxu0 %v1024
        %v1063 = vpop.f32.mrb[0].mxu0
        %v1064 = vadd.f32 0.0, %v1063
        %v1065 = vpop.f32.mrb[0].mxu0
        %v1066 = vpop.f32.mrb[0].mxu0
        %v1067 = vpop.f32.mrb[0].mxu0
        %1068 = vdwg.mxu0
        %v1070 = vsel %vm581, %v1016, 0
        %v1073 = vsel %vm820, %v1020, 0
        %1075 = vmatprep.subr.bf16.mxu0 0
        %1076 = vmatpush1.bf16.msra.mxu0 %v1073
        %1077 = vmatprep.subr.bf16.mxu0 0
        %1078 = vmatpush1.bf16.msra.mxu0 0
        %1079 = vmatprep.subr.bf16.mxu0 0
        %1080 = vmatpush1.bf16.msra.mxu0 0
        %1081 = vmatprep.subr.bf16.mxu0 0
        %1082 = vmatpush1.bf16.msra.mxu0 0
        %1083 = vmatprep.subr.bf16.mxu0 0
        %1084 = vmatpush1.bf16.msra.mxu0 0
        %1085 = vmatprep.subr.bf16.mxu0 0
        %1086 = vmatpush1.bf16.msra.mxu0 0
        %1087 = vmatprep.subr.bf16.mxu0 0
        %1088 = vmatpush1.bf16.msra.mxu0 0
        %1089 = vmatprep.subr.bf16.mxu0 0
        %1090 = vmatpush1.bf16.msra.mxu0 0
        %1091 = vmatprep.subr.bf16.mxu0 0
        %1092 = vmatpush1.bf16.msra.mxu0 0
        %1093 = vmatprep.subr.bf16.mxu0 0
        %1094 = vmatpush1.bf16.msra.mxu0 0
        %1095 = vmatprep.subr.bf16.mxu0 0
        %1096 = vmatpush1.bf16.msra.mxu0 0
        %1097 = vmatprep.subr.bf16.mxu0 0
        %1098 = vmatpush1.bf16.msra.mxu0 0
        %1099 = vmatprep.subr.bf16.mxu0 0
        %1100 = vmatpush1.bf16.msra.mxu0 0
        %1101 = vmatprep.subr.bf16.mxu0 0
        %1102 = vmatpush1.bf16.msra.mxu0 0
        %1103 = vmatprep.subr.bf16.mxu0 0
        %1104 = vmatpush1.bf16.msra.mxu0 0
        %1105 = vmatprep.subr.bf16.mxu0 0
        %1106 = vmatpush1.bf16.msra.mxu0 0
        %1107 = vmatprep.mubr.bf16.mxu0 0
        %1108 = vmatmul.mubr.bf16.gmra.mrb[0].mxu0 %v1070
        %v1109 = vpop.f32.mrb[0].mxu0
        %v1110 = vadd.f32 %v1064, %v1109
        %v1111 = vpop.f32.mrb[0].mxu0
        %v1112 = vpop.f32.mrb[0].mxu0
        %v1113 = vpop.f32.mrb[0].mxu0
        %1114 = vdwg.mxu0
        %s1115 = scalar_lea.vmem %s6, 8
        %v1116 = vld [vmem:[%s1115] sm:$0xf]
        %v1118 = vsel %vm581, %v1018, 0
        %v1121 = vsel %vm820, %v1116, 0
        %1123 = vmatprep.subr.bf16.mxu0 0
        %1124 = vmatpush1.bf16.msra.mxu0 %v1121
        %1125 = vmatprep.subr.bf16.mxu0 0
        %1126 = vmatpush1.bf16.msra.mxu0 0
        %1127 = vmatprep.subr.bf16.mxu0 0
        %1128 = vmatpush1.bf16.msra.mxu0 0
        %1129 = vmatprep.subr.bf16.mxu0 0
        %1130 = vmatpush1.bf16.msra.mxu0 0
        %1131 = vmatprep.subr.bf16.mxu0 0
        %1132 = vmatpush1.bf16.msra.mxu0 0
        %1133 = vmatprep.subr.bf16.mxu0 0
        %1134 = vmatpush1.bf16.msra.mxu0 0
        %1135 = vmatprep.subr.bf16.mxu0 0
        %1136 = vmatpush1.bf16.msra.mxu0 0
        %1137 = vmatprep.subr.bf16.mxu0 0
        %1138 = vmatpush1.bf16.msra.mxu0 0
        %1139 = vmatprep.subr.bf16.mxu0 0
        %1140 = vmatpush1.bf16.msra.mxu0 0
        %1141 = vmatprep.subr.bf16.mxu0 0
        %1142 = vmatpush1.bf16.msra.mxu0 0
        %1143 = vmatprep.subr.bf16.mxu0 0
        %1144 = vmatpush1.bf16.msra.mxu0 0
        %1145 = vmatprep.subr.bf16.mxu0 0
        %1146 = vmatpush1.bf16.msra.mxu0 0
        %1147 = vmatprep.subr.bf16.mxu0 0
        %1148 = vmatpush1.bf16.msra.mxu0 0
        %1149 = vmatprep.subr.bf16.mxu0 0
        %1150 = vmatpush1.bf16.msra.mxu0 0
        %1151 = vmatprep.subr.bf16.mxu0 0
        %1152 = vmatpush1.bf16.msra.mxu0 0
        %1153 = vmatprep.subr.bf16.mxu0 0
        %1154 = vmatpush1.bf16.msra.mxu0 0
        %1155 = vmatprep.mubr.bf16.mxu0 0
        %1156 = vmatmul.mubr.bf16.gmra.mrb[0].mxu0 %v1118
        %v1157 = vpop.f32.mrb[0].mxu0
        %v1158 = vadd.f32 0.0, %v1157
        %v1159 = vpop.f32.mrb[0].mxu0
        %v1160 = vpop.f32.mrb[0].mxu0
        %v1161 = vpop.f32.mrb[0].mxu0
        %1162 = vdwg.mxu0
        %v1163 = vadd.f32 %v1110, %v1158
        %s1164 = scalar_lea.vmem %s6, 12
        %v1165 = vld [vmem:[%s1164] sm:$0xf]
        %v1167 = vsel %vm581, %v1019, 0
        %v1170 = vsel %vm820, %v1165, 0
        %1172 = vmatprep.subr.bf16.mxu0 0
        %1173 = vmatpush1.bf16.msra.mxu0 %v1170
        %1174 = vmatprep.subr.bf16.mxu0 0
        %1175 = vmatpush1.bf16.msra.mxu0 0
        %1176 = vmatprep.subr.bf16.mxu0 0
        %1177 = vmatpush1.bf16.msra.mxu0 0
        %1178 = vmatprep.subr.bf16.mxu0 0
        %1179 = vmatpush1.bf16.msra.mxu0 0
        %1180 = vmatprep.subr.bf16.mxu0 0
        %1181 = vmatpush1.bf16.msra.mxu0 0
        %1182 = vmatprep.subr.bf16.mxu0 0
        %1183 = vmatpush1.bf16.msra.mxu0 0
        %1184 = vmatprep.subr.bf16.mxu0 0
        %1185 = vmatpush1.bf16.msra.mxu0 0
        %1186 = vmatprep.subr.bf16.mxu0 0
        %1187 = vmatpush1.bf16.msra.mxu0 0
        %1188 = vmatprep.subr.bf16.mxu0 0
        %1189 = vmatpush1.bf16.msra.mxu0 0
        %1190 = vmatprep.subr.bf16.mxu0 0
        %1191 = vmatpush1.bf16.msra.mxu0 0
        %1192 = vmatprep.subr.bf16.mxu0 0
        %1193 = vmatpush1.bf16.msra.mxu0 0
        %1194 = vmatprep.subr.bf16.mxu0 0
        %1195 = vmatpush1.bf16.msra.mxu0 0
        %1196 = vmatprep.subr.bf16.mxu0 0
        %1197 = vmatpush1.bf16.msra.mxu0 0
        %1198 = vmatprep.subr.bf16.mxu0 0
        %1199 = vmatpush1.bf16.msra.mxu0 0
        %1200 = vmatprep.subr.bf16.mxu0 0
        %1201 = vmatpush1.bf16.msra.mxu0 0
        %1202 = vmatprep.subr.bf16.mxu0 0
        %1203 = vmatpush1.bf16.msra.mxu0 0
        %1204 = vmatprep.mubr.bf16.mxu0 0
        %1205 = vmatmul.mubr.bf16.gmra.mrb[0].mxu0 %v1167
        %v1206 = vpop.f32.mrb[0].mxu0
        %v1207 = vadd.f32 0.0, %v1206
        %v1208 = vpop.f32.mrb[0].mxu0
        %v1209 = vpop.f32.mrb[0].mxu0
        %v1210 = vpop.f32.mrb[0].mxu0
        %1211 = vdwg.mxu0
        %v1212 = vadd.f32 %v1163, %v1207
        %v1213 = vld [vmem:[%s7] sm:$0x1]
        %v1215 = vlaneseq
        %v1216 = vshrl.u32 %v1215, 7
        %v1217 = vsub.s32 0, %v1216
        %v1218 = vrot.slane %v1213, %v1217
        %v1220 = vadd.f32 %v1212, %v1218
        %v1221 = vadd.f32 %v464, %v1220
        %v1222 = vld [vmem:[%s8] sm:$0x1]
        %v1223 = vld [vmem:[%s9] sm:$0x1]
        %v1224 = vsel %vm467, %v1221, 0.0
        %1225 = vadd.xlane.f32.xlu0 %v1224
        %v1226 = vpop.xlane.xlu0 %1225
        %v1227 = vmul.f32 %v1226, %v471
        %v1228 = vsub.f32 %v1221, %v1227
        %v1229 = vmul.f32 %v1228, %v1228
        %v1230 = vsel %vm467, %v1229, 0.0
        %1231 = vadd.xlane.f32.xlu0 %v1230
        %v1232 = vpop.xlane.xlu0 %1231
        %v1233 = vmul.f32 %v1232, %v471
        %v1234 = vadd.f32 %v1233, 1e-05
        %v1235 = vrsqrt.pop %v1234
        %v1236 = vmul.f32 %v1228, %v1235
        %v1238 = vlaneseq
        %v1239 = vshrl.u32 %v1238, 7
        %v1240 = vsub.s32 0, %v1239
        %v1241 = vrot.slane %v1222, %v1240
        %v1243 = vmul.f32 %v1236, %v1241
        %v1245 = vlaneseq
        %v1246 = vshrl.u32 %v1245, 7
        %v1247 = vsub.s32 0, %v1246
        %v1248 = vrot.slane %v1223, %v1247
        %v1250 = vadd.f32 %v1243, %v1248
        %v1251 = vpack.c.bf16 %v1250, %v1250
        %v1252 = vld [vmem:[%s10] sm:$0xf]
        %v1253 = vld [vmem:[%s10 + $0x4] sm:$0xf]
        %v1254 = vld [vmem:[%s10 + $0x8] sm:$0xf]
        %v1255 = vld [vmem:[%s10 + $0xc] sm:$0xf]
        %v1256 = vld [vmem:[%s11] sm:$0x1]
        %v1258 = vlaneseq
        %v1259 = vshrl.u32 %v1258, 7
        %v1260 = vsub.s32 0, %v1259
        %v1261 = vrot.slane %v1256, %v1260
        %v1267 = vunpack.c.l.b16 %v1252
        %v1268 = vunpack.c.l.b16 %v1253
        %v1269 = vunpack.c.l.b16 %v1254
        %v1270 = vunpack.c.l.b16 %v1255
        %v1271 = vpack.c.b16 %v1268, %v1267
        %v1272 = vpack.c.b16 %v1270, %v1269
        %v1276 = vsel %vm467, %v1251, 0
        %1278 = vmatprep.subr.bf16.mxu0 0
        %1279 = vmatpush1.bf16.msra.mxu0 %v1271
        %1280 = vmatprep.subr.bf16.mxu0 0
        %1281 = vmatpush1.bf16.msra.mxu0 %v1272
        %1282 = vmatprep.subr.bf16.mxu0 0
        %1283 = vmatpush1.bf16.msra.mxu0 0
        %1284 = vmatprep.subr.bf16.mxu0 0
        %1285 = vmatpush1.bf16.msra.mxu0 0
        %1286 = vmatprep.subr.bf16.mxu0 0
        %1287 = vmatpush1.bf16.msra.mxu0 0
        %1288 = vmatprep.subr.bf16.mxu0 0
        %1289 = vmatpush1.bf16.msra.mxu0 0
        %1290 = vmatprep.subr.bf16.mxu0 0
        %1291 = vmatpush1.bf16.msra.mxu0 0
        %1292 = vmatprep.subr.bf16.mxu0 0
        %1293 = vmatpush1.bf16.msra.mxu0 0
        %1294 = vmatprep.subr.bf16.mxu0 0
        %1295 = vmatpush1.bf16.msra.mxu0 0
        %1296 = vmatprep.subr.bf16.mxu0 0
        %1297 = vmatpush1.bf16.msra.mxu0 0
        %1298 = vmatprep.subr.bf16.mxu0 0
        %1299 = vmatpush1.bf16.msra.mxu0 0
        %1300 = vmatprep.subr.bf16.mxu0 0
        %1301 = vmatpush1.bf16.msra.mxu0 0
        %1302 = vmatprep.subr.bf16.mxu0 0
        %1303 = vmatpush1.bf16.msra.mxu0 0
        %1304 = vmatprep.subr.bf16.mxu0 0
        %1305 = vmatpush1.bf16.msra.mxu0 0
        %1306 = vmatprep.subr.bf16.mxu0 0
        %1307 = vmatpush1.bf16.msra.mxu0 0
        %1308 = vmatprep.subr.bf16.mxu0 0
        %1309 = vmatpush1.bf16.msra.mxu0 0
        %1310 = vmatprep.mubr.bf16.mxu0 0
        %1311 = vmatmul.mubr.bf16.gmra.mrb[0].mxu0 %v1276
        %v1312 = vpop.f32.mrb[0].mxu0
        %v1313 = vadd.f32 %v1261, %v1312
        %v1314 = vpop.f32.mrb[0].mxu0
        %v1315 = vpop.f32.mrb[0].mxu0
        %v1316 = vpop.f32.mrb[0].mxu0
        %1317 = vdwg.mxu0
        %v1318 = vmul.f32 %v1313, 0.5
        %v1319 = vmul.f32 %v1313, 0.044715
        %v1320 = vmul.f32 %v1319, %v1313
        %v1321 = vmul.f32 %v1320, %v1313
        %v1322 = vadd.f32 %v1313, %v1321
        %v1323 = vmul.f32 %v1322, 0.7978846
        %v1324 = vtanh.pop %v1323
        %v1325 = vadd.f32 %v1324, 1.0
        %v1326 = vmul.f32 %v1318, %v1325
        %v1327 = vpack.c.bf16 %v1326, %v1326
        %v1328 = vld [vmem:[%s12] sm:$0xf]
        %v1329 = vld [vmem:[%s12 + $0x4] sm:$0xf]
        %v1330 = vld [vmem:[%s12 + $0x8] sm:$0xf]
        %v1331 = vld [vmem:[%s12 + $0xc] sm:$0xf]
        %v1332 = vld [vmem:[%s12 + $0x10] sm:$0xf]
        %v1333 = vld [vmem:[%s12 + $0x14] sm:$0xf]
        %v1334 = vld [vmem:[%s12 + $0x18] sm:$0xf]
        %v1335 = vld [vmem:[%s12 + $0x1c] sm:$0xf]
        %v1336 = vld [vmem:[%s12 + $0x20] sm:$0xf]
        %v1337 = vld [vmem:[%s12 + $0x24] sm:$0xf]
        %v1338 = vld [vmem:[%s12 + $0x28] sm:$0xf]
        %v1339 = vld [vmem:[%s12 + $0x2c] sm:$0xf]
        %v1340 = vld [vmem:[%s12 + $0x30] sm:$0xf]
        %v1341 = vld [vmem:[%s12 + $0x34] sm:$0xf]
        %v1342 = vld [vmem:[%s12 + $0x38] sm:$0xf]
        %v1343 = vld [vmem:[%s12 + $0x3c] sm:$0xf]
        %v1344 = vld [vmem:[%s13] sm:$0x1]
        %v1346 = vlaneseq
        %v1347 = vshrl.u32 %v1346, 7
        %v1348 = vsub.s32 0, %v1347
        %v1349 = vrot.slane %v1344, %v1348
        %v1367 = vunpack.c.l.b16 %v1328
        %v1368 = vunpack.c.l.b16 %v1329
        %v1369 = vunpack.c.l.b16 %v1330
        %v1370 = vunpack.c.l.b16 %v1331
        %v1371 = vunpack.c.l.b16 %v1332
        %v1372 = vunpack.c.l.b16 %v1333
        %v1373 = vunpack.c.l.b16 %v1334
        %v1374 = vunpack.c.l.b16 %v1335
        %v1375 = vunpack.c.l.b16 %v1336
        %v1376 = vunpack.c.l.b16 %v1337
        %v1377 = vunpack.c.l.b16 %v1338
        %v1378 = vunpack.c.l.b16 %v1339
        %v1379 = vunpack.c.l.b16 %v1340
        %v1380 = vunpack.c.l.b16 %v1341
        %v1381 = vunpack.c.l.b16 %v1342
        %v1382 = vunpack.c.l.b16 %v1343
        %v1383 = vpack.c.b16 %v1368, %v1367
        %v1384 = vpack.c.b16 %v1370, %v1369
        %v1385 = vpack.c.b16 %v1372, %v1371
        %v1386 = vpack.c.b16 %v1374, %v1373
        %v1387 = vpack.c.b16 %v1376, %v1375
        %v1388 = vpack.c.b16 %v1378, %v1377
        %v1389 = vpack.c.b16 %v1380, %v1379
        %v1390 = vpack.c.b16 %v1382, %v1381
        %1399 = vmatprep.subr.bf16.mxu0 0
        %1400 = vmatpush1.bf16.msra.mxu0 %v1383
        %1401 = vmatprep.subr.bf16.mxu0 0
        %1402 = vmatpush1.bf16.msra.mxu0 %v1384
        %1403 = vmatprep.subr.bf16.mxu0 0
        %1404 = vmatpush1.bf16.msra.mxu0 %v1385
        %1405 = vmatprep.subr.bf16.mxu0 0
        %1406 = vmatpush1.bf16.msra.mxu0 %v1386
        %1407 = vmatprep.subr.bf16.mxu0 0
        %1408 = vmatpush1.bf16.msra.mxu0 %v1387
        %1409 = vmatprep.subr.bf16.mxu0 0
        %1410 = vmatpush1.bf16.msra.mxu0 %v1388
        %1411 = vmatprep.subr.bf16.mxu0 0
        %1412 = vmatpush1.bf16.msra.mxu0 %v1389
        %1413 = vmatprep.subr.bf16.mxu0 0
        %1414 = vmatpush1.bf16.msra.mxu0 %v1390
        %1415 = vmatprep.subr.bf16.mxu0 0
        %1416 = vmatpush1.bf16.msra.mxu0 0
        %1417 = vmatprep.subr.bf16.mxu0 0
        %1418 = vmatpush1.bf16.msra.mxu0 0
        %1419 = vmatprep.subr.bf16.mxu0 0
        %1420 = vmatpush1.bf16.msra.mxu0 0
        %1421 = vmatprep.subr.bf16.mxu0 0
        %1422 = vmatpush1.bf16.msra.mxu0 0
        %1423 = vmatprep.subr.bf16.mxu0 0
        %1424 = vmatpush1.bf16.msra.mxu0 0
        %1425 = vmatprep.subr.bf16.mxu0 0
        %1426 = vmatpush1.bf16.msra.mxu0 0
        %1427 = vmatprep.subr.bf16.mxu0 0
        %1428 = vmatpush1.bf16.msra.mxu0 0
        %1429 = vmatprep.subr.bf16.mxu0 0
        %1430 = vmatpush1.bf16.msra.mxu0 0
        %1431 = vmatprep.mubr.bf16.mxu0 0
        %1432 = vmatmul.mubr.bf16.gmra.mrb[0].mxu0 %v1327
        %v1433 = vpop.f32.mrb[0].mxu0
        %v1434 = vadd.f32 %v1349, %v1433
        %v1435 = vpop.f32.mrb[0].mxu0
        %v1436 = vpop.f32.mrb[0].mxu0
        %v1437 = vpop.f32.mrb[0].mxu0
        %1438 = vdwg.mxu0
        %v1439 = vadd.f32 %v1221, %v1434
        %1440 = vst.msk [vmem:[%s458] sm:$0xff] %vm467, %v1439
        %s1441 = sand.u32 %s335, 1
        %s1442 = scalar_lea.sflag [#allocation3], %s1441
        %s1443 = sand.u32 %s335, 1
        %s1444 = smul.addr %s1443, 8
        %s1445 = scalar_lea.vmem [#allocation2], %s1444
        // Predicated region
        $region77: #{tpu_custom_call.1} parent=75 // pred_check
          %p1446 = pneg %p345
        $region78: #{tpu_custom_call.1} parent=75 // pred_check_branch
          %1448 = sbr.rel (%p1446) target = $region80
        $region79: #{tpu_custom_call.1} parent=75 // pred_region
          %s1450 = ssub.s32 128, 128
          %1451 = vsyncadd %s1442, %s1450
          %s1452 = smul.addr %s28, 128
          %s1453 = scalar_lea.hbm %s14, %s1452
          %s1455 = sshll.u32 %s1445, 4
          %s1456 = int_to_ptr.vmem [resolvable:$true] %s1455
          %1458 = dma.vmem_to_hbm [thread:$0]  %s1456, 128, %s1453, %s1442
        $region80: #{tpu_custom_call.1} parent=75 // pred_fallthru
          _
      $region76: #{tpu_custom_call.1} parent=5 // pred_fallthru
        _
      %p1459 = scmp.le.s32.totalorder 2, %s23
      // Predicated region
      $region81: #{tpu_custom_call.1} parent=5 // pred_check
        %p1460 = pneg %p1459
      $region82: #{tpu_custom_call.1} parent=5 // pred_check_branch
        %1462 = sbr.rel (%p1460) target = $region84
      $region83: #{tpu_custom_call.1} parent=5 // pred_region
        %s1463 = ssub.s32 %s23, 2
        // Predicated region
        $region85: #{tpu_custom_call.1} parent=83 // pred_check
          %p1464 = pneg %p351
        $region86: #{tpu_custom_call.1} parent=83 // pred_check_branch
          %1466 = sbr.rel (%p1464) target = $region88
        $region87: #{tpu_custom_call.1} parent=83 // pred_region
          %s1467 = sand.u32 %s336, 1
          %s1468 = scalar_lea.sflag [#allocation3], %s1467
          %s1469 = sand.u32 %s336, 1
          %s1470 = smul.addr %s1469, 8
          %s1471 = scalar_lea.vmem [#allocation2], %s1470
          %1472 = dma.done %s1468, 128
        $region88: #{tpu_custom_call.1} parent=83 // pred_fallthru
          _
      $region84: #{tpu_custom_call.1} parent=5 // pred_fallthru
        _
    $region6: #{tpu_custom_call.1} parent=1 // loop_footer
      %s27 = sadd.s32 1, %s23
    $region7: #{tpu_custom_call.1} parent=1 // loop_footer_branch
      %22 = sbr.rel target = $region3
    $region8: #{tpu_custom_call.1} parent=1 // loop_exit
      _
    %1473 = vsyncpa [#allocation3], 1
    %s1474 = scalar_lea.sflag [#allocation3], 1
    %1475 = vsyncpa %s1474, 1

</llo_original>
